<compile_context>
chip_gen: v6e
topology: v6e:2x2x1
jax: 0.10.0
libtpu: 0.0.40
codegen_flags: <defaults>
</compile_context>

<pallas_src>
import numpy as np
import jax
import jax.numpy as jnp
from jax import lax
from jax.experimental import pallas as pl
from jax.experimental.pallas import tpu as pltpu

# ---- synthetic hyper-params (consistent with Decoder_Attention.__init__) ----
TYPE = "GRU"          # cell type
NUM_LAYERS = 1        # decoder layers
HIDDEN_DIM = 32
EMBED_DIM = 16
OUTPUT_DIM = 16       # vocab size
BIDIRECTIONAL = False
MAX_LENGTH = 6        # decode steps
START = 1             # start-of-sequence token id
B = 2                 # batch
SRC_LEN = 8           # encoder source length
LANES = 128           # lane-dense output slab width
# Dropout rate is forced to 0 when num_layers <= 1 (as in the PyTorch module) -> identity.
# TODO(synk): teacher-forcing branch (target_tensor + random.random()) not modeled; we
# implement the greedy (target_tensor=None) path, which is the module's default call.


def decoder_kernel(enc_out_ref, enc_hid_ref, k_proj_ref, v_attn_ref,
                   w1_ref, w2_ref, b2_ref, w_out_ref, b_out_ref,
                   out_ref):
    """Whole greedy decode in a single invocation (no sequential grid)."""
    Bq, S, H = enc_out_ref.shape
    V = w_out_ref.shape[1]
    E = w1_ref.shape[1] - H

    keys = enc_out_ref[...]        # (B, S, H)  encoder outputs
    k_proj = k_proj_ref[...]       # (B, S, H)  hoisted loop-invariant U_attn projection
    v_row = v_attn_ref[...]        # (1, H)
    w1 = w1_ref[...]               # (V+H, E+H) blockdiag(relu(emb), W_attn^T)
    w2 = w2_ref[...]               # (E+2H, 6H) blockdiag(W_ih^T, W_hh^T)
    b2 = b2_ref[...]               # (1, 6H)    [b_ih | b_hh]
    w_out = w_out_ref[...]         # (H, V)
    b_out = b_out_ref[...]         # (1, V)

    out_ref[...] = jnp.zeros_like(out_ref)                      # deterministic pad lanes

    h = enc_hid_ref[...]                                        # (B, H) decoder hidden
    iota_v = lax.broadcasted_iota(jnp.int32, (Bq, V), 1)
    onehot = (iota_v == START).astype(jnp.float32)              # <start> token, one-hot

    # Fully unrolled at trace time (static 6-step trip count, equivalent to
    # lax.fori_loop(..., unroll=True)) -> straight-line code, static slice indices.
    for t in range(MAX_LENGTH):
        # fused [embedding lookup (ReLU folded into table) | attention query projection]
        eq = jnp.dot(jnp.concatenate([onehot, h], axis=1), w1,
                     preferred_element_type=jnp.float32)        # (B, E+H)
        embed = eq[:, :E]                                       # (B, E) = relu(emb[tok])
        q_proj = eq[:, E:]                                      # (B, H) = h @ W_attn^T

        # additive (Bahdanau) attention
        energy = jnp.tanh(q_proj[:, None, :] + k_proj)          # (B, S, H)
        scores = jnp.sum(energy * v_row, axis=-1)               # (B, S)
        m = jnp.max(scores, axis=-1, keepdims=True)
        e = jnp.exp(scores - m)
        attn = e / jnp.sum(e, axis=-1, keepdims=True)           # (B, S)
        context = jnp.einsum('bqs,bsh->bqh', attn[:, None, :], keys,
                             preferred_element_type=jnp.float32)[:, 0, :]   # (B, H)

        # GRU cell (PyTorch gate order r, z, n); both gate matmuls fused into one pass
        xh = jnp.concatenate([embed, context, h], axis=1)       # (B, E+2H)
        gates = jnp.dot(xh, w2, preferred_element_type=jnp.float32) + b2    # (B, 6H)
        gi = gates[:, :3 * H]
        gh = gates[:, 3 * H:]
        r = jax.nn.sigmoid(gi[:, :H] + gh[:, :H])
        z = jax.nn.sigmoid(gi[:, H:2 * H] + gh[:, H:2 * H])
        n = jnp.tanh(gi[:, 2 * H:] + r * gh[:, 2 * H:])
        h = (1.0 - z) * n + z * h                               # (B, H)

        # output projection
        logits = jnp.dot(h, w_out, preferred_element_type=jnp.float32) + b_out  # (B, V)

        # stage this step's results in the VMEM-resident output slab (static slices)
        r0 = t * Bq
        out_ref[r0:r0 + Bq, 0:V] = logits
        out_ref[r0:r0 + Bq, V:V + S] = attn

        # greedy argmax feedback (topk(1) semantics: first max wins) as one-hot
        mx = jnp.max(logits, axis=-1, keepdims=True)
        first = jnp.min(jnp.where(logits == mx, iota_v, V), axis=-1, keepdims=True)
        onehot = (iota_v == first).astype(jnp.float32)

    # final hidden state, appended rows of the slab
    out_ref[MAX_LENGTH * Bq:MAX_LENGTH * Bq + Bq, 0:H] = h


@jax.jit
def decoder_attention_pallas(params, enc_out, enc_hid):
    Bq, S, H = enc_out.shape
    V, E = params["emb"].shape
    rows = MAX_LENGTH * Bq + Bq

    # loop-invariant attention key projection, hoisted out of the decode loop
    k_proj = jnp.einsum('bsg,gh->bsh', enc_out, params["u_attn_t"])

    # ReLU folded into the embedding table: relu(emb[tok]) == relu(emb)[tok]
    emb_relu = jnp.maximum(params["emb"], 0.0)

    # blockdiag(relu(emb), W_attn^T): [onehot | h] @ w1 -> [embed | q_proj]
    w1 = jnp.zeros((V + H, E + H), jnp.float32)
    w1 = w1.at[:V, :E].set(emb_relu).at[V:, E:].set(params["w_attn_t"])

    # blockdiag(W_ih^T, W_hh^T): [embed | context | h] @ w2 -> [gi | gh]
    w2 = jnp.zeros((E + 2 * H, 6 * H), jnp.float32)
    w2 = w2.at[:E + H, :3 * H].set(params["w_ih_t"]).at[E + H:, 3 * H:].set(params["w_hh_t"])
    b2 = jnp.concatenate([params["b_ih"], params["b_hh"]], axis=1)

    grid_spec = pltpu.PrefetchScalarGridSpec(
        num_scalar_prefetch=0,
        grid=(1,),                                              # single invocation
        in_specs=[
            pl.BlockSpec((Bq, S, H), lambda i: (0, 0, 0)),      # encoder_outputs
            pl.BlockSpec((Bq, H), lambda i: (0, 0)),            # encoder_hidden (layer 0)
            pl.BlockSpec((Bq, S, H), lambda i: (0, 0, 0)),      # hoisted key projection
            pl.BlockSpec((1, H), lambda i: (0, 0)),             # V_attn row
            pl.BlockSpec((V + H, E + H), lambda i: (0, 0)),     # fused embed | W_attn^T
            pl.BlockSpec((E + 2 * H, 6 * H), lambda i: (0, 0)), # fused GRU gate weight
            pl.BlockSpec((1, 6 * H), lambda i: (0, 0)),         # fused GRU gate bias
            pl.BlockSpec((H, V), lambda i: (0, 0)),             # W_out^T
            pl.BlockSpec((1, V), lambda i: (0, 0)),             # b_out
        ],
        out_specs=pl.BlockSpec((rows, LANES), lambda i: (0, 0)),
    )

    slab = pl.pallas_call(
        decoder_kernel,
        grid_spec=grid_spec,
        out_shape=jax.ShapeDtypeStruct((rows, LANES), jnp.float32),
        compiler_params=pltpu.CompilerParams(dimension_semantics=("arbitrary",)),
    )(enc_out, enc_hid, k_proj, params["v_attn"], w1, w2, b2,
      params["w_out_t"], params["b_out"])

    steps = slab[:MAX_LENGTH * Bq].reshape(MAX_LENGTH, Bq, LANES)
    decoder_outputs = jnp.transpose(steps[:, :, :V], (1, 0, 2))      # (B, MAX_LENGTH, V)
    attentions = jnp.transpose(steps[:, :, V:V + S], (1, 0, 2))      # (B, MAX_LENGTH, S)
    decoder_hidden = slab[MAX_LENGTH * Bq:, :H][None]                # (num_layers=1, B, H)
    return decoder_outputs, decoder_hidden, attentions


def decoder_attention_ref(params, enc_out, enc_hid):
    """Pure-JAX reference of the same forward pass (unfused math)."""
    Bq, S, H = enc_out.shape
    h = enc_hid
    tok = jnp.full((Bq,), START, jnp.int32)
    outs, attns = [], []
    for _ in range(MAX_LENGTH):
        embed = jnp.maximum(params["emb"][tok], 0.0)
        q_proj = h @ params["w_attn_t"]
        k_proj = enc_out @ params["u_attn_t"]
        energy = jnp.tanh(q_proj[:, None, :] + k_proj)
        scores = jnp.sum(energy * params["v_attn"], axis=-1)
        attn = jax.nn.softmax(scores, axis=-1)
        context = jnp.einsum("bs,bsh->bh", attn, enc_out)
        x = jnp.concatenate([embed, context], axis=-1)
        gi = x @ params["w_ih_t"] + params["b_ih"]
        gh = h @ params["w_hh_t"] + params["b_hh"]
        r = jax.nn.sigmoid(gi[:, :H] + gh[:, :H])
        z = jax.nn.sigmoid(gi[:, H:2 * H] + gh[:, H:2 * H])
        n = jnp.tanh(gi[:, 2 * H:] + r * gh[:, 2 * H:])
        h = (1.0 - z) * n + z * h
        logits = h @ params["w_out_t"] + params["b_out"]
        outs.append(logits)
        attns.append(attn)
        tok = jnp.argmax(logits, axis=-1)
    return jnp.stack(outs, axis=1), h[None], jnp.stack(attns, axis=1)


def init_params(key):
    H, E, V = HIDDEN_DIM, EMBED_DIM, OUTPUT_DIM
    ks = jax.random.split(key, 10)

    def u(k, shape, fan_in):
        bound = 1.0 / np.sqrt(fan_in)
        return jax.random.uniform(k, shape, jnp.float32, -bound, bound)

    return {
        "w_attn_t": u(ks[0], (H, H), H),          # Attention W_attn (transposed)
        "u_attn_t": u(ks[1], (H, H), H),          # Attention U_attn (transposed)
        "v_attn":   u(ks[2], (1, H), H),          # Attention V_attn (row vector)
        "emb":      0.1 * jax.random.normal(ks[3], (V, E), jnp.float32),
        "w_ih_t":   u(ks[4], (E + H, 3 * H), H),  # GRU weight_ih (transposed)
        "b_ih":     u(ks[5], (1, 3 * H), H),
        "w_hh_t":   u(ks[6], (H, 3 * H), H),      # GRU weight_hh (transposed)
        "b_hh":     u(ks[7], (1, 3 * H), H),
        "w_out_t":  u(ks[8], (H, V), H),          # out Linear (transposed)
        "b_out":    u(ks[9], (1, V), H),
    }


if __name__ == "__main__":
    key = jax.random.PRNGKey(0)
    kp, ke, kh = jax.random.split(key, 3)
    params = init_params(kp)
    encoder_outputs = jax.random.normal(ke, (B, SRC_LEN, HIDDEN_DIM), jnp.float32)
    encoder_hidden = jax.random.normal(kh, (B, HIDDEN_DIM), jnp.float32)  # layer-0 hidden

    dec_out, dec_hid, attns = decoder_attention_pallas(params, encoder_outputs, encoder_hidden)
    jax.block_until_ready((dec_out, dec_hid, attns))

    ref_out, ref_hid, ref_attn = decoder_attention_ref(params, encoder_outputs, encoder_hidden)
    np.testing.assert_allclose(np.asarray(dec_out), np.asarray(ref_out), rtol=2e-3, atol=2e-3)
    np.testing.assert_allclose(np.asarray(attns), np.asarray(ref_attn), rtol=2e-3, atol=2e-3)
    np.testing.assert_allclose(np.asarray(dec_hid), np.asarray(ref_hid), rtol=2e-3, atol=2e-3)
    assert dec_out.shape == (B, MAX_LENGTH, OUTPUT_DIM)
    assert attns.shape == (B, MAX_LENGTH, SRC_LEN)
    assert dec_hid.shape == (NUM_LAYERS, B, HIDDEN_DIM)
    print("KERNEL_OK")
</pallas_src>

<mosaic_0001>
module attributes {stable_mosaic.version = 11 : i64} {
  func.func @decoder_kernel(%arg0: i32, %arg1: memref<2x8x32xf32, #tpu.memory_space<vmem>>, %arg2: memref<2x32xf32, #tpu.memory_space<vmem>>, %arg3: memref<2x8x32xf32, #tpu.memory_space<vmem>>, %arg4: memref<1x32xf32, #tpu.memory_space<vmem>>, %arg5: memref<48x48xf32, #tpu.memory_space<vmem>>, %arg6: memref<80x192xf32, #tpu.memory_space<vmem>>, %arg7: memref<1x192xf32, #tpu.memory_space<vmem>>, %arg8: memref<32x16xf32, #tpu.memory_space<vmem>>, %arg9: memref<1x16xf32, #tpu.memory_space<vmem>>, %arg10: memref<14x128xf32, #tpu.memory_space<vmem>>) attributes {dimension_semantics = [#tpu.dimension_semantics<arbitrary>], iteration_bounds = array<i64: 1>, scalar_prefetch = 0 : i64, scratch_operands = 0 : i64, tpu.core_type = #tpu.core_type<tc>, window_params = [{pipeline_mode = #tpu.pipeline_mode<synchronous>, transform_indices = @transform_0, window_bounds = array<i64: 2, 8, 32>}, {pipeline_mode = #tpu.pipeline_mode<synchronous>, transform_indices = @transform_1, window_bounds = array<i64: 2, 32>}, {pipeline_mode = #tpu.pipeline_mode<synchronous>, transform_indices = @transform_2, window_bounds = array<i64: 2, 8, 32>}, {pipeline_mode = #tpu.pipeline_mode<synchronous>, transform_indices = @transform_3, window_bounds = array<i64: 1, 32>}, {pipeline_mode = #tpu.pipeline_mode<synchronous>, transform_indices = @transform_4, window_bounds = array<i64: 48, 48>}, {pipeline_mode = #tpu.pipeline_mode<synchronous>, transform_indices = @transform_5, window_bounds = array<i64: 80, 192>}, {pipeline_mode = #tpu.pipeline_mode<synchronous>, transform_indices = @transform_6, window_bounds = array<i64: 1, 192>}, {pipeline_mode = #tpu.pipeline_mode<synchronous>, transform_indices = @transform_7, window_bounds = array<i64: 32, 16>}, {pipeline_mode = #tpu.pipeline_mode<synchronous>, transform_indices = @transform_8, window_bounds = array<i64: 1, 16>}, {pipeline_mode = #tpu.pipeline_mode<synchronous>, transform_indices = @transform_9, window_bounds = array<i64: 14, 128>}]} {
    %c0 = arith.constant 0 : index
    %c0_0 = arith.constant 0 : index
    %c0_1 = arith.constant 0 : index
    %0 = vector.load %arg1[%c0, %c0_0, %c0_1] : memref<2x8x32xf32, #tpu.memory_space<vmem>>, vector<2x8x32xf32>
    %c0_2 = arith.constant 0 : index
    %c0_3 = arith.constant 0 : index
    %c0_4 = arith.constant 0 : index
    %1 = vector.load %arg3[%c0_2, %c0_3, %c0_4] : memref<2x8x32xf32, #tpu.memory_space<vmem>>, vector<2x8x32xf32>
    %c0_5 = arith.constant 0 : index
    %c0_6 = arith.constant 0 : index
    %2 = vector.load %arg4[%c0_5, %c0_6] : memref<1x32xf32, #tpu.memory_space<vmem>>, vector<1x32xf32>
    %c0_7 = arith.constant 0 : index
    %c0_8 = arith.constant 0 : index
    %3 = vector.load %arg5[%c0_7, %c0_8] : memref<48x48xf32, #tpu.memory_space<vmem>>, vector<48x48xf32>
    %c0_9 = arith.constant 0 : index
    %c0_10 = arith.constant 0 : index
    %4 = vector.load %arg6[%c0_9, %c0_10] : memref<80x192xf32, #tpu.memory_space<vmem>>, vector<80x192xf32>
    %c0_11 = arith.constant 0 : index
    %c0_12 = arith.constant 0 : index
    %5 = vector.load %arg7[%c0_11, %c0_12] : memref<1x192xf32, #tpu.memory_space<vmem>>, vector<1x192xf32>
    %c0_13 = arith.constant 0 : index
    %c0_14 = arith.constant 0 : index
    %6 = vector.load %arg8[%c0_13, %c0_14] : memref<32x16xf32, #tpu.memory_space<vmem>>, vector<32x16xf32>
    %c0_15 = arith.constant 0 : index
    %c0_16 = arith.constant 0 : index
    %7 = vector.load %arg9[%c0_15, %c0_16] : memref<1x16xf32, #tpu.memory_space<vmem>>, vector<1x16xf32>
    %cst = arith.constant 0.000000e+00 : f32
    %8 = vector.broadcast %cst : f32 to vector<14x128xf32>
    %c0_17 = arith.constant 0 : index
    %c0_18 = arith.constant 0 : index
    %9 = vector.load %arg10[%c0_17, %c0_18] : memref<14x128xf32, #tpu.memory_space<vmem>>, vector<14x128xf32>
    tpu.vector_store %arg10[%c0_17, %c0_18], %8 {strides = array<i32>} : memref<14x128xf32, #tpu.memory_space<vmem>>, vector<14x128xf32>,
    %c0_19 = arith.constant 0 : index
    %c0_20 = arith.constant 0 : index
    %10 = vector.load %arg2[%c0_19, %c0_20] : memref<2x32xf32, #tpu.memory_space<vmem>>, vector<2x32xf32>
    %11 = tpu.iota {dimensions = array<i32: 1>} : vector<2x16xi32>
    %c1_i32 = arith.constant 1 : i32
    %12 = vector.broadcast %c1_i32 : i32 to vector<2x16xi32>
    %13 = arith.cmpi eq, %11, %12 : vector<2x16xi32>
    %14 = arith.extui %13 : vector<2x16xi1> to vector<2x16xi32>
    %15 = arith.sitofp %14 : vector<2x16xi32> to vector<2x16xf32>
    %16 = tpu.concatenate %15, %10 in 1 : vector<2x16xf32>, vector<2x32xf32> -> vector<2x48xf32>
    %cst_21 = arith.constant dense<0.000000e+00> : vector<2x48xf32>
    %17 = tpu.matmul %16, %3, %cst_21 {dimension_numbers = #tpu.dot_dimension_numbers<[1], [0], [0], [1], [0, 0, 1, 1], [], []>} : vector<2x48xf32>, vector<48x48xf32>, vector<2x48xf32> -> vector<2x48xf32>
    %18 = vector.extract_strided_slice %17 {offsets = [0, 0], sizes = [2, 16], strides = [1, 1]} : vector<2x48xf32> to vector<2x16xf32>
    %19 = vector.extract_strided_slice %17 {offsets = [0, 16], sizes = [2, 32], strides = [1, 1]} : vector<2x48xf32> to vector<2x32xf32>
    %20 = vector.shape_cast %19 : vector<2x32xf32> to vector<2x1x32xf32>
    %21 = vector.broadcast %20 : vector<2x1x32xf32> to vector<2x8x32xf32>
    %22 = arith.addf %21, %1 : vector<2x8x32xf32>
    %23 = math.tanh %22 : vector<2x8x32xf32>
    %24 = vector.shape_cast %2 : vector<1x32xf32> to vector<1x1x32xf32>
    %25 = vector.broadcast %24 : vector<1x1x32xf32> to vector<2x8x32xf32>
    %26 = arith.mulf %23, %25 : vector<2x8x32xf32>
    %cst_22 = arith.constant dense<0.000000e+00> : vector<2x8xf32>
    %27 = vector.multi_reduction <add>, %26, %cst_22 [2] : vector<2x8x32xf32> to vector<2x8xf32>
    %cst_23 = arith.constant dense<0xFF800000> : vector<2xf32>
    %28 = vector.multi_reduction <maximumf>, %27, %cst_23 [1] : vector<2x8xf32> to vector<2xf32>
    %29 = vector.shape_cast %28 : vector<2xf32> to vector<2x1xf32>
    %30 = vector.broadcast %29 : vector<2x1xf32> to vector<2x8xf32>
    %31 = arith.subf %27, %30 : vector<2x8xf32>
    %32 = math.exp %31 : vector<2x8xf32>
    %cst_24 = arith.constant dense<0.000000e+00> : vector<2xf32>
    %33 = vector.multi_reduction <add>, %32, %cst_24 [1] : vector<2x8xf32> to vector<2xf32>
    %34 = vector.shape_cast %33 : vector<2xf32> to vector<2x1xf32>
    %35 = vector.broadcast %34 : vector<2x1xf32> to vector<2x8xf32>
    %36 = arith.divf %32, %35 : vector<2x8xf32>
    %37 = vector.shape_cast %36 : vector<2x8xf32> to vector<2x1x8xf32>
    "tpu.trace_start"() <{level = 10 : i32, message = "bqs,bsh->bqh"}> : () -> ()
    %cst_25 = arith.constant dense<0.000000e+00> : vector<2x1x32xf32>
    %38 = tpu.matmul %37, %0, %cst_25 {dimension_numbers = #tpu.dot_dimension_numbers<[2], [1], [1], [2], [0, 0, 0, 1, 1, 2], [0], [0]>} : vector<2x1x8xf32>, vector<2x8x32xf32>, vector<2x1x32xf32> -> vector<2x1x32xf32>
    "tpu.trace_stop"() : () -> ()
    %39 = vector.shape_cast %38 : vector<2x1x32xf32> to vector<2x32xf32>
    %40 = tpu.concatenate %18, %39, %10 in 1 : vector<2x16xf32>, vector<2x32xf32>, vector<2x32xf32> -> vector<2x80xf32>
    %cst_26 = arith.constant dense<0.000000e+00> : vector<2x192xf32>
    %41 = tpu.matmul %40, %4, %cst_26 {dimension_numbers = #tpu.dot_dimension_numbers<[1], [0], [0], [1], [0, 0, 1, 1], [], []>} : vector<2x80xf32>, vector<80x192xf32>, vector<2x192xf32> -> vector<2x192xf32>
    %42 = vector.broadcast %5 : vector<1x192xf32> to vector<2x192xf32>
    %43 = arith.addf %41, %42 : vector<2x192xf32>
    %44 = vector.extract_strided_slice %43 {offsets = [0, 0], sizes = [2, 96], strides = [1, 1]} : vector<2x192xf32> to vector<2x96xf32>
    %45 = vector.extract_strided_slice %43 {offsets = [0, 96], sizes = [2, 96], strides = [1, 1]} : vector<2x192xf32> to vector<2x96xf32>
    %46 = vector.extract_strided_slice %44 {offsets = [0, 0], sizes = [2, 32], strides = [1, 1]} : vector<2x96xf32> to vector<2x32xf32>
    %47 = vector.extract_strided_slice %45 {offsets = [0, 0], sizes = [2, 32], strides = [1, 1]} : vector<2x96xf32> to vector<2x32xf32>
    %48 = arith.addf %46, %47 : vector<2x32xf32>
    %49 = arith.negf %48 : vector<2x32xf32>
    %50 = math.exp %49 : vector<2x32xf32>
    %cst_27 = arith.constant 1.000000e+00 : f32
    %51 = vector.broadcast %cst_27 : f32 to vector<2x32xf32>
    %52 = arith.addf %51, %50 : vector<2x32xf32>
    %53 = arith.divf %51, %52 : vector<2x32xf32>
    %54 = vector.extract_strided_slice %44 {offsets = [0, 32], sizes = [2, 32], strides = [1, 1]} : vector<2x96xf32> to vector<2x32xf32>
    %55 = vector.extract_strided_slice %45 {offsets = [0, 32], sizes = [2, 32], strides = [1, 1]} : vector<2x96xf32> to vector<2x32xf32>
    %56 = arith.addf %54, %55 : vector<2x32xf32>
    %57 = arith.negf %56 : vector<2x32xf32>
    %58 = math.exp %57 : vector<2x32xf32>
    %cst_28 = arith.constant 1.000000e+00 : f32
    %59 = vector.broadcast %cst_28 : f32 to vector<2x32xf32>
    %60 = arith.addf %59, %58 : vector<2x32xf32>
    %61 = arith.divf %59, %60 : vector<2x32xf32>
    %62 = vector.extract_strided_slice %44 {offsets = [0, 64], sizes = [2, 32], strides = [1, 1]} : vector<2x96xf32> to vector<2x32xf32>
    %63 = vector.extract_strided_slice %45 {offsets = [0, 64], sizes = [2, 32], strides = [1, 1]} : vector<2x96xf32> to vector<2x32xf32>
    %64 = arith.mulf %53, %63 : vector<2x32xf32>
    %65 = arith.addf %62, %64 : vector<2x32xf32>
    %66 = math.tanh %65 : vector<2x32xf32>
    %cst_29 = arith.constant 1.000000e+00 : f32
    %67 = vector.broadcast %cst_29 : f32 to vector<2x32xf32>
    %68 = arith.subf %67, %61 : vector<2x32xf32>
    %69 = arith.mulf %68, %66 : vector<2x32xf32>
    %70 = arith.mulf %61, %10 : vector<2x32xf32>
    %71 = arith.addf %69, %70 : vector<2x32xf32>
    %cst_30 = arith.constant dense<0.000000e+00> : vector<2x16xf32>
    %72 = tpu.matmul %71, %6, %cst_30 {dimension_numbers = #tpu.dot_dimension_numbers<[1], [0], [0], [1], [0, 0, 1, 1], [], []>} : vector<2x32xf32>, vector<32x16xf32>, vector<2x16xf32> -> vector<2x16xf32>
    %73 = vector.broadcast %7 : vector<1x16xf32> to vector<2x16xf32>
    %74 = arith.addf %72, %73 : vector<2x16xf32>
    %c0_31 = arith.constant 0 : index
    %c0_32 = arith.constant 0 : index
    %75 = vector.load %arg10[%c0_31, %c0_32] : memref<14x128xf32, #tpu.memory_space<vmem>>, vector<2x16xf32>
    tpu.vector_store %arg10[%c0_31, %c0_32], %74 {strides = array<i32>} : memref<14x128xf32, #tpu.memory_space<vmem>>, vector<2x16xf32>,
    %c0_33 = arith.constant 0 : index
    %c16 = arith.constant 16 : index
    %76 = vector.load %arg10[%c0_33, %c16] : memref<14x128xf32, #tpu.memory_space<vmem>>, vector<2x8xf32>
    tpu.vector_store %arg10[%c0_33, %c16], %36 {strides = array<i32>} : memref<14x128xf32, #tpu.memory_space<vmem>>, vector<2x8xf32>,
    %cst_34 = arith.constant dense<0xFF800000> : vector<2xf32>
    %77 = vector.multi_reduction <maximumf>, %74, %cst_34 [1] : vector<2x16xf32> to vector<2xf32>
    %78 = vector.shape_cast %77 : vector<2xf32> to vector<2x1xf32>
    %79 = vector.broadcast %78 : vector<2x1xf32> to vector<2x16xf32>
    %80 = arith.cmpf oeq, %74, %79 : vector<2x16xf32>
    %c16_i32 = arith.constant 16 : i32
    %81 = vector.broadcast %c16_i32 : i32 to vector<2x16xi32>
    %82 = arith.select %80, %11, %81 : vector<2x16xi1>, vector<2x16xi32>
    %cst_35 = arith.constant dense<2147483647> : vector<2xi32>
    %83 = vector.multi_reduction <minsi>, %82, %cst_35 [1] : vector<2x16xi32> to vector<2xi32>
    %84 = vector.shape_cast %83 : vector<2xi32> to vector<2x1xi32>
    %85 = vector.broadcast %84 : vector<2x1xi32> to vector<2x16xi32>
    %86 = arith.cmpi eq, %11, %85 : vector<2x16xi32>
    %87 = arith.extui %86 : vector<2x16xi1> to vector<2x16xi32>
    %88 = arith.sitofp %87 : vector<2x16xi32> to vector<2x16xf32>
    %89 = tpu.concatenate %88, %71 in 1 : vector<2x16xf32>, vector<2x32xf32> -> vector<2x48xf32>
    %cst_36 = arith.constant dense<0.000000e+00> : vector<2x48xf32>
    %90 = tpu.matmul %89, %3, %cst_36 {dimension_numbers = #tpu.dot_dimension_numbers<[1], [0], [0], [1], [0, 0, 1, 1], [], []>} : vector<2x48xf32>, vector<48x48xf32>, vector<2x48xf32> -> vector<2x48xf32>
    %91 = vector.extract_strided_slice %90 {offsets = [0, 0], sizes = [2, 16], strides = [1, 1]} : vector<2x48xf32> to vector<2x16xf32>
    %92 = vector.extract_strided_slice %90 {offsets = [0, 16], sizes = [2, 32], strides = [1, 1]} : vector<2x48xf32> to vector<2x32xf32>
    %93 = vector.shape_cast %92 : vector<2x32xf32> to vector<2x1x32xf32>
    %94 = vector.broadcast %93 : vector<2x1x32xf32> to vector<2x8x32xf32>
    %95 = arith.addf %94, %1 : vector<2x8x32xf32>
    %96 = math.tanh %95 : vector<2x8x32xf32>
    %97 = vector.shape_cast %2 : vector<1x32xf32> to vector<1x1x32xf32>
    %98 = vector.broadcast %97 : vector<1x1x32xf32> to vector<2x8x32xf32>
    %99 = arith.mulf %96, %98 : vector<2x8x32xf32>
    %cst_37 = arith.constant dense<0.000000e+00> : vector<2x8xf32>
    %100 = vector.multi_reduction <add>, %99, %cst_37 [2] : vector<2x8x32xf32> to vector<2x8xf32>
    %cst_38 = arith.constant dense<0xFF800000> : vector<2xf32>
    %101 = vector.multi_reduction <maximumf>, %100, %cst_38 [1] : vector<2x8xf32> to vector<2xf32>
    %102 = vector.shape_cast %101 : vector<2xf32> to vector<2x1xf32>
    %103 = vector.broadcast %102 : vector<2x1xf32> to vector<2x8xf32>
    %104 = arith.subf %100, %103 : vector<2x8xf32>
    %105 = math.exp %104 : vector<2x8xf32>
    %cst_39 = arith.constant dense<0.000000e+00> : vector<2xf32>
    %106 = vector.multi_reduction <add>, %105, %cst_39 [1] : vector<2x8xf32> to vector<2xf32>
    %107 = vector.shape_cast %106 : vector<2xf32> to vector<2x1xf32>
    %108 = vector.broadcast %107 : vector<2x1xf32> to vector<2x8xf32>
    %109 = arith.divf %105, %108 : vector<2x8xf32>
    %110 = vector.shape_cast %109 : vector<2x8xf32> to vector<2x1x8xf32>
    "tpu.trace_start"() <{level = 10 : i32, message = "bqs,bsh->bqh"}> : () -> ()
    %cst_40 = arith.constant dense<0.000000e+00> : vector<2x1x32xf32>
    %111 = tpu.matmul %110, %0, %cst_40 {dimension_numbers = #tpu.dot_dimension_numbers<[2], [1], [1], [2], [0, 0, 0, 1, 1, 2], [0], [0]>} : vector<2x1x8xf32>, vector<2x8x32xf32>, vector<2x1x32xf32> -> vector<2x1x32xf32>
    "tpu.trace_stop"() : () -> ()
    %112 = vector.shape_cast %111 : vector<2x1x32xf32> to vector<2x32xf32>
    %113 = tpu.concatenate %91, %112, %71 in 1 : vector<2x16xf32>, vector<2x32xf32>, vector<2x32xf32> -> vector<2x80xf32>
    %cst_41 = arith.constant dense<0.000000e+00> : vector<2x192xf32>
    %114 = tpu.matmul %113, %4, %cst_41 {dimension_numbers = #tpu.dot_dimension_numbers<[1], [0], [0], [1], [0, 0, 1, 1], [], []>} : vector<2x80xf32>, vector<80x192xf32>, vector<2x192xf32> -> vector<2x192xf32>
    %115 = vector.broadcast %5 : vector<1x192xf32> to vector<2x192xf32>
    %116 = arith.addf %114, %115 : vector<2x192xf32>
    %117 = vector.extract_strided_slice %116 {offsets = [0, 0], sizes = [2, 96], strides = [1, 1]} : vector<2x192xf32> to vector<2x96xf32>
    %118 = vector.extract_strided_slice %116 {offsets = [0, 96], sizes = [2, 96], strides = [1, 1]} : vector<2x192xf32> to vector<2x96xf32>
    %119 = vector.extract_strided_slice %117 {offsets = [0, 0], sizes = [2, 32], strides = [1, 1]} : vector<2x96xf32> to vector<2x32xf32>
    %120 = vector.extract_strided_slice %118 {offsets = [0, 0], sizes = [2, 32], strides = [1, 1]} : vector<2x96xf32> to vector<2x32xf32>
    %121 = arith.addf %119, %120 : vector<2x32xf32>
    %122 = arith.negf %121 : vector<2x32xf32>
    %123 = math.exp %122 : vector<2x32xf32>
    %cst_42 = arith.constant 1.000000e+00 : f32
    %124 = vector.broadcast %cst_42 : f32 to vector<2x32xf32>
    %125 = arith.addf %124, %123 : vector<2x32xf32>
    %126 = arith.divf %124, %125 : vector<2x32xf32>
    %127 = vector.extract_strided_slice %117 {offsets = [0, 32], sizes = [2, 32], strides = [1, 1]} : vector<2x96xf32> to vector<2x32xf32>
    %128 = vector.extract_strided_slice %118 {offsets = [0, 32], sizes = [2, 32], strides = [1, 1]} : vector<2x96xf32> to vector<2x32xf32>
    %129 = arith.addf %127, %128 : vector<2x32xf32>
    %130 = arith.negf %129 : vector<2x32xf32>
    %131 = math.exp %130 : vector<2x32xf32>
    %cst_43 = arith.constant 1.000000e+00 : f32
    %132 = vector.broadcast %cst_43 : f32 to vector<2x32xf32>
    %133 = arith.addf %132, %131 : vector<2x32xf32>
    %134 = arith.divf %132, %133 : vector<2x32xf32>
    %135 = vector.extract_strided_slice %117 {offsets = [0, 64], sizes = [2, 32], strides = [1, 1]} : vector<2x96xf32> to vector<2x32xf32>
    %136 = vector.extract_strided_slice %118 {offsets = [0, 64], sizes = [2, 32], strides = [1, 1]} : vector<2x96xf32> to vector<2x32xf32>
    %137 = arith.mulf %126, %136 : vector<2x32xf32>
    %138 = arith.addf %135, %137 : vector<2x32xf32>
    %139 = math.tanh %138 : vector<2x32xf32>
    %cst_44 = arith.constant 1.000000e+00 : f32
    %140 = vector.broadcast %cst_44 : f32 to vector<2x32xf32>
    %141 = arith.subf %140, %134 : vector<2x32xf32>
    %142 = arith.mulf %141, %139 : vector<2x32xf32>
    %143 = arith.mulf %134, %71 : vector<2x32xf32>
    %144 = arith.addf %142, %143 : vector<2x32xf32>
    %cst_45 = arith.constant dense<0.000000e+00> : vector<2x16xf32>
    %145 = tpu.matmul %144, %6, %cst_45 {dimension_numbers = #tpu.dot_dimension_numbers<[1], [0], [0], [1], [0, 0, 1, 1], [], []>} : vector<2x32xf32>, vector<32x16xf32>, vector<2x16xf32> -> vector<2x16xf32>
    %146 = vector.broadcast %7 : vector<1x16xf32> to vector<2x16xf32>
    %147 = arith.addf %145, %146 : vector<2x16xf32>
    %c2 = arith.constant 2 : index
    %c0_46 = arith.constant 0 : index
    %148 = vector.load %arg10[%c2, %c0_46] : memref<14x128xf32, #tpu.memory_space<vmem>>, vector<2x16xf32>
    tpu.vector_store %arg10[%c2, %c0_46], %147 {strides = array<i32>} : memref<14x128xf32, #tpu.memory_space<vmem>>, vector<2x16xf32>,
    %c2_47 = arith.constant 2 : index
    %c16_48 = arith.constant 16 : index
    %149 = vector.load %arg10[%c2_47, %c16_48] : memref<14x128xf32, #tpu.memory_space<vmem>>, vector<2x8xf32>
    tpu.vector_store %arg10[%c2_47, %c16_48], %109 {strides = array<i32>} : memref<14x128xf32, #tpu.memory_space<vmem>>, vector<2x8xf32>,
    %cst_49 = arith.constant dense<0xFF800000> : vector<2xf32>
    %150 = vector.multi_reduction <maximumf>, %147, %cst_49 [1] : vector<2x16xf32> to vector<2xf32>
    %151 = vector.shape_cast %150 : vector<2xf32> to vector<2x1xf32>
    %152 = vector.broadcast %151 : vector<2x1xf32> to vector<2x16xf32>
    %153 = arith.cmpf oeq, %147, %152 : vector<2x16xf32>
    %c16_i32_50 = arith.constant 16 : i32
    %154 = vector.broadcast %c16_i32_50 : i32 to vector<2x16xi32>
    %155 = arith.select %153, %11, %154 : vector<2x16xi1>, vector<2x16xi32>
    %cst_51 = arith.constant dense<2147483647> : vector<2xi32>
    %156 = vector.multi_reduction <minsi>, %155, %cst_51 [1] : vector<2x16xi32> to vector<2xi32>
    %157 = vector.shape_cast %156 : vector<2xi32> to vector<2x1xi32>
    %158 = vector.broadcast %157 : vector<2x1xi32> to vector<2x16xi32>
    %159 = arith.cmpi eq, %11, %158 : vector<2x16xi32>
    %160 = arith.extui %159 : vector<2x16xi1> to vector<2x16xi32>
    %161 = arith.sitofp %160 : vector<2x16xi32> to vector<2x16xf32>
    %162 = tpu.concatenate %161, %144 in 1 : vector<2x16xf32>, vector<2x32xf32> -> vector<2x48xf32>
    %cst_52 = arith.constant dense<0.000000e+00> : vector<2x48xf32>
    %163 = tpu.matmul %162, %3, %cst_52 {dimension_numbers = #tpu.dot_dimension_numbers<[1], [0], [0], [1], [0, 0, 1, 1], [], []>} : vector<2x48xf32>, vector<48x48xf32>, vector<2x48xf32> -> vector<2x48xf32>
    %164 = vector.extract_strided_slice %163 {offsets = [0, 0], sizes = [2, 16], strides = [1, 1]} : vector<2x48xf32> to vector<2x16xf32>
    %165 = vector.extract_strided_slice %163 {offsets = [0, 16], sizes = [2, 32], strides = [1, 1]} : vector<2x48xf32> to vector<2x32xf32>
    %166 = vector.shape_cast %165 : vector<2x32xf32> to vector<2x1x32xf32>
    %167 = vector.broadcast %166 : vector<2x1x32xf32> to vector<2x8x32xf32>
    %168 = arith.addf %167, %1 : vector<2x8x32xf32>
    %169 = math.tanh %168 : vector<2x8x32xf32>
    %170 = vector.shape_cast %2 : vector<1x32xf32> to vector<1x1x32xf32>
    %171 = vector.broadcast %170 : vector<1x1x32xf32> to vector<2x8x32xf32>
    %172 = arith.mulf %169, %171 : vector<2x8x32xf32>
    %cst_53 = arith.constant dense<0.000000e+00> : vector<2x8xf32>
    %173 = vector.multi_reduction <add>, %172, %cst_53 [2] : vector<2x8x32xf32> to vector<2x8xf32>
    %cst_54 = arith.constant dense<0xFF800000> : vector<2xf32>
    %174 = vector.multi_reduction <maximumf>, %173, %cst_54 [1] : vector<2x8xf32> to vector<2xf32>
    %175 = vector.shape_cast %174 : vector<2xf32> to vector<2x1xf32>
    %176 = vector.broadcast %175 : vector<2x1xf32> to vector<2x8xf32>
    %177 = arith.subf %173, %176 : vector<2x8xf32>
    %178 = math.exp %177 : vector<2x8xf32>
    %cst_55 = arith.constant dense<0.000000e+00> : vector<2xf32>
    %179 = vector.multi_reduction <add>, %178, %cst_55 [1] : vector<2x8xf32> to vector<2xf32>
    %180 = vector.shape_cast %179 : vector<2xf32> to vector<2x1xf32>
    %181 = vector.broadcast %180 : vector<2x1xf32> to vector<2x8xf32>
    %182 = arith.divf %178, %181 : vector<2x8xf32>
    %183 = vector.shape_cast %182 : vector<2x8xf32> to vector<2x1x8xf32>
    "tpu.trace_start"() <{level = 10 : i32, message = "bqs,bsh->bqh"}> : () -> ()
    %cst_56 = arith.constant dense<0.000000e+00> : vector<2x1x32xf32>
    %184 = tpu.matmul %183, %0, %cst_56 {dimension_numbers = #tpu.dot_dimension_numbers<[2], [1], [1], [2], [0, 0, 0, 1, 1, 2], [0], [0]>} : vector<2x1x8xf32>, vector<2x8x32xf32>, vector<2x1x32xf32> -> vector<2x1x32xf32>
    "tpu.trace_stop"() : () -> ()
    %185 = vector.shape_cast %184 : vector<2x1x32xf32> to vector<2x32xf32>
    %186 = tpu.concatenate %164, %185, %144 in 1 : vector<2x16xf32>, vector<2x32xf32>, vector<2x32xf32> -> vector<2x80xf32>
    %cst_57 = arith.constant dense<0.000000e+00> : vector<2x192xf32>
    %187 = tpu.matmul %186, %4, %cst_57 {dimension_numbers = #tpu.dot_dimension_numbers<[1], [0], [0], [1], [0, 0, 1, 1], [], []>} : vector<2x80xf32>, vector<80x192xf32>, vector<2x192xf32> -> vector<2x192xf32>
    %188 = vector.broadcast %5 : vector<1x192xf32> to vector<2x192xf32>
    %189 = arith.addf %187, %188 : vector<2x192xf32>
    %190 = vector.extract_strided_slice %189 {offsets = [0, 0], sizes = [2, 96], strides = [1, 1]} : vector<2x192xf32> to vector<2x96xf32>
    %191 = vector.extract_strided_slice %189 {offsets = [0, 96], sizes = [2, 96], strides = [1, 1]} : vector<2x192xf32> to vector<2x96xf32>
    %192 = vector.extract_strided_slice %190 {offsets = [0, 0], sizes = [2, 32], strides = [1, 1]} : vector<2x96xf32> to vector<2x32xf32>
    %193 = vector.extract_strided_slice %191 {offsets = [0, 0], sizes = [2, 32], strides = [1, 1]} : vector<2x96xf32> to vector<2x32xf32>
    %194 = arith.addf %192, %193 : vector<2x32xf32>
    %195 = arith.negf %194 : vector<2x32xf32>
    %196 = math.exp %195 : vector<2x32xf32>
    %cst_58 = arith.constant 1.000000e+00 : f32
    %197 = vector.broadcast %cst_58 : f32 to vector<2x32xf32>
    %198 = arith.addf %197, %196 : vector<2x32xf32>
    %199 = arith.divf %197, %198 : vector<2x32xf32>
    %200 = vector.extract_strided_slice %190 {offsets = [0, 32], sizes = [2, 32], strides = [1, 1]} : vector<2x96xf32> to vector<2x32xf32>
    %201 = vector.extract_strided_slice %191 {offsets = [0, 32], sizes = [2, 32], strides = [1, 1]} : vector<2x96xf32> to vector<2x32xf32>
    %202 = arith.addf %200, %201 : vector<2x32xf32>
    %203 = arith.negf %202 : vector<2x32xf32>
    %204 = math.exp %203 : vector<2x32xf32>
    %cst_59 = arith.constant 1.000000e+00 : f32
    %205 = vector.broadcast %cst_59 : f32 to vector<2x32xf32>
    %206 = arith.addf %205, %204 : vector<2x32xf32>
    %207 = arith.divf %205, %206 : vector<2x32xf32>
    %208 = vector.extract_strided_slice %190 {offsets = [0, 64], sizes = [2, 32], strides = [1, 1]} : vector<2x96xf32> to vector<2x32xf32>
    %209 = vector.extract_strided_slice %191 {offsets = [0, 64], sizes = [2, 32], strides = [1, 1]} : vector<2x96xf32> to vector<2x32xf32>
    %210 = arith.mulf %199, %209 : vector<2x32xf32>
    %211 = arith.addf %208, %210 : vector<2x32xf32>
    %212 = math.tanh %211 : vector<2x32xf32>
    %cst_60 = arith.constant 1.000000e+00 : f32
    %213 = vector.broadcast %cst_60 : f32 to vector<2x32xf32>
    %214 = arith.subf %213, %207 : vector<2x32xf32>
    %215 = arith.mulf %214, %212 : vector<2x32xf32>
    %216 = arith.mulf %207, %144 : vector<2x32xf32>
    %217 = arith.addf %215, %216 : vector<2x32xf32>
    %cst_61 = arith.constant dense<0.000000e+00> : vector<2x16xf32>
    %218 = tpu.matmul %217, %6, %cst_61 {dimension_numbers = #tpu.dot_dimension_numbers<[1], [0], [0], [1], [0, 0, 1, 1], [], []>} : vector<2x32xf32>, vector<32x16xf32>, vector<2x16xf32> -> vector<2x16xf32>
    %219 = vector.broadcast %7 : vector<1x16xf32> to vector<2x16xf32>
    %220 = arith.addf %218, %219 : vector<2x16xf32>
    %c4 = arith.constant 4 : index
    %c0_62 = arith.constant 0 : index
    %221 = vector.load %arg10[%c4, %c0_62] : memref<14x128xf32, #tpu.memory_space<vmem>>, vector<2x16xf32>
    tpu.vector_store %arg10[%c4, %c0_62], %220 {strides = array<i32>} : memref<14x128xf32, #tpu.memory_space<vmem>>, vector<2x16xf32>,
    %c4_63 = arith.constant 4 : index
    %c16_64 = arith.constant 16 : index
    %222 = vector.load %arg10[%c4_63, %c16_64] : memref<14x128xf32, #tpu.memory_space<vmem>>, vector<2x8xf32>
    tpu.vector_store %arg10[%c4_63, %c16_64], %182 {strides = array<i32>} : memref<14x128xf32, #tpu.memory_space<vmem>>, vector<2x8xf32>,
    %cst_65 = arith.constant dense<0xFF800000> : vector<2xf32>
    %223 = vector.multi_reduction <maximumf>, %220, %cst_65 [1] : vector<2x16xf32> to vector<2xf32>
    %224 = vector.shape_cast %223 : vector<2xf32> to vector<2x1xf32>
    %225 = vector.broadcast %224 : vector<2x1xf32> to vector<2x16xf32>
    %226 = arith.cmpf oeq, %220, %225 : vector<2x16xf32>
    %c16_i32_66 = arith.constant 16 : i32
    %227 = vector.broadcast %c16_i32_66 : i32 to vector<2x16xi32>
    %228 = arith.select %226, %11, %227 : vector<2x16xi1>, vector<2x16xi32>
    %cst_67 = arith.constant dense<2147483647> : vector<2xi32>
    %229 = vector.multi_reduction <minsi>, %228, %cst_67 [1] : vector<2x16xi32> to vector<2xi32>
    %230 = vector.shape_cast %229 : vector<2xi32> to vector<2x1xi32>
    %231 = vector.broadcast %230 : vector<2x1xi32> to vector<2x16xi32>
    %232 = arith.cmpi eq, %11, %231 : vector<2x16xi32>
    %233 = arith.extui %232 : vector<2x16xi1> to vector<2x16xi32>
    %234 = arith.sitofp %233 : vector<2x16xi32> to vector<2x16xf32>
    %235 = tpu.concatenate %234, %217 in 1 : vector<2x16xf32>, vector<2x32xf32> -> vector<2x48xf32>
    %cst_68 = arith.constant dense<0.000000e+00> : vector<2x48xf32>
    %236 = tpu.matmul %235, %3, %cst_68 {dimension_numbers = #tpu.dot_dimension_numbers<[1], [0], [0], [1], [0, 0, 1, 1], [], []>} : vector<2x48xf32>, vector<48x48xf32>, vector<2x48xf32> -> vector<2x48xf32>
    %237 = vector.extract_strided_slice %236 {offsets = [0, 0], sizes = [2, 16], strides = [1, 1]} : vector<2x48xf32> to vector<2x16xf32>
    %238 = vector.extract_strided_slice %236 {offsets = [0, 16], sizes = [2, 32], strides = [1, 1]} : vector<2x48xf32> to vector<2x32xf32>
    %239 = vector.shape_cast %238 : vector<2x32xf32> to vector<2x1x32xf32>
    %240 = vector.broadcast %239 : vector<2x1x32xf32> to vector<2x8x32xf32>
    %241 = arith.addf %240, %1 : vector<2x8x32xf32>
    %242 = math.tanh %241 : vector<2x8x32xf32>
    %243 = vector.shape_cast %2 : vector<1x32xf32> to vector<1x1x32xf32>
    %244 = vector.broadcast %243 : vector<1x1x32xf32> to vector<2x8x32xf32>
    %245 = arith.mulf %242, %244 : vector<2x8x32xf32>
    %cst_69 = arith.constant dense<0.000000e+00> : vector<2x8xf32>
    %246 = vector.multi_reduction <add>, %245, %cst_69 [2] : vector<2x8x32xf32> to vector<2x8xf32>
    %cst_70 = arith.constant dense<0xFF800000> : vector<2xf32>
    %247 = vector.multi_reduction <maximumf>, %246, %cst_70 [1] : vector<2x8xf32> to vector<2xf32>
    %248 = vector.shape_cast %247 : vector<2xf32> to vector<2x1xf32>
    %249 = vector.broadcast %248 : vector<2x1xf32> to vector<2x8xf32>
    %250 = arith.subf %246, %249 : vector<2x8xf32>
    %251 = math.exp %250 : vector<2x8xf32>
    %cst_71 = arith.constant dense<0.000000e+00> : vector<2xf32>
    %252 = vector.multi_reduction <add>, %251, %cst_71 [1] : vector<2x8xf32> to vector<2xf32>
    %253 = vector.shape_cast %252 : vector<2xf32> to vector<2x1xf32>
    %254 = vector.broadcast %253 : vector<2x1xf32> to vector<2x8xf32>
    %255 = arith.divf %251, %254 : vector<2x8xf32>
    %256 = vector.shape_cast %255 : vector<2x8xf32> to vector<2x1x8xf32>
    "tpu.trace_start"() <{level = 10 : i32, message = "bqs,bsh->bqh"}> : () -> ()
    %cst_72 = arith.constant dense<0.000000e+00> : vector<2x1x32xf32>
    %257 = tpu.matmul %256, %0, %cst_72 {dimension_numbers = #tpu.dot_dimension_numbers<[2], [1], [1], [2], [0, 0, 0, 1, 1, 2], [0], [0]>} : vector<2x1x8xf32>, vector<2x8x32xf32>, vector<2x1x32xf32> -> vector<2x1x32xf32>
    "tpu.trace_stop"() : () -> ()
    %258 = vector.shape_cast %257 : vector<2x1x32xf32> to vector<2x32xf32>
    %259 = tpu.concatenate %237, %258, %217 in 1 : vector<2x16xf32>, vector<2x32xf32>, vector<2x32xf32> -> vector<2x80xf32>
    %cst_73 = arith.constant dense<0.000000e+00> : vector<2x192xf32>
    %260 = tpu.matmul %259, %4, %cst_73 {dimension_numbers = #tpu.dot_dimension_numbers<[1], [0], [0], [1], [0, 0, 1, 1], [], []>} : vector<2x80xf32>, vector<80x192xf32>, vector<2x192xf32> -> vector<2x192xf32>
    %261 = vector.broadcast %5 : vector<1x192xf32> to vector<2x192xf32>
    %262 = arith.addf %260, %261 : vector<2x192xf32>
    %263 = vector.extract_strided_slice %262 {offsets = [0, 0], sizes = [2, 96], strides = [1, 1]} : vector<2x192xf32> to vector<2x96xf32>
    %264 = vector.extract_strided_slice %262 {offsets = [0, 96], sizes = [2, 96], strides = [1, 1]} : vector<2x192xf32> to vector<2x96xf32>
    %265 = vector.extract_strided_slice %263 {offsets = [0, 0], sizes = [2, 32], strides = [1, 1]} : vector<2x96xf32> to vector<2x32xf32>
    %266 = vector.extract_strided_slice %264 {offsets = [0, 0], sizes = [2, 32], strides = [1, 1]} : vector<2x96xf32> to vector<2x32xf32>
    %267 = arith.addf %265, %266 : vector<2x32xf32>
    %268 = arith.negf %267 : vector<2x32xf32>
    %269 = math.exp %268 : vector<2x32xf32>
    %cst_74 = arith.constant 1.000000e+00 : f32
    %270 = vector.broadcast %cst_74 : f32 to vector<2x32xf32>
    %271 = arith.addf %270, %269 : vector<2x32xf32>
    %272 = arith.divf %270, %271 : vector<2x32xf32>
    %273 = vector.extract_strided_slice %263 {offsets = [0, 32], sizes = [2, 32], strides = [1, 1]} : vector<2x96xf32> to vector<2x32xf32>
    %274 = vector.extract_strided_slice %264 {offsets = [0, 32], sizes = [2, 32], strides = [1, 1]} : vector<2x96xf32> to vector<2x32xf32>
    %275 = arith.addf %273, %274 : vector<2x32xf32>
    %276 = arith.negf %275 : vector<2x32xf32>
    %277 = math.exp %276 : vector<2x32xf32>
    %cst_75 = arith.constant 1.000000e+00 : f32
    %278 = vector.broadcast %cst_75 : f32 to vector<2x32xf32>
    %279 = arith.addf %278, %277 : vector<2x32xf32>
    %280 = arith.divf %278, %279 : vector<2x32xf32>
    %281 = vector.extract_strided_slice %263 {offsets = [0, 64], sizes = [2, 32], strides = [1, 1]} : vector<2x96xf32> to vector<2x32xf32>
    %282 = vector.extract_strided_slice %264 {offsets = [0, 64], sizes = [2, 32], strides = [1, 1]} : vector<2x96xf32> to vector<2x32xf32>
    %283 = arith.mulf %272, %282 : vector<2x32xf32>
    %284 = arith.addf %281, %283 : vector<2x32xf32>
    %285 = math.tanh %284 : vector<2x32xf32>
    %cst_76 = arith.constant 1.000000e+00 : f32
    %286 = vector.broadcast %cst_76 : f32 to vector<2x32xf32>
    %287 = arith.subf %286, %280 : vector<2x32xf32>
    %288 = arith.mulf %287, %285 : vector<2x32xf32>
    %289 = arith.mulf %280, %217 : vector<2x32xf32>
    %290 = arith.addf %288, %289 : vector<2x32xf32>
    %cst_77 = arith.constant dense<0.000000e+00> : vector<2x16xf32>
    %291 = tpu.matmul %290, %6, %cst_77 {dimension_numbers = #tpu.dot_dimension_numbers<[1], [0], [0], [1], [0, 0, 1, 1], [], []>} : vector<2x32xf32>, vector<32x16xf32>, vector<2x16xf32> -> vector<2x16xf32>
    %292 = vector.broadcast %7 : vector<1x16xf32> to vector<2x16xf32>
    %293 = arith.addf %291, %292 : vector<2x16xf32>
    %c6 = arith.constant 6 : index
    %c0_78 = arith.constant 0 : index
    %294 = vector.load %arg10[%c6, %c0_78] : memref<14x128xf32, #tpu.memory_space<vmem>>, vector<2x16xf32>
    tpu.vector_store %arg10[%c6, %c0_78], %293 {strides = array<i32>} : memref<14x128xf32, #tpu.memory_space<vmem>>, vector<2x16xf32>,
    %c6_79 = arith.constant 6 : index
    %c16_80 = arith.constant 16 : index
    %295 = vector.load %arg10[%c6_79, %c16_80] : memref<14x128xf32, #tpu.memory_space<vmem>>, vector<2x8xf32>
    tpu.vector_store %arg10[%c6_79, %c16_80], %255 {strides = array<i32>} : memref<14x128xf32, #tpu.memory_space<vmem>>, vector<2x8xf32>,
    %cst_81 = arith.constant dense<0xFF800000> : vector<2xf32>
    %296 = vector.multi_reduction <maximumf>, %293, %cst_81 [1] : vector<2x16xf32> to vector<2xf32>
    %297 = vector.shape_cast %296 : vector<2xf32> to vector<2x1xf32>
    %298 = vector.broadcast %297 : vector<2x1xf32> to vector<2x16xf32>
    %299 = arith.cmpf oeq, %293, %298 : vector<2x16xf32>
    %c16_i32_82 = arith.constant 16 : i32
    %300 = vector.broadcast %c16_i32_82 : i32 to vector<2x16xi32>
    %301 = arith.select %299, %11, %300 : vector<2x16xi1>, vector<2x16xi32>
    %cst_83 = arith.constant dense<2147483647> : vector<2xi32>
    %302 = vector.multi_reduction <minsi>, %301, %cst_83 [1] : vector<2x16xi32> to vector<2xi32>
    %303 = vector.shape_cast %302 : vector<2xi32> to vector<2x1xi32>
    %304 = vector.broadcast %303 : vector<2x1xi32> to vector<2x16xi32>
    %305 = arith.cmpi eq, %11, %304 : vector<2x16xi32>
    %306 = arith.extui %305 : vector<2x16xi1> to vector<2x16xi32>
    %307 = arith.sitofp %306 : vector<2x16xi32> to vector<2x16xf32>
    %308 = tpu.concatenate %307, %290 in 1 : vector<2x16xf32>, vector<2x32xf32> -> vector<2x48xf32>
    %cst_84 = arith.constant dense<0.000000e+00> : vector<2x48xf32>
    %309 = tpu.matmul %308, %3, %cst_84 {dimension_numbers = #tpu.dot_dimension_numbers<[1], [0], [0], [1], [0, 0, 1, 1], [], []>} : vector<2x48xf32>, vector<48x48xf32>, vector<2x48xf32> -> vector<2x48xf32>
    %310 = vector.extract_strided_slice %309 {offsets = [0, 0], sizes = [2, 16], strides = [1, 1]} : vector<2x48xf32> to vector<2x16xf32>
    %311 = vector.extract_strided_slice %309 {offsets = [0, 16], sizes = [2, 32], strides = [1, 1]} : vector<2x48xf32> to vector<2x32xf32>
    %312 = vector.shape_cast %311 : vector<2x32xf32> to vector<2x1x32xf32>
    %313 = vector.broadcast %312 : vector<2x1x32xf32> to vector<2x8x32xf32>
    %314 = arith.addf %313, %1 : vector<2x8x32xf32>
    %315 = math.tanh %314 : vector<2x8x32xf32>
    %316 = vector.shape_cast %2 : vector<1x32xf32> to vector<1x1x32xf32>
    %317 = vector.broadcast %316 : vector<1x1x32xf32> to vector<2x8x32xf32>
    %318 = arith.mulf %315, %317 : vector<2x8x32xf32>
    %cst_85 = arith.constant dense<0.000000e+00> : vector<2x8xf32>
    %319 = vector.multi_reduction <add>, %318, %cst_85 [2] : vector<2x8x32xf32> to vector<2x8xf32>
    %cst_86 = arith.constant dense<0xFF800000> : vector<2xf32>
    %320 = vector.multi_reduction <maximumf>, %319, %cst_86 [1] : vector<2x8xf32> to vector<2xf32>
    %321 = vector.shape_cast %320 : vector<2xf32> to vector<2x1xf32>
    %322 = vector.broadcast %321 : vector<2x1xf32> to vector<2x8xf32>
    %323 = arith.subf %319, %322 : vector<2x8xf32>
    %324 = math.exp %323 : vector<2x8xf32>
    %cst_87 = arith.constant dense<0.000000e+00> : vector<2xf32>
    %325 = vector.multi_reduction <add>, %324, %cst_87 [1] : vector<2x8xf32> to vector<2xf32>
    %326 = vector.shape_cast %325 : vector<2xf32> to vector<2x1xf32>
    %327 = vector.broadcast %326 : vector<2x1xf32> to vector<2x8xf32>
    %328 = arith.divf %324, %327 : vector<2x8xf32>
    %329 = vector.shape_cast %328 : vector<2x8xf32> to vector<2x1x8xf32>
    "tpu.trace_start"() <{level = 10 : i32, message = "bqs,bsh->bqh"}> : () -> ()
    %cst_88 = arith.constant dense<0.000000e+00> : vector<2x1x32xf32>
    %330 = tpu.matmul %329, %0, %cst_88 {dimension_numbers = #tpu.dot_dimension_numbers<[2], [1], [1], [2], [0, 0, 0, 1, 1, 2], [0], [0]>} : vector<2x1x8xf32>, vector<2x8x32xf32>, vector<2x1x32xf32> -> vector<2x1x32xf32>
    "tpu.trace_stop"() : () -> ()
    %331 = vector.shape_cast %330 : vector<2x1x32xf32> to vector<2x32xf32>
    %332 = tpu.concatenate %310, %331, %290 in 1 : vector<2x16xf32>, vector<2x32xf32>, vector<2x32xf32> -> vector<2x80xf32>
    %cst_89 = arith.constant dense<0.000000e+00> : vector<2x192xf32>
    %333 = tpu.matmul %332, %4, %cst_89 {dimension_numbers = #tpu.dot_dimension_numbers<[1], [0], [0], [1], [0, 0, 1, 1], [], []>} : vector<2x80xf32>, vector<80x192xf32>, vector<2x192xf32> -> vector<2x192xf32>
    %334 = vector.broadcast %5 : vector<1x192xf32> to vector<2x192xf32>
    %335 = arith.addf %333, %334 : vector<2x192xf32>
    %336 = vector.extract_strided_slice %335 {offsets = [0, 0], sizes = [2, 96], strides = [1, 1]} : vector<2x192xf32> to vector<2x96xf32>
    %337 = vector.extract_strided_slice %335 {offsets = [0, 96], sizes = [2, 96], strides = [1, 1]} : vector<2x192xf32> to vector<2x96xf32>
    %338 = vector.extract_strided_slice %336 {offsets = [0, 0], sizes = [2, 32], strides = [1, 1]} : vector<2x96xf32> to vector<2x32xf32>
    %339 = vector.extract_strided_slice %337 {offsets = [0, 0], sizes = [2, 32], strides = [1, 1]} : vector<2x96xf32> to vector<2x32xf32>
    %340 = arith.addf %338, %339 : vector<2x32xf32>
    %341 = arith.negf %340 : vector<2x32xf32>
    %342 = math.exp %341 : vector<2x32xf32>
    %cst_90 = arith.constant 1.000000e+00 : f32
    %343 = vector.broadcast %cst_90 : f32 to vector<2x32xf32>
    %344 = arith.addf %343, %342 : vector<2x32xf32>
    %345 = arith.divf %343, %344 : vector<2x32xf32>
    %346 = vector.extract_strided_slice %336 {offsets = [0, 32], sizes = [2, 32], strides = [1, 1]} : vector<2x96xf32> to vector<2x32xf32>
    %347 = vector.extract_strided_slice %337 {offsets = [0, 32], sizes = [2, 32], strides = [1, 1]} : vector<2x96xf32> to vector<2x32xf32>
    %348 = arith.addf %346, %347 : vector<2x32xf32>
    %349 = arith.negf %348 : vector<2x32xf32>
    %350 = math.exp %349 : vector<2x32xf32>
    %cst_91 = arith.constant 1.000000e+00 : f32
    %351 = vector.broadcast %cst_91 : f32 to vector<2x32xf32>
    %352 = arith.addf %351, %350 : vector<2x32xf32>
    %353 = arith.divf %351, %352 : vector<2x32xf32>
    %354 = vector.extract_strided_slice %336 {offsets = [0, 64], sizes = [2, 32], strides = [1, 1]} : vector<2x96xf32> to vector<2x32xf32>
    %355 = vector.extract_strided_slice %337 {offsets = [0, 64], sizes = [2, 32], strides = [1, 1]} : vector<2x96xf32> to vector<2x32xf32>
    %356 = arith.mulf %345, %355 : vector<2x32xf32>
    %357 = arith.addf %354, %356 : vector<2x32xf32>
    %358 = math.tanh %357 : vector<2x32xf32>
    %cst_92 = arith.constant 1.000000e+00 : f32
    %359 = vector.broadcast %cst_92 : f32 to vector<2x32xf32>
    %360 = arith.subf %359, %353 : vector<2x32xf32>
    %361 = arith.mulf %360, %358 : vector<2x32xf32>
    %362 = arith.mulf %353, %290 : vector<2x32xf32>
    %363 = arith.addf %361, %362 : vector<2x32xf32>
    %cst_93 = arith.constant dense<0.000000e+00> : vector<2x16xf32>
    %364 = tpu.matmul %363, %6, %cst_93 {dimension_numbers = #tpu.dot_dimension_numbers<[1], [0], [0], [1], [0, 0, 1, 1], [], []>} : vector<2x32xf32>, vector<32x16xf32>, vector<2x16xf32> -> vector<2x16xf32>
    %365 = vector.broadcast %7 : vector<1x16xf32> to vector<2x16xf32>
    %366 = arith.addf %364, %365 : vector<2x16xf32>
    %c8 = arith.constant 8 : index
    %c0_94 = arith.constant 0 : index
    %367 = vector.load %arg10[%c8, %c0_94] : memref<14x128xf32, #tpu.memory_space<vmem>>, vector<2x16xf32>
    tpu.vector_store %arg10[%c8, %c0_94], %366 {strides = array<i32>} : memref<14x128xf32, #tpu.memory_space<vmem>>, vector<2x16xf32>,
    %c8_95 = arith.constant 8 : index
    %c16_96 = arith.constant 16 : index
    %368 = vector.load %arg10[%c8_95, %c16_96] : memref<14x128xf32, #tpu.memory_space<vmem>>, vector<2x8xf32>
    tpu.vector_store %arg10[%c8_95, %c16_96], %328 {strides = array<i32>} : memref<14x128xf32, #tpu.memory_space<vmem>>, vector<2x8xf32>,
    %cst_97 = arith.constant dense<0xFF800000> : vector<2xf32>
    %369 = vector.multi_reduction <maximumf>, %366, %cst_97 [1] : vector<2x16xf32> to vector<2xf32>
    %370 = vector.shape_cast %369 : vector<2xf32> to vector<2x1xf32>
    %371 = vector.broadcast %370 : vector<2x1xf32> to vector<2x16xf32>
    %372 = arith.cmpf oeq, %366, %371 : vector<2x16xf32>
    %c16_i32_98 = arith.constant 16 : i32
    %373 = vector.broadcast %c16_i32_98 : i32 to vector<2x16xi32>
    %374 = arith.select %372, %11, %373 : vector<2x16xi1>, vector<2x16xi32>
    %cst_99 = arith.constant dense<2147483647> : vector<2xi32>
    %375 = vector.multi_reduction <minsi>, %374, %cst_99 [1] : vector<2x16xi32> to vector<2xi32>
    %376 = vector.shape_cast %375 : vector<2xi32> to vector<2x1xi32>
    %377 = vector.broadcast %376 : vector<2x1xi32> to vector<2x16xi32>
    %378 = arith.cmpi eq, %11, %377 : vector<2x16xi32>
    %379 = arith.extui %378 : vector<2x16xi1> to vector<2x16xi32>
    %380 = arith.sitofp %379 : vector<2x16xi32> to vector<2x16xf32>
    %381 = tpu.concatenate %380, %363 in 1 : vector<2x16xf32>, vector<2x32xf32> -> vector<2x48xf32>
    %cst_100 = arith.constant dense<0.000000e+00> : vector<2x48xf32>
    %382 = tpu.matmul %381, %3, %cst_100 {dimension_numbers = #tpu.dot_dimension_numbers<[1], [0], [0], [1], [0, 0, 1, 1], [], []>} : vector<2x48xf32>, vector<48x48xf32>, vector<2x48xf32> -> vector<2x48xf32>
    %383 = vector.extract_strided_slice %382 {offsets = [0, 0], sizes = [2, 16], strides = [1, 1]} : vector<2x48xf32> to vector<2x16xf32>
    %384 = vector.extract_strided_slice %382 {offsets = [0, 16], sizes = [2, 32], strides = [1, 1]} : vector<2x48xf32> to vector<2x32xf32>
    %385 = vector.shape_cast %384 : vector<2x32xf32> to vector<2x1x32xf32>
    %386 = vector.broadcast %385 : vector<2x1x32xf32> to vector<2x8x32xf32>
    %387 = arith.addf %386, %1 : vector<2x8x32xf32>
    %388 = math.tanh %387 : vector<2x8x32xf32>
    %389 = vector.shape_cast %2 : vector<1x32xf32> to vector<1x1x32xf32>
    %390 = vector.broadcast %389 : vector<1x1x32xf32> to vector<2x8x32xf32>
    %391 = arith.mulf %388, %390 : vector<2x8x32xf32>
    %cst_101 = arith.constant dense<0.000000e+00> : vector<2x8xf32>
    %392 = vector.multi_reduction <add>, %391, %cst_101 [2] : vector<2x8x32xf32> to vector<2x8xf32>
    %cst_102 = arith.constant dense<0xFF800000> : vector<2xf32>
    %393 = vector.multi_reduction <maximumf>, %392, %cst_102 [1] : vector<2x8xf32> to vector<2xf32>
    %394 = vector.shape_cast %393 : vector<2xf32> to vector<2x1xf32>
    %395 = vector.broadcast %394 : vector<2x1xf32> to vector<2x8xf32>
    %396 = arith.subf %392, %395 : vector<2x8xf32>
    %397 = math.exp %396 : vector<2x8xf32>
    %cst_103 = arith.constant dense<0.000000e+00> : vector<2xf32>
    %398 = vector.multi_reduction <add>, %397, %cst_103 [1] : vector<2x8xf32> to vector<2xf32>
    %399 = vector.shape_cast %398 : vector<2xf32> to vector<2x1xf32>
    %400 = vector.broadcast %399 : vector<2x1xf32> to vector<2x8xf32>
    %401 = arith.divf %397, %400 : vector<2x8xf32>
    %402 = vector.shape_cast %401 : vector<2x8xf32> to vector<2x1x8xf32>
    "tpu.trace_start"() <{level = 10 : i32, message = "bqs,bsh->bqh"}> : () -> ()
    %cst_104 = arith.constant dense<0.000000e+00> : vector<2x1x32xf32>
    %403 = tpu.matmul %402, %0, %cst_104 {dimension_numbers = #tpu.dot_dimension_numbers<[2], [1], [1], [2], [0, 0, 0, 1, 1, 2], [0], [0]>} : vector<2x1x8xf32>, vector<2x8x32xf32>, vector<2x1x32xf32> -> vector<2x1x32xf32>
    "tpu.trace_stop"() : () -> ()
    %404 = vector.shape_cast %403 : vector<2x1x32xf32> to vector<2x32xf32>
    %405 = tpu.concatenate %383, %404, %363 in 1 : vector<2x16xf32>, vector<2x32xf32>, vector<2x32xf32> -> vector<2x80xf32>
    %cst_105 = arith.constant dense<0.000000e+00> : vector<2x192xf32>
    %406 = tpu.matmul %405, %4, %cst_105 {dimension_numbers = #tpu.dot_dimension_numbers<[1], [0], [0], [1], [0, 0, 1, 1], [], []>} : vector<2x80xf32>, vector<80x192xf32>, vector<2x192xf32> -> vector<2x192xf32>
    %407 = vector.broadcast %5 : vector<1x192xf32> to vector<2x192xf32>
    %408 = arith.addf %406, %407 : vector<2x192xf32>
    %409 = vector.extract_strided_slice %408 {offsets = [0, 0], sizes = [2, 96], strides = [1, 1]} : vector<2x192xf32> to vector<2x96xf32>
    %410 = vector.extract_strided_slice %408 {offsets = [0, 96], sizes = [2, 96], strides = [1, 1]} : vector<2x192xf32> to vector<2x96xf32>
    %411 = vector.extract_strided_slice %409 {offsets = [0, 0], sizes = [2, 32], strides = [1, 1]} : vector<2x96xf32> to vector<2x32xf32>
    %412 = vector.extract_strided_slice %410 {offsets = [0, 0], sizes = [2, 32], strides = [1, 1]} : vector<2x96xf32> to vector<2x32xf32>
    %413 = arith.addf %411, %412 : vector<2x32xf32>
    %414 = arith.negf %413 : vector<2x32xf32>
    %415 = math.exp %414 : vector<2x32xf32>
    %cst_106 = arith.constant 1.000000e+00 : f32
    %416 = vector.broadcast %cst_106 : f32 to vector<2x32xf32>
    %417 = arith.addf %416, %415 : vector<2x32xf32>
    %418 = arith.divf %416, %417 : vector<2x32xf32>
    %419 = vector.extract_strided_slice %409 {offsets = [0, 32], sizes = [2, 32], strides = [1, 1]} : vector<2x96xf32> to vector<2x32xf32>
    %420 = vector.extract_strided_slice %410 {offsets = [0, 32], sizes = [2, 32], strides = [1, 1]} : vector<2x96xf32> to vector<2x32xf32>
    %421 = arith.addf %419, %420 : vector<2x32xf32>
    %422 = arith.negf %421 : vector<2x32xf32>
    %423 = math.exp %422 : vector<2x32xf32>
    %cst_107 = arith.constant 1.000000e+00 : f32
    %424 = vector.broadcast %cst_107 : f32 to vector<2x32xf32>
    %425 = arith.addf %424, %423 : vector<2x32xf32>
    %426 = arith.divf %424, %425 : vector<2x32xf32>
    %427 = vector.extract_strided_slice %409 {offsets = [0, 64], sizes = [2, 32], strides = [1, 1]} : vector<2x96xf32> to vector<2x32xf32>
    %428 = vector.extract_strided_slice %410 {offsets = [0, 64], sizes = [2, 32], strides = [1, 1]} : vector<2x96xf32> to vector<2x32xf32>
    %429 = arith.mulf %418, %428 : vector<2x32xf32>
    %430 = arith.addf %427, %429 : vector<2x32xf32>
    %431 = math.tanh %430 : vector<2x32xf32>
    %cst_108 = arith.constant 1.000000e+00 : f32
    %432 = vector.broadcast %cst_108 : f32 to vector<2x32xf32>
    %433 = arith.subf %432, %426 : vector<2x32xf32>
    %434 = arith.mulf %433, %431 : vector<2x32xf32>
    %435 = arith.mulf %426, %363 : vector<2x32xf32>
    %436 = arith.addf %434, %435 : vector<2x32xf32>
    %cst_109 = arith.constant dense<0.000000e+00> : vector<2x16xf32>
    %437 = tpu.matmul %436, %6, %cst_109 {dimension_numbers = #tpu.dot_dimension_numbers<[1], [0], [0], [1], [0, 0, 1, 1], [], []>} : vector<2x32xf32>, vector<32x16xf32>, vector<2x16xf32> -> vector<2x16xf32>
    %438 = vector.broadcast %7 : vector<1x16xf32> to vector<2x16xf32>
    %439 = arith.addf %437, %438 : vector<2x16xf32>
    %c10 = arith.constant 10 : index
    %c0_110 = arith.constant 0 : index
    %440 = vector.load %arg10[%c10, %c0_110] : memref<14x128xf32, #tpu.memory_space<vmem>>, vector<2x16xf32>
    tpu.vector_store %arg10[%c10, %c0_110], %439 {strides = array<i32>} : memref<14x128xf32, #tpu.memory_space<vmem>>, vector<2x16xf32>,
    %c10_111 = arith.constant 10 : index
    %c16_112 = arith.constant 16 : index
    %441 = vector.load %arg10[%c10_111, %c16_112] : memref<14x128xf32, #tpu.memory_space<vmem>>, vector<2x8xf32>
    tpu.vector_store %arg10[%c10_111, %c16_112], %401 {strides = array<i32>} : memref<14x128xf32, #tpu.memory_space<vmem>>, vector<2x8xf32>,
    %c12 = arith.constant 12 : index
    %c0_113 = arith.constant 0 : index
    %442 = vector.load %arg10[%c12, %c0_113] : memref<14x128xf32, #tpu.memory_space<vmem>>, vector<2x32xf32>
    tpu.vector_store %arg10[%c12, %c0_113], %436 {strides = array<i32>} : memref<14x128xf32, #tpu.memory_space<vmem>>, vector<2x32xf32>,
    return
  }
  func.func @transform_0(%arg0: i32) -> (i32, i32, i32) {
    %c0_i32 = arith.constant 0 : i32
    %c0_i32_0 = arith.constant 0 : i32
    %c0_i32_1 = arith.constant 0 : i32
    %c0_i32_2 = arith.constant 0 : i32
    return %c0_i32, %c0_i32_0, %c0_i32_1 : i32, i32, i32
  }
  func.func @transform_1(%arg0: i32) -> (i32, i32) {
    %c0_i32 = arith.constant 0 : i32
    %c0_i32_0 = arith.constant 0 : i32
    %c0_i32_1 = arith.constant 0 : i32
    return %c0_i32, %c0_i32_0 : i32, i32
  }
  func.func @transform_2(%arg0: i32) -> (i32, i32, i32) {
    %c0_i32 = arith.constant 0 : i32
    %c0_i32_0 = arith.constant 0 : i32
    %c0_i32_1 = arith.constant 0 : i32
    %c0_i32_2 = arith.constant 0 : i32
    return %c0_i32, %c0_i32_0, %c0_i32_1 : i32, i32, i32
  }
  func.func @transform_3(%arg0: i32) -> (i32, i32) {
    %c0_i32 = arith.constant 0 : i32
    %c0_i32_0 = arith.constant 0 : i32
    %c0_i32_1 = arith.constant 0 : i32
    return %c0_i32, %c0_i32_0 : i32, i32
  }
  func.func @transform_4(%arg0: i32) -> (i32, i32) {
    %c0_i32 = arith.constant 0 : i32
    %c0_i32_0 = arith.constant 0 : i32
    %c0_i32_1 = arith.constant 0 : i32
    return %c0_i32, %c0_i32_0 : i32, i32
  }
  func.func @transform_5(%arg0: i32) -> (i32, i32) {
    %c0_i32 = arith.constant 0 : i32
    %c0_i32_0 = arith.constant 0 : i32
    %c0_i32_1 = arith.constant 0 : i32
    return %c0_i32, %c0_i32_0 : i32, i32
  }
  func.func @transform_6(%arg0: i32) -> (i32, i32) {
    %c0_i32 = arith.constant 0 : i32
    %c0_i32_0 = arith.constant 0 : i32
    %c0_i32_1 = arith.constant 0 : i32
    return %c0_i32, %c0_i32_0 : i32, i32
  }
  func.func @transform_7(%arg0: i32) -> (i32, i32) {
    %c0_i32 = arith.constant 0 : i32
    %c0_i32_0 = arith.constant 0 : i32
    %c0_i32_1 = arith.constant 0 : i32
    return %c0_i32, %c0_i32_0 : i32, i32
  }
  func.func @transform_8(%arg0: i32) -> (i32, i32) {
    %c0_i32 = arith.constant 0 : i32
    %c0_i32_0 = arith.constant 0 : i32
    %c0_i32_1 = arith.constant 0 : i32
    return %c0_i32, %c0_i32_0 : i32, i32
  }
  func.func @transform_9(%arg0: i32) -> (i32, i32) {
    %c0_i32 = arith.constant 0 : i32
    %c0_i32_0 = arith.constant 0 : i32
    %c0_i32_1 = arith.constant 0 : i32
    return %c0_i32, %c0_i32_0 : i32, i32
  }
}

</mosaic_0001>

<llo_original>
// kernel: decoder_attention_pallas.1
$region0: #{decoder_attention_pallas.1}
  #allocation0 [shape = 'u32[]', space=smem, size = 0x4, offset = 0x4, fixed_abs, tag = 'smem constant byte address 0x4 - core index']
  #allocation1 [shape = 'u32[144,128]{1,0:T(1,128)}', space=vmem, size = 0x12000, scoped, tag = 'internal scratch']
  %s0 = inlined_call_operand.vmem [shape: f32[2,8,32], index: 0, kind: input, shape index: {}]
  %s1 = inlined_call_operand.vmem [shape: f32[2,32], index: 1, kind: input, shape index: {}]
  %s2 = inlined_call_operand.vmem [shape: f32[2,8,32], index: 2, kind: input, shape index: {}]
  %s3 = inlined_call_operand.vmem [shape: f32[1,32], index: 3, kind: input, shape index: {}]
  %s4 = inlined_call_operand.vmem [shape: f32[48,48], index: 4, kind: input, shape index: {}]
  %s5 = inlined_call_operand.vmem [shape: f32[80,192], index: 5, kind: input, shape index: {}]
  %s6 = inlined_call_operand.vmem [shape: f32[1,192], index: 6, kind: input, shape index: {}]
  %s7 = inlined_call_operand.vmem [shape: f32[32,16], index: 7, kind: input, shape index: {}]
  %s8 = inlined_call_operand.vmem [shape: f32[1,16], index: 8, kind: input, shape index: {}]
  %s9 = inlined_call_operand.vmem [shape: f32[14,128], index: 9, kind: output, shape index: {}]
  %s10 = sld [smem:[#allocation0]]
  $region46: #{decoder_attention_pallas.1} parent=0
    _
  %s12 = ssub.s32 1, %s10
  %s13 = scalar_select 0, %s12, %s10
  // Predicated region
  $region2: #{decoder_attention_pallas.1} parent=0 // pred_check
    _
  $region3: #{decoder_attention_pallas.1} parent=0 // pred_check_branch
    %15 = sbr.rel (0) target = $region5
  $region4: #{decoder_attention_pallas.1} parent=0 // pred_region
    _
  $region5: #{decoder_attention_pallas.1} parent=0 // pred_fallthru
    _
  // Predicated region
  $region6: #{decoder_attention_pallas.1} parent=0 // pred_check
    _
  $region7: #{decoder_attention_pallas.1} parent=0 // pred_check_branch
    %17 = sbr.rel (0) target = $region9
  $region8: #{decoder_attention_pallas.1} parent=0 // pred_region
    _
  $region9: #{decoder_attention_pallas.1} parent=0 // pred_fallthru
    _
  // Predicated region
  $region10: #{decoder_attention_pallas.1} parent=0 // pred_check
    _
  $region11: #{decoder_attention_pallas.1} parent=0 // pred_check_branch
    %19 = sbr.rel (0) target = $region13
  $region12: #{decoder_attention_pallas.1} parent=0 // pred_region
    _
  $region13: #{decoder_attention_pallas.1} parent=0 // pred_fallthru
    _
  // Predicated region
  $region14: #{decoder_attention_pallas.1} parent=0 // pred_check
    _
  $region15: #{decoder_attention_pallas.1} parent=0 // pred_check_branch
    %21 = sbr.rel (0) target = $region17
  $region16: #{decoder_attention_pallas.1} parent=0 // pred_region
    _
  $region17: #{decoder_attention_pallas.1} parent=0 // pred_fallthru
    _
  // Predicated region
  $region18: #{decoder_attention_pallas.1} parent=0 // pred_check
    _
  $region19: #{decoder_attention_pallas.1} parent=0 // pred_check_branch
    %23 = sbr.rel (0) target = $region21
  $region20: #{decoder_attention_pallas.1} parent=0 // pred_region
    _
  $region21: #{decoder_attention_pallas.1} parent=0 // pred_fallthru
    _
  // Predicated region
  $region22: #{decoder_attention_pallas.1} parent=0 // pred_check
    _
  $region23: #{decoder_attention_pallas.1} parent=0 // pred_check_branch
    %25 = sbr.rel (0) target = $region25
  $region24: #{decoder_attention_pallas.1} parent=0 // pred_region
    _
  $region25: #{decoder_attention_pallas.1} parent=0 // pred_fallthru
    _
  // Predicated region
  $region26: #{decoder_attention_pallas.1} parent=0 // pred_check
    _
  $region27: #{decoder_attention_pallas.1} parent=0 // pred_check_branch
    %27 = sbr.rel (0) target = $region29
  $region28: #{decoder_attention_pallas.1} parent=0 // pred_region
    _
  $region29: #{decoder_attention_pallas.1} parent=0 // pred_fallthru
    _
  // Predicated region
  $region30: #{decoder_attention_pallas.1} parent=0 // pred_check
    _
  $region31: #{decoder_attention_pallas.1} parent=0 // pred_check_branch
    %29 = sbr.rel (0) target = $region33
  $region32: #{decoder_attention_pallas.1} parent=0 // pred_region
    _
  $region33: #{decoder_attention_pallas.1} parent=0 // pred_fallthru
    _
  // Predicated region
  $region34: #{decoder_attention_pallas.1} parent=0 // pred_check
    _
  $region35: #{decoder_attention_pallas.1} parent=0 // pred_check_branch
    %31 = sbr.rel (0) target = $region37
  $region36: #{decoder_attention_pallas.1} parent=0 // pred_region
    _
  $region37: #{decoder_attention_pallas.1} parent=0 // pred_fallthru
    _
  %v32 = vld [vmem:[%s0] sm:$0xff]
  %v33 = vld [vmem:[%s0 + $0x8] sm:$0xff]
  %v34 = vld [vmem:[%s2] sm:$0xff]
  %v35 = vld [vmem:[%s2 + $0x8] sm:$0xff]
  %v36 = vld [vmem:[%s3] sm:$0x1]
  %v37 = vld [vmem:[%s4] sm:$0xff]
  %v38 = vld [vmem:[%s4 + $0x8] sm:$0xff]
  %v39 = vld [vmem:[%s4 + $0x10] sm:$0xff]
  %v40 = vld [vmem:[%s4 + $0x18] sm:$0xff]
  %v41 = vld [vmem:[%s4 + $0x20] sm:$0xff]
  %v42 = vld [vmem:[%s4 + $0x28] sm:$0xff]
  %v43 = vld [vmem:[%s5] sm:$0xff]
  %v44 = vld [vmem:[%s5 + $0x8] sm:$0xff]
  %v45 = vld [vmem:[%s5 + $0x10] sm:$0xff]
  %v46 = vld [vmem:[%s5 + $0x18] sm:$0xff]
  %v47 = vld [vmem:[%s5 + $0x20] sm:$0xff]
  %v48 = vld [vmem:[%s5 + $0x28] sm:$0xff]
  %v49 = vld [vmem:[%s5 + $0x30] sm:$0xff]
  %v50 = vld [vmem:[%s5 + $0x38] sm:$0xff]
  %v51 = vld [vmem:[%s5 + $0x40] sm:$0xff]
  %v52 = vld [vmem:[%s5 + $0x48] sm:$0xff]
  %v53 = vld [vmem:[%s5 + $0x50] sm:$0xff]
  %v54 = vld [vmem:[%s5 + $0x58] sm:$0xff]
  %v55 = vld [vmem:[%s5 + $0x60] sm:$0xff]
  %v56 = vld [vmem:[%s5 + $0x68] sm:$0xff]
  %v57 = vld [vmem:[%s5 + $0x70] sm:$0xff]
  %v58 = vld [vmem:[%s5 + $0x78] sm:$0xff]
  %v59 = vld [vmem:[%s5 + $0x80] sm:$0xff]
  %v60 = vld [vmem:[%s5 + $0x88] sm:$0xff]
  %v61 = vld [vmem:[%s5 + $0x90] sm:$0xff]
  %v62 = vld [vmem:[%s5 + $0x98] sm:$0xff]
  %v63 = vld [vmem:[%s6] sm:$0x3]
  %v64 = vld [vmem:[%s7] sm:$0xff]
  %v65 = vld [vmem:[%s7 + $0x8] sm:$0xff]
  %v66 = vld [vmem:[%s7 + $0x10] sm:$0xff]
  %v67 = vld [vmem:[%s7 + $0x18] sm:$0xff]
  %v68 = vld [vmem:[%s8] sm:$0x1]
  %69 = vst [vmem:[%s9] sm:$0xff] 0.0
  %70 = vst [vmem:[%s9 + $0x8] sm:$0x3f] 0.0
  %v71 = vld [vmem:[%s1] sm:$0x3]
  %v72 = vlaneseq
  %v73 = vand.u32 %v72, 127
  %vm74 = vcmp.eq.s32.totalorder %v73, 1
  %v75 = vsel %vm74, 1, 0
  %v76 = vcvt.s32.f32 %v75
  %78 = vrot.lane.b32.xlu0 %v71, 16
  %v79 = vpop.permute.xlu0 %78
  %vm81 = vcmask 130048
  %v82 = vsel %vm81, %v76, %v79
  %vm83 = vcmask 392192
  %v85 = vsel %vm83, %v82, 0
  %87 = vmatprep.subr.mxu0 0.0
  %88 = vmatpush1.msra.mxu0 0.0
  %89 = vmatprep.subr.mxu0 0.0
  %90 = vmatpush1.msra.mxu0 0.0
  %91 = vmatprep.subr.mxu0 0.0
  %92 = vmatpush1.msra.mxu0 0.0
  %93 = vmatprep.subr.mxu0 0.0
  %94 = vmatpush1.msra.mxu0 0.0
  %95 = vmatprep.subr.mxu0 0.0
  %96 = vmatpush1.msra.mxu0 0.0
  %97 = vmatprep.subr.mxu0 0.0
  %98 = vmatpush1.msra.mxu0 0.0
  %99 = vmatprep.subr.mxu0 0.0
  %100 = vmatpush1.msra.mxu0 0.0
  %101 = vmatprep.subr.mxu0 0.0
  %102 = vmatpush1.msra.mxu0 0.0
  %103 = vmatprep.subr.mxu0 0.0
  %104 = vmatpush1.msra.mxu0 0.0
  %105 = vmatprep.subr.mxu0 0.0
  %106 = vmatpush1.msra.mxu0 0.0
  %107 = vmatprep.subr.mxu0 0.0
  %108 = vmatpush1.msra.mxu0 %v42
  %109 = vmatprep.subr.mxu0 0.0
  %110 = vmatpush1.msra.mxu0 %v41
  %111 = vmatprep.subr.mxu0 0.0
  %112 = vmatpush1.msra.mxu0 %v40
  %113 = vmatprep.subr.mxu0 0.0
  %114 = vmatpush1.msra.mxu0 %v39
  %115 = vmatprep.subr.mxu0 0.0
  %116 = vmatpush1.msra.mxu0 %v38
  %117 = vmatprep.subr.mxu0 0.0
  %118 = vmatpush1.msra.mxu0 %v37
  %119 = vmatprep.subr.mxu0 0.0
  %120 = vmatpush2.msra.mxu0 0.0
  %121 = vmatprep.subr.mxu0 0.0
  %122 = vmatpush2.msra.mxu0 0.0
  %123 = vmatprep.subr.mxu0 0.0
  %124 = vmatpush2.msra.mxu0 0.0
  %125 = vmatprep.subr.mxu0 0.0
  %126 = vmatpush2.msra.mxu0 0.0
  %127 = vmatprep.subr.mxu0 0.0
  %128 = vmatpush2.msra.mxu0 0.0
  %129 = vmatprep.subr.mxu0 0.0
  %130 = vmatpush2.msra.mxu0 0.0
  %131 = vmatprep.subr.mxu0 0.0
  %132 = vmatpush2.msra.mxu0 0.0
  %133 = vmatprep.subr.mxu0 0.0
  %134 = vmatpush2.msra.mxu0 0.0
  %135 = vmatprep.subr.mxu0 0.0
  %136 = vmatpush2.msra.mxu0 0.0
  %137 = vmatprep.subr.mxu0 0.0
  %138 = vmatpush2.msra.mxu0 0.0
  %139 = vmatprep.subr.mxu0 0.0
  %140 = vmatpush2.msra.mxu0 0.0
  %141 = vmatprep.subr.mxu0 0.0
  %142 = vmatpush2.msra.mxu0 0.0
  %143 = vmatprep.subr.mxu0 0.0
  %144 = vmatpush2.msra.mxu0 0.0
  %145 = vmatprep.subr.mxu0 0.0
  %146 = vmatpush2.msra.mxu0 0.0
  %147 = vmatprep.subr.mxu0 0.0
  %148 = vmatpush2.msra.mxu0 0.0
  %149 = vmatprep.subr.mxu0 0.0
  %150 = vmatpush2.msra.mxu0 0.0
  %151 = vmatprep.mubr.f32.mxu0 0.0
  %152 = vmatmul.mubr.f32.gmra.mxu0 %v85
  %v153 = vpop.f32.mrf.mxu0
  %v154 = vadd.f32 0.0, %v153
  %v155 = vpop.f32.mrf.mxu0
  %156 = vdwg.mxu0
  %v159 = vunpack.c.l.s4 1966171168
  %v160 = vunpack.c.0.s8 %v159
  %v161 = vlaneseq
  %v162 = vshrl.u32 %v161, 7
  %v163 = vsub.s32 %v160, %v162
  %v164 = vrot.slane %v154, %v163
  %v165 = vcombine.high %v164, %v164
  %v167 = vunpack.c.l.s4 1966171168
  %v168 = vunpack.c.0.s8 %v167
  %v169 = vlaneseq
  %v170 = vshrl.u32 %v169, 7
  %v171 = vsub.s32 %v168, %v170
  %v172 = vrot.slane %v164, %v171
  %v174 = vunpack.c.l.s4 1966171168
  %v175 = vunpack.c.0.s8 %v174
  %v176 = vlaneseq
  %v177 = vshrl.u32 %v176, 7
  %v178 = vsub.s32 %v175, %v177
  %v179 = vrot.slane %v165, %v178
  %v180 = vlaneseq
  %v181 = vshrl.u32 %v180, 7
  %v182 = vsub.s32 0, %v181
  %v183 = vrot.slane %v172, %v182
  %v184 = vlaneseq
  %v185 = vshrl.u32 %v184, 7
  %v186 = vsub.s32 0, %v185
  %v187 = vrot.slane %v179, %v186
  %192 = vrot.lane.b32.xlu0 %v34, 16
  %v193 = vpop.permute.xlu0 %192
  %194 = vrot.lane.b32.xlu0 %v35, 16
  %v195 = vpop.permute.xlu0 %194
  %v198 = vadd.f32 %v183, %v193
  %v199 = vadd.f32 %v187, %v195
  %v200 = vtanh.pop %v198
  %v201 = vtanh.pop %v199
  %v203 = vlaneseq
  %v204 = vshrl.u32 %v203, 7
  %v205 = vsub.s32 0, %v204
  %v206 = vrot.slane %v36, %v205
  %207 = vrot.lane.b32.xlu0 %v206, 16
  %v208 = vpop.permute.xlu0 %207
  %v210 = vmul.f32 %v200, %v208
  %v211 = vmul.f32 %v201, %v208
  %214 = vrot.lane.b32.xlu0 %v210, 112
  %v215 = vpop.permute.xlu0 %214
  %216 = vrot.lane.b32.xlu0 %v211, 112
  %v217 = vpop.permute.xlu0 %216
  %vm220 = vcmask 261120
  %v221 = vsel %vm220, %v215, 0.0
  %222 = vadd.xlane.f32.xlu0 %v221
  %v223 = vpop.xlane.xlu0 %222
  %v224 = vsel %vm220, %v217, 0.0
  %225 = vadd.xlane.f32.xlu0 %v224
  %v226 = vpop.xlane.xlu0 %225
  %v229 = vlaneseq
  %v230 = vshrl.u32 %v229, 7
  %v231 = vsub.s32 %v73, %v230
  %v232 = vrot.slane %v223, %v231
  %v233 = vlaneseq
  %v234 = vshrl.u32 %v233, 7
  %v235 = vsub.s32 %v73, %v234
  %v236 = vrot.slane %v226, %v235
  %vm237 = vcmask 1041409
  %v238 = vsel %vm237, %v236, %v232
  %vm240 = vcmask 58368
  %v241 = vsel %vm240, %v238, -inf
  %242 = vmax.xlane.f32.xlu0 %v241
  %v243 = vpop.xlane.xlu0 %242
  %v245 = vlaneseq
  %v246 = vshrl.u32 %v245, 7
  %v247 = vsub.s32 0, %v246
  %v248 = vrot.slane %v243, %v247
  %v249 = vlaneseq
  %v250 = vshrl.u32 %v249, 7
  %v251 = vsub.s32 1, %v250
  %v252 = vrot.slane %v243, %v251
  %v255 = vsub.f32 %v223, %v248
  %v256 = vsub.f32 %v226, %v252
  %v257 = vmul.f32 %v255, 1.442695
  %v258 = vpow.pop %v257
  %v259 = vmul.f32 %v256, 1.442695
  %v260 = vpow.pop %v259
  %263 = vset.pattern.permute.xlu0 0
  %264 = vperm.xlu0 %263, %v258
  %v265 = vpop.permute.xlu0 %264
  %266 = vset.pattern.permute.xlu0 0
  %267 = vperm.xlu0 %266, %v260
  %v268 = vpop.permute.xlu0 %267
  %v269 = vlaneseq
  %v270 = vshrl.u32 %v269, 7
  %v271 = vsub.s32 %v73, %v270
  %v272 = vrot.slane %v265, %v271
  %v273 = vlaneseq
  %v274 = vshrl.u32 %v273, 7
  %v275 = vsub.s32 %v73, %v274
  %v276 = vrot.slane %v268, %v275
  %v277 = vsel %vm237, %v276, %v272
  %v279 = vsel %vm240, %v277, 0.0
  %280 = vadd.xlane.f32.xlu0 %v279
  %v281 = vpop.xlane.xlu0 %280
  %v283 = vlaneseq
  %v284 = vshrl.u32 %v283, 7
  %v285 = vsub.s32 0, %v284
  %v286 = vrot.slane %v281, %v285
  %v287 = vlaneseq
  %v288 = vshrl.u32 %v287, 7
  %v289 = vsub.s32 1, %v288
  %v290 = vrot.slane %v281, %v289
  %v293 = vrcp.pop %v286
  %v294 = vmul.f32 %v258, %v293
  %v295 = vrcp.pop %v290
  %v296 = vmul.f32 %v260, %v295
  %298 = vset.pattern.permute.xlu0 0
  %299 = vperm.xlu0 %298, %v294
  %v300 = vpop.permute.xlu0 %299
  %v301 = vlaneseq
  %v302 = vshrl.u32 %v301, 7
  %v303 = vsub.s32 %v73, %v302
  %v304 = vrot.slane %v300, %v303
  %vm305 = vcmask 64512
  %v306 = vsel %vm305, %v304, 0
  %308 = vmatprep.subr.mxu0 0.0
  %309 = vmatpush1.msra.mxu0 0.0
  %310 = vmatprep.subr.mxu0 0.0
  %311 = vmatpush1.msra.mxu0 0.0
  %312 = vmatprep.subr.mxu0 0.0
  %313 = vmatpush1.msra.mxu0 0.0
  %314 = vmatprep.subr.mxu0 0.0
  %315 = vmatpush1.msra.mxu0 0.0
  %316 = vmatprep.subr.mxu0 0.0
  %317 = vmatpush1.msra.mxu0 0.0
  %318 = vmatprep.subr.mxu0 0.0
  %319 = vmatpush1.msra.mxu0 0.0
  %320 = vmatprep.subr.mxu0 0.0
  %321 = vmatpush1.msra.mxu0 0.0
  %322 = vmatprep.subr.mxu0 0.0
  %323 = vmatpush1.msra.mxu0 0.0
  %324 = vmatprep.subr.mxu0 0.0
  %325 = vmatpush1.msra.mxu0 0.0
  %326 = vmatprep.subr.mxu0 0.0
  %327 = vmatpush1.msra.mxu0 0.0
  %328 = vmatprep.subr.mxu0 0.0
  %329 = vmatpush1.msra.mxu0 0.0
  %330 = vmatprep.subr.mxu0 0.0
  %331 = vmatpush1.msra.mxu0 0.0
  %332 = vmatprep.subr.mxu0 0.0
  %333 = vmatpush1.msra.mxu0 0.0
  %334 = vmatprep.subr.mxu0 0.0
  %335 = vmatpush1.msra.mxu0 0.0
  %336 = vmatprep.subr.mxu0 0.0
  %337 = vmatpush1.msra.mxu0 0.0
  %338 = vmatprep.subr.mxu0 0.0
  %339 = vmatpush1.msra.mxu0 %v32
  %340 = vmatprep.subr.mxu0 0.0
  %341 = vmatpush2.msra.mxu0 0.0
  %342 = vmatprep.subr.mxu0 0.0
  %343 = vmatpush2.msra.mxu0 0.0
  %344 = vmatprep.subr.mxu0 0.0
  %345 = vmatpush2.msra.mxu0 0.0
  %346 = vmatprep.subr.mxu0 0.0
  %347 = vmatpush2.msra.mxu0 0.0
  %348 = vmatprep.subr.mxu0 0.0
  %349 = vmatpush2.msra.mxu0 0.0
  %350 = vmatprep.subr.mxu0 0.0
  %351 = vmatpush2.msra.mxu0 0.0
  %352 = vmatprep.subr.mxu0 0.0
  %353 = vmatpush2.msra.mxu0 0.0
  %354 = vmatprep.subr.mxu0 0.0
  %355 = vmatpush2.msra.mxu0 0.0
  %356 = vmatprep.subr.mxu0 0.0
  %357 = vmatpush2.msra.mxu0 0.0
  %358 = vmatprep.subr.mxu0 0.0
  %359 = vmatpush2.msra.mxu0 0.0
  %360 = vmatprep.subr.mxu0 0.0
  %361 = vmatpush2.msra.mxu0 0.0
  %362 = vmatprep.subr.mxu0 0.0
  %363 = vmatpush2.msra.mxu0 0.0
  %364 = vmatprep.subr.mxu0 0.0
  %365 = vmatpush2.msra.mxu0 0.0
  %366 = vmatprep.subr.mxu0 0.0
  %367 = vmatpush2.msra.mxu0 0.0
  %368 = vmatprep.subr.mxu0 0.0
  %369 = vmatpush2.msra.mxu0 0.0
  %370 = vmatprep.subr.mxu0 0.0
  %371 = vmatpush2.msra.mxu0 0.0
  %372 = vmatprep.mubr.f32.mxu0 0.0
  %373 = vmatmul.mubr.f32.gmra.mxu0 %v306
  %v374 = vpop.f32.mrf.mxu0
  %v375 = vadd.f32 0.0, %v374
  %v376 = vpop.f32.mrf.mxu0
  %377 = vdwg.mxu0
  %379 = vset.pattern.permute.xlu0 0
  %380 = vperm.xlu0 %379, %v296
  %v381 = vpop.permute.xlu0 %380
  %v382 = vlaneseq
  %v383 = vshrl.u32 %v382, 7
  %v384 = vsub.s32 %v73, %v383
  %v385 = vrot.slane %v381, %v384
  %v386 = vsel %vm305, %v385, 0
  %388 = vmatprep.subr.mxu0 0.0
  %389 = vmatpush1.msra.mxu0 0.0
  %390 = vmatprep.subr.mxu0 0.0
  %391 = vmatpush1.msra.mxu0 0.0
  %392 = vmatprep.subr.mxu0 0.0
  %393 = vmatpush1.msra.mxu0 0.0
  %394 = vmatprep.subr.mxu0 0.0
  %395 = vmatpush1.msra.mxu0 0.0
  %396 = vmatprep.subr.mxu0 0.0
  %397 = vmatpush1.msra.mxu0 0.0
  %398 = vmatprep.subr.mxu0 0.0
  %399 = vmatpush1.msra.mxu0 0.0
  %400 = vmatprep.subr.mxu0 0.0
  %401 = vmatpush1.msra.mxu0 0.0
  %402 = vmatprep.subr.mxu0 0.0
  %403 = vmatpush1.msra.mxu0 0.0
  %404 = vmatprep.subr.mxu0 0.0
  %405 = vmatpush1.msra.mxu0 0.0
  %406 = vmatprep.subr.mxu0 0.0
  %407 = vmatpush1.msra.mxu0 0.0
  %408 = vmatprep.subr.mxu0 0.0
  %409 = vmatpush1.msra.mxu0 0.0
  %410 = vmatprep.subr.mxu0 0.0
  %411 = vmatpush1.msra.mxu0 0.0
  %412 = vmatprep.subr.mxu0 0.0
  %413 = vmatpush1.msra.mxu0 0.0
  %414 = vmatprep.subr.mxu0 0.0
  %415 = vmatpush1.msra.mxu0 0.0
  %416 = vmatprep.subr.mxu0 0.0
  %417 = vmatpush1.msra.mxu0 0.0
  %418 = vmatprep.subr.mxu0 0.0
  %419 = vmatpush1.msra.mxu0 %v33
  %420 = vmatprep.subr.mxu0 0.0
  %421 = vmatpush2.msra.mxu0 0.0
  %422 = vmatprep.subr.mxu0 0.0
  %423 = vmatpush2.msra.mxu0 0.0
  %424 = vmatprep.subr.mxu0 0.0
  %425 = vmatpush2.msra.mxu0 0.0
  %426 = vmatprep.subr.mxu0 0.0
  %427 = vmatpush2.msra.mxu0 0.0
  %428 = vmatprep.subr.mxu0 0.0
  %429 = vmatpush2.msra.mxu0 0.0
  %430 = vmatprep.subr.mxu0 0.0
  %431 = vmatpush2.msra.mxu0 0.0
  %432 = vmatprep.subr.mxu0 0.0
  %433 = vmatpush2.msra.mxu0 0.0
  %434 = vmatprep.subr.mxu0 0.0
  %435 = vmatpush2.msra.mxu0 0.0
  %436 = vmatprep.subr.mxu0 0.0
  %437 = vmatpush2.msra.mxu0 0.0
  %438 = vmatprep.subr.mxu0 0.0
  %439 = vmatpush2.msra.mxu0 0.0
  %440 = vmatprep.subr.mxu0 0.0
  %441 = vmatpush2.msra.mxu0 0.0
  %442 = vmatprep.subr.mxu0 0.0
  %443 = vmatpush2.msra.mxu0 0.0
  %444 = vmatprep.subr.mxu0 0.0
  %445 = vmatpush2.msra.mxu0 0.0
  %446 = vmatprep.subr.mxu0 0.0
  %447 = vmatpush2.msra.mxu0 0.0
  %448 = vmatprep.subr.mxu0 0.0
  %449 = vmatpush2.msra.mxu0 0.0
  %450 = vmatprep.subr.mxu0 0.0
  %451 = vmatpush2.msra.mxu0 0.0
  %452 = vmatprep.mubr.f32.mxu0 0.0
  %453 = vmatmul.mubr.f32.gmra.mxu0 %v386
  %v454 = vpop.f32.mrf.mxu0
  %v455 = vadd.f32 0.0, %v454
  %v456 = vpop.f32.mrf.mxu0
  %457 = vdwg.mxu0
  %v460 = vrot.slane %v455, 7
  %v461 = vsel %vm237, %v460, %v375
  %462 = vrot.lane.b32.xlu0 %v461, 16
  %v463 = vpop.permute.xlu0 %462
  %465 = vrot.lane.b32.xlu0 %v71, 48
  %v466 = vpop.permute.xlu0 %465
  %v468 = vsel %vm81, %v154, %v463
  %v469 = vsel %vm83, %v468, %v466
  %v471 = vlaneseq
  %v472 = vshrl.u32 %v471, 7
  %v473 = vsub.s32 0, %v472
  %v474 = vrot.slane %v63, %v473
  %v475 = vlaneseq
  %v476 = vshrl.u32 %v475, 7
  %v477 = vsub.s32 1, %v476
  %v478 = vrot.slane %v63, %v477
  %vm481 = vcmask 654336
  %v483 = vsel %vm481, %v469, 0
  %485 = vmatprep.subr.mxu0 0.0
  %486 = vmatpush1.msra.mxu0 0.0
  %487 = vmatprep.subr.mxu0 0.0
  %488 = vmatpush1.msra.mxu0 0.0
  %489 = vmatprep.subr.mxu0 0.0
  %490 = vmatpush1.msra.mxu0 0.0
  %491 = vmatprep.subr.mxu0 0.0
  %492 = vmatpush1.msra.mxu0 0.0
  %493 = vmatprep.subr.mxu0 0.0
  %494 = vmatpush1.msra.mxu0 0.0
  %495 = vmatprep.subr.mxu0 0.0
  %496 = vmatpush1.msra.mxu0 0.0
  %497 = vmatprep.subr.mxu0 %v62
  %498 = vmatpush1.msra.mxu0 %v61
  %499 = vmatprep.subr.mxu0 %v60
  %500 = vmatpush1.msra.mxu0 %v59
  %501 = vmatprep.subr.mxu0 %v58
  %502 = vmatpush1.msra.mxu0 %v57
  %503 = vmatprep.subr.mxu0 %v56
  %504 = vmatpush1.msra.mxu0 %v55
  %505 = vmatprep.subr.mxu0 %v54
  %506 = vmatpush1.msra.mxu0 %v53
  %507 = vmatprep.subr.mxu0 %v52
  %508 = vmatpush1.msra.mxu0 %v51
  %509 = vmatprep.subr.mxu0 %v50
  %510 = vmatpush1.msra.mxu0 %v49
  %511 = vmatprep.subr.mxu0 %v48
  %512 = vmatpush1.msra.mxu0 %v47
  %513 = vmatprep.subr.mxu0 %v46
  %514 = vmatpush1.msra.mxu0 %v45
  %515 = vmatprep.subr.mxu0 %v44
  %516 = vmatpush1.msra.mxu0 %v43
  %517 = vmatprep.subr.mxu0 0.0
  %518 = vmatpush2.msra.mxu0 0.0
  %519 = vmatprep.subr.mxu0 0.0
  %520 = vmatpush2.msra.mxu0 0.0
  %521 = vmatprep.subr.mxu0 0.0
  %522 = vmatpush2.msra.mxu0 0.0
  %523 = vmatprep.subr.mxu0 0.0
  %524 = vmatpush2.msra.mxu0 0.0
  %525 = vmatprep.subr.mxu0 0.0
  %526 = vmatpush2.msra.mxu0 0.0
  %527 = vmatprep.subr.mxu0 0.0
  %528 = vmatpush2.msra.mxu0 0.0
  %529 = vmatprep.subr.mxu0 0.0
  %530 = vmatpush2.msra.mxu0 0.0
  %531 = vmatprep.subr.mxu0 0.0
  %532 = vmatpush2.msra.mxu0 0.0
  %533 = vmatprep.subr.mxu0 0.0
  %534 = vmatpush2.msra.mxu0 0.0
  %535 = vmatprep.subr.mxu0 0.0
  %536 = vmatpush2.msra.mxu0 0.0
  %537 = vmatprep.subr.mxu0 0.0
  %538 = vmatpush2.msra.mxu0 0.0
  %539 = vmatprep.subr.mxu0 0.0
  %540 = vmatpush2.msra.mxu0 0.0
  %541 = vmatprep.subr.mxu0 0.0
  %542 = vmatpush2.msra.mxu0 0.0
  %543 = vmatprep.subr.mxu0 0.0
  %544 = vmatpush2.msra.mxu0 0.0
  %545 = vmatprep.subr.mxu0 0.0
  %546 = vmatpush2.msra.mxu0 0.0
  %547 = vmatprep.subr.mxu0 0.0
  %548 = vmatpush2.msra.mxu0 0.0
  %549 = vmatprep.mubr.f32.mxu0 0.0
  %550 = vmatmul.mubr.f32.gmra.mxu0 %v483
  %v551 = vpop.f32.mrf.mxu0
  %v552 = vadd.f32 %v474, %v551
  %v553 = vpop.f32.mrf.mxu0
  %v554 = vadd.f32 %v478, %v553
  %555 = vdwg.mxu0
  %557 = vrot.lane.b32.xlu0 %v552, 32
  %v558 = vpop.permute.xlu0 %557
  %v560 = vadd.f32 %v552, %v558
  %v561 = vxor.u32 %v560, 2147483648
  %v562 = vmul.f32 %v561, 1.442695
  %v563 = vpow.pop %v562
  %v564 = vadd.f32 %v563, 1.0
  %v565 = vrcp.pop %v564
  %v566 = vmul.f32 1.0, %v565
  %568 = vrot.lane.b32.xlu0 %v554, 32
  %v569 = vpop.permute.xlu0 %568
  %v571 = vadd.f32 %v552, %v569
  %v572 = vxor.u32 %v571, 2147483648
  %v573 = vmul.f32 %v572, 1.442695
  %v574 = vpow.pop %v573
  %v575 = vadd.f32 %v574, 1.0
  %v576 = vrcp.pop %v575
  %v577 = vmul.f32 1.0, %v576
  %578 = vrot.lane.b32.xlu0 %v554, 96
  %v579 = vpop.permute.xlu0 %578
  %v581 = vmul.f32 %v566, %v579
  %583 = vrot.lane.b32.xlu0 %v581, 64
  %v584 = vpop.permute.xlu0 %583
  %v586 = vadd.f32 %v552, %v584
  %v587 = vtanh.pop %v586
  %v588 = vsub.f32 1.0, %v577
  %590 = vrot.lane.b32.xlu0 %v587, 96
  %v591 = vpop.permute.xlu0 %590
  %v593 = vmul.f32 %v588, %v591
  %594 = vrot.lane.b32.xlu0 %v71, 32
  %v595 = vpop.permute.xlu0 %594
  %v597 = vmul.f32 %v577, %v595
  %v598 = vadd.f32 %v593, %v597
  %v600 = vlaneseq
  %v601 = vshrl.u32 %v600, 7
  %v602 = vsub.s32 0, %v601
  %v603 = vrot.slane %v68, %v602
  %606 = vrot.lane.b32.xlu0 %v598, 96
  %v607 = vpop.permute.xlu0 %606
  %v608 = vsel %vm220, %v607, 0
  %610 = vmatprep.subr.mxu0 0.0
  %611 = vmatpush1.msra.mxu0 0.0
  %612 = vmatprep.subr.mxu0 0.0
  %613 = vmatpush1.msra.mxu0 0.0
  %614 = vmatprep.subr.mxu0 0.0
  %615 = vmatpush1.msra.mxu0 0.0
  %616 = vmatprep.subr.mxu0 0.0
  %617 = vmatpush1.msra.mxu0 0.0
  %618 = vmatprep.subr.mxu0 0.0
  %619 = vmatpush1.msra.mxu0 0.0
  %620 = vmatprep.subr.mxu0 0.0
  %621 = vmatpush1.msra.mxu0 0.0
  %622 = vmatprep.subr.mxu0 0.0
  %623 = vmatpush1.msra.mxu0 0.0
  %624 = vmatprep.subr.mxu0 0.0
  %625 = vmatpush1.msra.mxu0 0.0
  %626 = vmatprep.subr.mxu0 0.0
  %627 = vmatpush1.msra.mxu0 0.0
  %628 = vmatprep.subr.mxu0 0.0
  %629 = vmatpush1.msra.mxu0 0.0
  %630 = vmatprep.subr.mxu0 0.0
  %631 = vmatpush1.msra.mxu0 0.0
  %632 = vmatprep.subr.mxu0 0.0
  %633 = vmatpush1.msra.mxu0 0.0
  %634 = vmatprep.subr.mxu0 0.0
  %635 = vmatpush1.msra.mxu0 %v67
  %636 = vmatprep.subr.mxu0 0.0
  %637 = vmatpush1.msra.mxu0 %v66
  %638 = vmatprep.subr.mxu0 0.0
  %639 = vmatpush1.msra.mxu0 %v65
  %640 = vmatprep.subr.mxu0 0.0
  %641 = vmatpush1.msra.mxu0 %v64
  %642 = vmatprep.subr.mxu0 0.0
  %643 = vmatpush2.msra.mxu0 0.0
  %644 = vmatprep.subr.mxu0 0.0
  %645 = vmatpush2.msra.mxu0 0.0
  %646 = vmatprep.subr.mxu0 0.0
  %647 = vmatpush2.msra.mxu0 0.0
  %648 = vmatprep.subr.mxu0 0.0
  %649 = vmatpush2.msra.mxu0 0.0
  %650 = vmatprep.subr.mxu0 0.0
  %651 = vmatpush2.msra.mxu0 0.0
  %652 = vmatprep.subr.mxu0 0.0
  %653 = vmatpush2.msra.mxu0 0.0
  %654 = vmatprep.subr.mxu0 0.0
  %655 = vmatpush2.msra.mxu0 0.0
  %656 = vmatprep.subr.mxu0 0.0
  %657 = vmatpush2.msra.mxu0 0.0
  %658 = vmatprep.subr.mxu0 0.0
  %659 = vmatpush2.msra.mxu0 0.0
  %660 = vmatprep.subr.mxu0 0.0
  %661 = vmatpush2.msra.mxu0 0.0
  %662 = vmatprep.subr.mxu0 0.0
  %663 = vmatpush2.msra.mxu0 0.0
  %664 = vmatprep.subr.mxu0 0.0
  %665 = vmatpush2.msra.mxu0 0.0
  %666 = vmatprep.subr.mxu0 0.0
  %667 = vmatpush2.msra.mxu0 0.0
  %668 = vmatprep.subr.mxu0 0.0
  %669 = vmatpush2.msra.mxu0 0.0
  %670 = vmatprep.subr.mxu0 0.0
  %671 = vmatpush2.msra.mxu0 0.0
  %672 = vmatprep.subr.mxu0 0.0
  %673 = vmatpush2.msra.mxu0 0.0
  %674 = vmatprep.mubr.f32.mxu0 0.0
  %675 = vmatmul.mubr.f32.gmra.mxu0 %v608
  %v676 = vpop.f32.mrf.mxu0
  %v677 = vadd.f32 %v603, %v676
  %v678 = vpop.f32.mrf.mxu0
  %679 = vdwg.mxu0
  %vm680 = vcmask 123904
  %681 = vst.msk [vmem:[%s9] sm:$0x3] %vm680, %v677
  %v682 = vadd.s32 %v73, 4294967280
  %v683 = vlaneseq
  %v684 = vshrl.u32 %v683, 7
  %v685 = vsub.s32 %v682, %v684
  %v686 = vrot.slane %v300, %v685
  %v687 = vlaneseq
  %v688 = vshrl.u32 %v687, 7
  %v689 = vsub.s32 %v682, %v688
  %v690 = vrot.slane %v381, %v689
  %v691 = vsel %vm237, %v690, %v686
  %vm693 = vcmask 189568
  %694 = vst.msk [vmem:[%s9] sm:$0x3] %vm693, %v691
  %v695 = vsel %vm680, %v677, -inf
  %696 = vmax.xlane.f32.xlu0 %v695
  %v697 = vpop.xlane.xlu0 %696
  %vm698 = vcmp.eq.f32.partialorder %v677, %v697
  %v699 = vsel %vm698, %v73, 16
  %v700 = vsel %vm680, %v699, 2147483647
  %v701 = vand.u32 %v700, 65535
  %v702 = vshra.s32 %v700, 16
  %v703 = vcvt.s32.f32 %v701
  %v704 = vcvt.s32.f32 %v702
  %705 = vmin.xlane.f32.xlu0 %v704
  %v706 = vpop.xlane.xlu0 %705
  %vm707 = vcmp.eq.f32.partialorder %v704, %v706
  %v708 = vsel %vm707, %v703, inf
  %709 = vmin.xlane.f32.xlu0 %v708
  %v710 = vpop.xlane.xlu0 %709
  %v711 = vcvt.f32.s32 %v710
  %v712 = vcvt.f32.s32 %v706
  %v713 = vshll.u32 %v712, 16
  %v714 = vadd.s32 %v713, %v711
  %vm715 = vcmp.eq.s32.totalorder %v73, %v714
  %v716 = vsel %vm715, 1, 0
  %v717 = vcvt.s32.f32 %v716
  %718 = vrot.lane.b32.xlu0 %v598, 112
  %v719 = vpop.permute.xlu0 %718
  %v721 = vsel %vm81, %v717, %v719
  %v723 = vsel %vm83, %v721, 0
  %725 = vmatprep.subr.mxu0 0.0
  %726 = vmatpush1.msra.mxu0 0.0
  %727 = vmatprep.subr.mxu0 0.0
  %728 = vmatpush1.msra.mxu0 0.0
  %729 = vmatprep.subr.mxu0 0.0
  %730 = vmatpush1.msra.mxu0 0.0
  %731 = vmatprep.subr.mxu0 0.0
  %732 = vmatpush1.msra.mxu0 0.0
  %733 = vmatprep.subr.mxu0 0.0
  %734 = vmatpush1.msra.mxu0 0.0
  %735 = vmatprep.subr.mxu0 0.0
  %736 = vmatpush1.msra.mxu0 0.0
  %737 = vmatprep.subr.mxu0 0.0
  %738 = vmatpush1.msra.mxu0 0.0
  %739 = vmatprep.subr.mxu0 0.0
  %740 = vmatpush1.msra.mxu0 0.0
  %741 = vmatprep.subr.mxu0 0.0
  %742 = vmatpush1.msra.mxu0 0.0
  %743 = vmatprep.subr.mxu0 0.0
  %744 = vmatpush1.msra.mxu0 0.0
  %745 = vmatprep.subr.mxu0 0.0
  %746 = vmatpush1.msra.mxu0 %v42
  %747 = vmatprep.subr.mxu0 0.0
  %748 = vmatpush1.msra.mxu0 %v41
  %749 = vmatprep.subr.mxu0 0.0
  %750 = vmatpush1.msra.mxu0 %v40
  %751 = vmatprep.subr.mxu0 0.0
  %752 = vmatpush1.msra.mxu0 %v39
  %753 = vmatprep.subr.mxu0 0.0
  %754 = vmatpush1.msra.mxu0 %v38
  %755 = vmatprep.subr.mxu0 0.0
  %756 = vmatpush1.msra.mxu0 %v37
  %757 = vmatprep.subr.mxu0 0.0
  %758 = vmatpush2.msra.mxu0 0.0
  %759 = vmatprep.subr.mxu0 0.0
  %760 = vmatpush2.msra.mxu0 0.0
  %761 = vmatprep.subr.mxu0 0.0
  %762 = vmatpush2.msra.mxu0 0.0
  %763 = vmatprep.subr.mxu0 0.0
  %764 = vmatpush2.msra.mxu0 0.0
  %765 = vmatprep.subr.mxu0 0.0
  %766 = vmatpush2.msra.mxu0 0.0
  %767 = vmatprep.subr.mxu0 0.0
  %768 = vmatpush2.msra.mxu0 0.0
  %769 = vmatprep.subr.mxu0 0.0
  %770 = vmatpush2.msra.mxu0 0.0
  %771 = vmatprep.subr.mxu0 0.0
  %772 = vmatpush2.msra.mxu0 0.0
  %773 = vmatprep.subr.mxu0 0.0
  %774 = vmatpush2.msra.mxu0 0.0
  %775 = vmatprep.subr.mxu0 0.0
  %776 = vmatpush2.msra.mxu0 0.0
  %777 = vmatprep.subr.mxu0 0.0
  %778 = vmatpush2.msra.mxu0 0.0
  %779 = vmatprep.subr.mxu0 0.0
  %780 = vmatpush2.msra.mxu0 0.0
  %781 = vmatprep.subr.mxu0 0.0
  %782 = vmatpush2.msra.mxu0 0.0
  %783 = vmatprep.subr.mxu0 0.0
  %784 = vmatpush2.msra.mxu0 0.0
  %785 = vmatprep.subr.mxu0 0.0
  %786 = vmatpush2.msra.mxu0 0.0
  %787 = vmatprep.subr.mxu0 0.0
  %788 = vmatpush2.msra.mxu0 0.0
  %789 = vmatprep.mubr.f32.mxu0 0.0
  %790 = vmatmul.mubr.f32.gmra.mxu0 %v723
  %v791 = vpop.f32.mrf.mxu0
  %v792 = vadd.f32 0.0, %v791
  %v793 = vpop.f32.mrf.mxu0
  %794 = vdwg.mxu0
  %v797 = vunpack.c.l.s4 1966171168
  %v798 = vunpack.c.0.s8 %v797
  %v799 = vlaneseq
  %v800 = vshrl.u32 %v799, 7
  %v801 = vsub.s32 %v798, %v800
  %v802 = vrot.slane %v792, %v801
  %v803 = vcombine.high %v802, %v802
  %v805 = vunpack.c.l.s4 1966171168
  %v806 = vunpack.c.0.s8 %v805
  %v807 = vlaneseq
  %v808 = vshrl.u32 %v807, 7
  %v809 = vsub.s32 %v806, %v808
  %v810 = vrot.slane %v802, %v809
  %v812 = vunpack.c.l.s4 1966171168
  %v813 = vunpack.c.0.s8 %v812
  %v814 = vlaneseq
  %v815 = vshrl.u32 %v814, 7
  %v816 = vsub.s32 %v813, %v815
  %v817 = vrot.slane %v803, %v816
  %v818 = vlaneseq
  %v819 = vshrl.u32 %v818, 7
  %v820 = vsub.s32 0, %v819
  %v821 = vrot.slane %v810, %v820
  %v822 = vlaneseq
  %v823 = vshrl.u32 %v822, 7
  %v824 = vsub.s32 0, %v823
  %v825 = vrot.slane %v817, %v824
  %v828 = vadd.f32 %v821, %v193
  %v829 = vadd.f32 %v825, %v195
  %v830 = vtanh.pop %v828
  %v831 = vtanh.pop %v829
  %v832 = vmul.f32 %v830, %v208
  %v833 = vmul.f32 %v831, %v208
  %836 = vrot.lane.b32.xlu0 %v832, 112
  %v837 = vpop.permute.xlu0 %836
  %838 = vrot.lane.b32.xlu0 %v833, 112
  %v839 = vpop.permute.xlu0 %838
  %v842 = vsel %vm220, %v837, 0.0
  %843 = vadd.xlane.f32.xlu0 %v842
  %v844 = vpop.xlane.xlu0 %843
  %v845 = vsel %vm220, %v839, 0.0
  %846 = vadd.xlane.f32.xlu0 %v845
  %v847 = vpop.xlane.xlu0 %846
  %v850 = vlaneseq
  %v851 = vshrl.u32 %v850, 7
  %v852 = vsub.s32 %v73, %v851
  %v853 = vrot.slane %v844, %v852
  %v854 = vlaneseq
  %v855 = vshrl.u32 %v854, 7
  %v856 = vsub.s32 %v73, %v855
  %v857 = vrot.slane %v847, %v856
  %v858 = vsel %vm237, %v857, %v853
  %v860 = vsel %vm240, %v858, -inf
  %861 = vmax.xlane.f32.xlu0 %v860
  %v862 = vpop.xlane.xlu0 %861
  %v864 = vlaneseq
  %v865 = vshrl.u32 %v864, 7
  %v866 = vsub.s32 0, %v865
  %v867 = vrot.slane %v862, %v866
  %v868 = vlaneseq
  %v869 = vshrl.u32 %v868, 7
  %v870 = vsub.s32 1, %v869
  %v871 = vrot.slane %v862, %v870
  %v874 = vsub.f32 %v844, %v867
  %v875 = vsub.f32 %v847, %v871
  %v876 = vmul.f32 %v874, 1.442695
  %v877 = vpow.pop %v876
  %v878 = vmul.f32 %v875, 1.442695
  %v879 = vpow.pop %v878
  %882 = vset.pattern.permute.xlu0 0
  %883 = vperm.xlu0 %882, %v877
  %v884 = vpop.permute.xlu0 %883
  %885 = vset.pattern.permute.xlu0 0
  %886 = vperm.xlu0 %885, %v879
  %v887 = vpop.permute.xlu0 %886
  %v888 = vlaneseq
  %v889 = vshrl.u32 %v888, 7
  %v890 = vsub.s32 %v73, %v889
  %v891 = vrot.slane %v884, %v890
  %v892 = vlaneseq
  %v893 = vshrl.u32 %v892, 7
  %v894 = vsub.s32 %v73, %v893
  %v895 = vrot.slane %v887, %v894
  %v896 = vsel %vm237, %v895, %v891
  %v898 = vsel %vm240, %v896, 0.0
  %899 = vadd.xlane.f32.xlu0 %v898
  %v900 = vpop.xlane.xlu0 %899
  %v902 = vlaneseq
  %v903 = vshrl.u32 %v902, 7
  %v904 = vsub.s32 0, %v903
  %v905 = vrot.slane %v900, %v904
  %v906 = vlaneseq
  %v907 = vshrl.u32 %v906, 7
  %v908 = vsub.s32 1, %v907
  %v909 = vrot.slane %v900, %v908
  %v912 = vrcp.pop %v905
  %v913 = vmul.f32 %v877, %v912
  %v914 = vrcp.pop %v909
  %v915 = vmul.f32 %v879, %v914
  %917 = vset.pattern.permute.xlu0 0
  %918 = vperm.xlu0 %917, %v913
  %v919 = vpop.permute.xlu0 %918
  %v920 = vlaneseq
  %v921 = vshrl.u32 %v920, 7
  %v922 = vsub.s32 %v73, %v921
  %v923 = vrot.slane %v919, %v922
  %v924 = vsel %vm305, %v923, 0
  %926 = vmatprep.subr.mxu0 0.0
  %927 = vmatpush1.msra.mxu0 0.0
  %928 = vmatprep.subr.mxu0 0.0
  %929 = vmatpush1.msra.mxu0 0.0
  %930 = vmatprep.subr.mxu0 0.0
  %931 = vmatpush1.msra.mxu0 0.0
  %932 = vmatprep.subr.mxu0 0.0
  %933 = vmatpush1.msra.mxu0 0.0
  %934 = vmatprep.subr.mxu0 0.0
  %935 = vmatpush1.msra.mxu0 0.0
  %936 = vmatprep.subr.mxu0 0.0
  %937 = vmatpush1.msra.mxu0 0.0
  %938 = vmatprep.subr.mxu0 0.0
  %939 = vmatpush1.msra.mxu0 0.0
  %940 = vmatprep.subr.mxu0 0.0
  %941 = vmatpush1.msra.mxu0 0.0
  %942 = vmatprep.subr.mxu0 0.0
  %943 = vmatpush1.msra.mxu0 0.0
  %944 = vmatprep.subr.mxu0 0.0
  %945 = vmatpush1.msra.mxu0 0.0
  %946 = vmatprep.subr.mxu0 0.0
  %947 = vmatpush1.msra.mxu0 0.0
  %948 = vmatprep.subr.mxu0 0.0
  %949 = vmatpush1.msra.mxu0 0.0
  %950 = vmatprep.subr.mxu0 0.0
  %951 = vmatpush1.msra.mxu0 0.0
  %952 = vmatprep.subr.mxu0 0.0
  %953 = vmatpush1.msra.mxu0 0.0
  %954 = vmatprep.subr.mxu0 0.0
  %955 = vmatpush1.msra.mxu0 0.0
  %956 = vmatprep.subr.mxu0 0.0
  %957 = vmatpush1.msra.mxu0 %v32
  %958 = vmatprep.subr.mxu0 0.0
  %959 = vmatpush2.msra.mxu0 0.0
  %960 = vmatprep.subr.mxu0 0.0
  %961 = vmatpush2.msra.mxu0 0.0
  %962 = vmatprep.subr.mxu0 0.0
  %963 = vmatpush2.msra.mxu0 0.0
  %964 = vmatprep.subr.mxu0 0.0
  %965 = vmatpush2.msra.mxu0 0.0
  %966 = vmatprep.subr.mxu0 0.0
  %967 = vmatpush2.msra.mxu0 0.0
  %968 = vmatprep.subr.mxu0 0.0
  %969 = vmatpush2.msra.mxu0 0.0
  %970 = vmatprep.subr.mxu0 0.0
  %971 = vmatpush2.msra.mxu0 0.0
  %972 = vmatprep.subr.mxu0 0.0
  %973 = vmatpush2.msra.mxu0 0.0
  %974 = vmatprep.subr.mxu0 0.0
  %975 = vmatpush2.msra.mxu0 0.0
  %976 = vmatprep.subr.mxu0 0.0
  %977 = vmatpush2.msra.mxu0 0.0
  %978 = vmatprep.subr.mxu0 0.0
  %979 = vmatpush2.msra.mxu0 0.0
  %980 = vmatprep.subr.mxu0 0.0
  %981 = vmatpush2.msra.mxu0 0.0
  %982 = vmatprep.subr.mxu0 0.0
  %983 = vmatpush2.msra.mxu0 0.0
  %984 = vmatprep.subr.mxu0 0.0
  %985 = vmatpush2.msra.mxu0 0.0
  %986 = vmatprep.subr.mxu0 0.0
  %987 = vmatpush2.msra.mxu0 0.0
  %988 = vmatprep.subr.mxu0 0.0
  %989 = vmatpush2.msra.mxu0 0.0
  %990 = vmatprep.mubr.f32.mxu0 0.0
  %991 = vmatmul.mubr.f32.gmra.mxu0 %v924
  %v992 = vpop.f32.mrf.mxu0
  %v993 = vadd.f32 0.0, %v992
  %v994 = vpop.f32.mrf.mxu0
  %995 = vdwg.mxu0
  %997 = vset.pattern.permute.xlu0 0
  %998 = vperm.xlu0 %997, %v915
  %v999 = vpop.permute.xlu0 %998
  %v1000 = vlaneseq
  %v1001 = vshrl.u32 %v1000, 7
  %v1002 = vsub.s32 %v73, %v1001
  %v1003 = vrot.slane %v999, %v1002
  %v1004 = vsel %vm305, %v1003, 0
  %1006 = vmatprep.subr.mxu0 0.0
  %1007 = vmatpush1.msra.mxu0 0.0
  %1008 = vmatprep.subr.mxu0 0.0
  %1009 = vmatpush1.msra.mxu0 0.0
  %1010 = vmatprep.subr.mxu0 0.0
  %1011 = vmatpush1.msra.mxu0 0.0
  %1012 = vmatprep.subr.mxu0 0.0
  %1013 = vmatpush1.msra.mxu0 0.0
  %1014 = vmatprep.subr.mxu0 0.0
  %1015 = vmatpush1.msra.mxu0 0.0
  %1016 = vmatprep.subr.mxu0 0.0
  %1017 = vmatpush1.msra.mxu0 0.0
  %1018 = vmatprep.subr.mxu0 0.0
  %1019 = vmatpush1.msra.mxu0 0.0
  %1020 = vmatprep.subr.mxu0 0.0
  %1021 = vmatpush1.msra.mxu0 0.0
  %1022 = vmatprep.subr.mxu0 0.0
  %1023 = vmatpush1.msra.mxu0 0.0
  %1024 = vmatprep.subr.mxu0 0.0
  %1025 = vmatpush1.msra.mxu0 0.0
  %1026 = vmatprep.subr.mxu0 0.0
  %1027 = vmatpush1.msra.mxu0 0.0
  %1028 = vmatprep.subr.mxu0 0.0
  %1029 = vmatpush1.msra.mxu0 0.0
  %1030 = vmatprep.subr.mxu0 0.0
  %1031 = vmatpush1.msra.mxu0 0.0
  %1032 = vmatprep.subr.mxu0 0.0
  %1033 = vmatpush1.msra.mxu0 0.0
  %1034 = vmatprep.subr.mxu0 0.0
  %1035 = vmatpush1.msra.mxu0 0.0
  %1036 = vmatprep.subr.mxu0 0.0
  %1037 = vmatpush1.msra.mxu0 %v33
  %1038 = vmatprep.subr.mxu0 0.0
  %1039 = vmatpush2.msra.mxu0 0.0
  %1040 = vmatprep.subr.mxu0 0.0
  %1041 = vmatpush2.msra.mxu0 0.0
  %1042 = vmatprep.subr.mxu0 0.0
  %1043 = vmatpush2.msra.mxu0 0.0
  %1044 = vmatprep.subr.mxu0 0.0
  %1045 = vmatpush2.msra.mxu0 0.0
  %1046 = vmatprep.subr.mxu0 0.0
  %1047 = vmatpush2.msra.mxu0 0.0
  %1048 = vmatprep.subr.mxu0 0.0
  %1049 = vmatpush2.msra.mxu0 0.0
  %1050 = vmatprep.subr.mxu0 0.0
  %1051 = vmatpush2.msra.mxu0 0.0
  %1052 = vmatprep.subr.mxu0 0.0
  %1053 = vmatpush2.msra.mxu0 0.0
  %1054 = vmatprep.subr.mxu0 0.0
  %1055 = vmatpush2.msra.mxu0 0.0
  %1056 = vmatprep.subr.mxu0 0.0
  %1057 = vmatpush2.msra.mxu0 0.0
  %1058 = vmatprep.subr.mxu0 0.0
  %1059 = vmatpush2.msra.mxu0 0.0
  %1060 = vmatprep.subr.mxu0 0.0
  %1061 = vmatpush2.msra.mxu0 0.0
  %1062 = vmatprep.subr.mxu0 0.0
  %1063 = vmatpush2.msra.mxu0 0.0
  %1064 = vmatprep.subr.mxu0 0.0
  %1065 = vmatpush2.msra.mxu0 0.0
  %1066 = vmatprep.subr.mxu0 0.0
  %1067 = vmatpush2.msra.mxu0 0.0
  %1068 = vmatprep.subr.mxu0 0.0
  %1069 = vmatpush2.msra.mxu0 0.0
  %1070 = vmatprep.mubr.f32.mxu0 0.0
  %1071 = vmatmul.mubr.f32.gmra.mxu0 %v1004
  %v1072 = vpop.f32.mrf.mxu0
  %v1073 = vadd.f32 0.0, %v1072
  %v1074 = vpop.f32.mrf.mxu0
  %1075 = vdwg.mxu0
  %v1078 = vrot.slane %v1073, 7
  %v1079 = vsel %vm237, %v1078, %v993
  %1080 = vrot.lane.b32.xlu0 %v1079, 16
  %v1081 = vpop.permute.xlu0 %1080
  %1083 = vrot.lane.b32.xlu0 %v598, 16
  %v1084 = vpop.permute.xlu0 %1083
  %v1086 = vsel %vm81, %v792, %v1081
  %v1087 = vsel %vm83, %v1086, %v1084
  %v1089 = vsel %vm481, %v1087, 0
  %1091 = vmatprep.subr.mxu0 0.0
  %1092 = vmatpush1.msra.mxu0 0.0
  %1093 = vmatprep.subr.mxu0 0.0
  %1094 = vmatpush1.msra.mxu0 0.0
  %1095 = vmatprep.subr.mxu0 0.0
  %1096 = vmatpush1.msra.mxu0 0.0
  %1097 = vmatprep.subr.mxu0 0.0
  %1098 = vmatpush1.msra.mxu0 0.0
  %1099 = vmatprep.subr.mxu0 0.0
  %1100 = vmatpush1.msra.mxu0 0.0
  %1101 = vmatprep.subr.mxu0 0.0
  %1102 = vmatpush1.msra.mxu0 0.0
  %1103 = vmatprep.subr.mxu0 %v62
  %1104 = vmatpush1.msra.mxu0 %v61
  %1105 = vmatprep.subr.mxu0 %v60
  %1106 = vmatpush1.msra.mxu0 %v59
  %1107 = vmatprep.subr.mxu0 %v58
  %1108 = vmatpush1.msra.mxu0 %v57
  %1109 = vmatprep.subr.mxu0 %v56
  %1110 = vmatpush1.msra.mxu0 %v55
  %1111 = vmatprep.subr.mxu0 %v54
  %1112 = vmatpush1.msra.mxu0 %v53
  %1113 = vmatprep.subr.mxu0 %v52
  %1114 = vmatpush1.msra.mxu0 %v51
  %1115 = vmatprep.subr.mxu0 %v50
  %1116 = vmatpush1.msra.mxu0 %v49
  %1117 = vmatprep.subr.mxu0 %v48
  %1118 = vmatpush1.msra.mxu0 %v47
  %1119 = vmatprep.subr.mxu0 %v46
  %1120 = vmatpush1.msra.mxu0 %v45
  %1121 = vmatprep.subr.mxu0 %v44
  %1122 = vmatpush1.msra.mxu0 %v43
  %1123 = vmatprep.subr.mxu0 0.0
  %1124 = vmatpush2.msra.mxu0 0.0
  %1125 = vmatprep.subr.mxu0 0.0
  %1126 = vmatpush2.msra.mxu0 0.0
  %1127 = vmatprep.subr.mxu0 0.0
  %1128 = vmatpush2.msra.mxu0 0.0
  %1129 = vmatprep.subr.mxu0 0.0
  %1130 = vmatpush2.msra.mxu0 0.0
  %1131 = vmatprep.subr.mxu0 0.0
  %1132 = vmatpush2.msra.mxu0 0.0
  %1133 = vmatprep.subr.mxu0 0.0
  %1134 = vmatpush2.msra.mxu0 0.0
  %1135 = vmatprep.subr.mxu0 0.0
  %1136 = vmatpush2.msra.mxu0 0.0
  %1137 = vmatprep.subr.mxu0 0.0
  %1138 = vmatpush2.msra.mxu0 0.0
  %1139 = vmatprep.subr.mxu0 0.0
  %1140 = vmatpush2.msra.mxu0 0.0
  %1141 = vmatprep.subr.mxu0 0.0
  %1142 = vmatpush2.msra.mxu0 0.0
  %1143 = vmatprep.subr.mxu0 0.0
  %1144 = vmatpush2.msra.mxu0 0.0
  %1145 = vmatprep.subr.mxu0 0.0
  %1146 = vmatpush2.msra.mxu0 0.0
  %1147 = vmatprep.subr.mxu0 0.0
  %1148 = vmatpush2.msra.mxu0 0.0
  %1149 = vmatprep.subr.mxu0 0.0
  %1150 = vmatpush2.msra.mxu0 0.0
  %1151 = vmatprep.subr.mxu0 0.0
  %1152 = vmatpush2.msra.mxu0 0.0
  %1153 = vmatprep.subr.mxu0 0.0
  %1154 = vmatpush2.msra.mxu0 0.0
  %1155 = vmatprep.mubr.f32.mxu0 0.0
  %1156 = vmatmul.mubr.f32.gmra.mxu0 %v1089
  %v1157 = vpop.f32.mrf.mxu0
  %v1158 = vadd.f32 %v474, %v1157
  %v1159 = vpop.f32.mrf.mxu0
  %v1160 = vadd.f32 %v478, %v1159
  %1161 = vdwg.mxu0
  %1163 = vrot.lane.b32.xlu0 %v1158, 32
  %v1164 = vpop.permute.xlu0 %1163
  %v1166 = vadd.f32 %v1158, %v1164
  %v1167 = vxor.u32 %v1166, 2147483648
  %v1168 = vmul.f32 %v1167, 1.442695
  %v1169 = vpow.pop %v1168
  %v1170 = vadd.f32 %v1169, 1.0
  %v1171 = vrcp.pop %v1170
  %v1172 = vmul.f32 1.0, %v1171
  %1174 = vrot.lane.b32.xlu0 %v1160, 32
  %v1175 = vpop.permute.xlu0 %1174
  %v1177 = vadd.f32 %v1158, %v1175
  %v1178 = vxor.u32 %v1177, 2147483648
  %v1179 = vmul.f32 %v1178, 1.442695
  %v1180 = vpow.pop %v1179
  %v1181 = vadd.f32 %v1180, 1.0
  %v1182 = vrcp.pop %v1181
  %v1183 = vmul.f32 1.0, %v1182
  %1184 = vrot.lane.b32.xlu0 %v1160, 96
  %v1185 = vpop.permute.xlu0 %1184
  %v1187 = vmul.f32 %v1172, %v1185
  %1189 = vrot.lane.b32.xlu0 %v1187, 64
  %v1190 = vpop.permute.xlu0 %1189
  %v1192 = vadd.f32 %v1158, %v1190
  %v1193 = vtanh.pop %v1192
  %v1194 = vsub.f32 1.0, %v1183
  %1196 = vrot.lane.b32.xlu0 %v1193, 96
  %v1197 = vpop.permute.xlu0 %1196
  %v1199 = vmul.f32 %v1194, %v1197
  %v1200 = vmul.f32 %v1183, %v598
  %v1201 = vadd.f32 %v1199, %v1200
  %1203 = vrot.lane.b32.xlu0 %v1201, 96
  %v1204 = vpop.permute.xlu0 %1203
  %v1205 = vsel %vm220, %v1204, 0
  %1207 = vmatprep.subr.mxu0 0.0
  %1208 = vmatpush1.msra.mxu0 0.0
  %1209 = vmatprep.subr.mxu0 0.0
  %1210 = vmatpush1.msra.mxu0 0.0
  %1211 = vmatprep.subr.mxu0 0.0
  %1212 = vmatpush1.msra.mxu0 0.0
  %1213 = vmatprep.subr.mxu0 0.0
  %1214 = vmatpush1.msra.mxu0 0.0
  %1215 = vmatprep.subr.mxu0 0.0
  %1216 = vmatpush1.msra.mxu0 0.0
  %1217 = vmatprep.subr.mxu0 0.0
  %1218 = vmatpush1.msra.mxu0 0.0
  %1219 = vmatprep.subr.mxu0 0.0
  %1220 = vmatpush1.msra.mxu0 0.0
  %1221 = vmatprep.subr.mxu0 0.0
  %1222 = vmatpush1.msra.mxu0 0.0
  %1223 = vmatprep.subr.mxu0 0.0
  %1224 = vmatpush1.msra.mxu0 0.0
  %1225 = vmatprep.subr.mxu0 0.0
  %1226 = vmatpush1.msra.mxu0 0.0
  %1227 = vmatprep.subr.mxu0 0.0
  %1228 = vmatpush1.msra.mxu0 0.0
  %1229 = vmatprep.subr.mxu0 0.0
  %1230 = vmatpush1.msra.mxu0 0.0
  %1231 = vmatprep.subr.mxu0 0.0
  %1232 = vmatpush1.msra.mxu0 %v67
  %1233 = vmatprep.subr.mxu0 0.0
  %1234 = vmatpush1.msra.mxu0 %v66
  %1235 = vmatprep.subr.mxu0 0.0
  %1236 = vmatpush1.msra.mxu0 %v65
  %1237 = vmatprep.subr.mxu0 0.0
  %1238 = vmatpush1.msra.mxu0 %v64
  %1239 = vmatprep.subr.mxu0 0.0
  %1240 = vmatpush2.msra.mxu0 0.0
  %1241 = vmatprep.subr.mxu0 0.0
  %1242 = vmatpush2.msra.mxu0 0.0
  %1243 = vmatprep.subr.mxu0 0.0
  %1244 = vmatpush2.msra.mxu0 0.0
  %1245 = vmatprep.subr.mxu0 0.0
  %1246 = vmatpush2.msra.mxu0 0.0
  %1247 = vmatprep.subr.mxu0 0.0
  %1248 = vmatpush2.msra.mxu0 0.0
  %1249 = vmatprep.subr.mxu0 0.0
  %1250 = vmatpush2.msra.mxu0 0.0
  %1251 = vmatprep.subr.mxu0 0.0
  %1252 = vmatpush2.msra.mxu0 0.0
  %1253 = vmatprep.subr.mxu0 0.0
  %1254 = vmatpush2.msra.mxu0 0.0
  %1255 = vmatprep.subr.mxu0 0.0
  %1256 = vmatpush2.msra.mxu0 0.0
  %1257 = vmatprep.subr.mxu0 0.0
  %1258 = vmatpush2.msra.mxu0 0.0
  %1259 = vmatprep.subr.mxu0 0.0
  %1260 = vmatpush2.msra.mxu0 0.0
  %1261 = vmatprep.subr.mxu0 0.0
  %1262 = vmatpush2.msra.mxu0 0.0
  %1263 = vmatprep.subr.mxu0 0.0
  %1264 = vmatpush2.msra.mxu0 0.0
  %1265 = vmatprep.subr.mxu0 0.0
  %1266 = vmatpush2.msra.mxu0 0.0
  %1267 = vmatprep.subr.mxu0 0.0
  %1268 = vmatpush2.msra.mxu0 0.0
  %1269 = vmatprep.subr.mxu0 0.0
  %1270 = vmatpush2.msra.mxu0 0.0
  %1271 = vmatprep.mubr.f32.mxu0 0.0
  %1272 = vmatmul.mubr.f32.gmra.mxu0 %v1205
  %v1273 = vpop.f32.mrf.mxu0
  %v1274 = vadd.f32 %v603, %v1273
  %v1275 = vpop.f32.mrf.mxu0
  %1276 = vdwg.mxu0
  %1277 = vst.msk [vmem:[%s9 + $0x2] sm:$0x3] %vm680, %v1274
  %v1278 = vlaneseq
  %v1279 = vshrl.u32 %v1278, 7
  %v1280 = vsub.s32 %v682, %v1279
  %v1281 = vrot.slane %v919, %v1280
  %v1282 = vlaneseq
  %v1283 = vshrl.u32 %v1282, 7
  %v1284 = vsub.s32 %v682, %v1283
  %v1285 = vrot.slane %v999, %v1284
  %v1286 = vsel %vm237, %v1285, %v1281
  %1288 = vst.msk [vmem:[%s9 + $0x2] sm:$0x3] %vm693, %v1286
  %v1289 = vsel %vm680, %v1274, -inf
  %1290 = vmax.xlane.f32.xlu0 %v1289
  %v1291 = vpop.xlane.xlu0 %1290
  %vm1292 = vcmp.eq.f32.partialorder %v1274, %v1291
  %v1293 = vsel %vm1292, %v73, 16
  %v1294 = vsel %vm680, %v1293, 2147483647
  %v1295 = vand.u32 %v1294, 65535
  %v1296 = vshra.s32 %v1294, 16
  %v1297 = vcvt.s32.f32 %v1295
  %v1298 = vcvt.s32.f32 %v1296
  %1299 = vmin.xlane.f32.xlu0 %v1298
  %v1300 = vpop.xlane.xlu0 %1299
  %vm1301 = vcmp.eq.f32.partialorder %v1298, %v1300
  %v1302 = vsel %vm1301, %v1297, inf
  %1303 = vmin.xlane.f32.xlu0 %v1302
  %v1304 = vpop.xlane.xlu0 %1303
  %v1305 = vcvt.f32.s32 %v1304
  %v1306 = vcvt.f32.s32 %v1300
  %v1307 = vshll.u32 %v1306, 16
  %v1308 = vadd.s32 %v1307, %v1305
  %vm1309 = vcmp.eq.s32.totalorder %v73, %v1308
  %v1310 = vsel %vm1309, 1, 0
  %v1311 = vcvt.s32.f32 %v1310
  %1312 = vrot.lane.b32.xlu0 %v1201, 112
  %v1313 = vpop.permute.xlu0 %1312
  %v1315 = vsel %vm81, %v1311, %v1313
  %v1317 = vsel %vm83, %v1315, 0
  %1319 = vmatprep.subr.mxu0 0.0
  %1320 = vmatpush1.msra.mxu0 0.0
  %1321 = vmatprep.subr.mxu0 0.0
  %1322 = vmatpush1.msra.mxu0 0.0
  %1323 = vmatprep.subr.mxu0 0.0
  %1324 = vmatpush1.msra.mxu0 0.0
  %1325 = vmatprep.subr.mxu0 0.0
  %1326 = vmatpush1.msra.mxu0 0.0
  %1327 = vmatprep.subr.mxu0 0.0
  %1328 = vmatpush1.msra.mxu0 0.0
  %1329 = vmatprep.subr.mxu0 0.0
  %1330 = vmatpush1.msra.mxu0 0.0
  %1331 = vmatprep.subr.mxu0 0.0
  %1332 = vmatpush1.msra.mxu0 0.0
  %1333 = vmatprep.subr.mxu0 0.0
  %1334 = vmatpush1.msra.mxu0 0.0
  %1335 = vmatprep.subr.mxu0 0.0
  %1336 = vmatpush1.msra.mxu0 0.0
  %1337 = vmatprep.subr.mxu0 0.0
  %1338 = vmatpush1.msra.mxu0 0.0
  %1339 = vmatprep.subr.mxu0 0.0
  %1340 = vmatpush1.msra.mxu0 %v42
  %1341 = vmatprep.subr.mxu0 0.0
  %1342 = vmatpush1.msra.mxu0 %v41
  %1343 = vmatprep.subr.mxu0 0.0
  %1344 = vmatpush1.msra.mxu0 %v40
  %1345 = vmatprep.subr.mxu0 0.0
  %1346 = vmatpush1.msra.mxu0 %v39
  %1347 = vmatprep.subr.mxu0 0.0
  %1348 = vmatpush1.msra.mxu0 %v38
  %1349 = vmatprep.subr.mxu0 0.0
  %1350 = vmatpush1.msra.mxu0 %v37
  %1351 = vmatprep.subr.mxu0 0.0
  %1352 = vmatpush2.msra.mxu0 0.0
  %1353 = vmatprep.subr.mxu0 0.0
  %1354 = vmatpush2.msra.mxu0 0.0
  %1355 = vmatprep.subr.mxu0 0.0
  %1356 = vmatpush2.msra.mxu0 0.0
  %1357 = vmatprep.subr.mxu0 0.0
  %1358 = vmatpush2.msra.mxu0 0.0
  %1359 = vmatprep.subr.mxu0 0.0
  %1360 = vmatpush2.msra.mxu0 0.0
  %1361 = vmatprep.subr.mxu0 0.0
  %1362 = vmatpush2.msra.mxu0 0.0
  %1363 = vmatprep.subr.mxu0 0.0
  %1364 = vmatpush2.msra.mxu0 0.0
  %1365 = vmatprep.subr.mxu0 0.0
  %1366 = vmatpush2.msra.mxu0 0.0
  %1367 = vmatprep.subr.mxu0 0.0
  %1368 = vmatpush2.msra.mxu0 0.0
  %1369 = vmatprep.subr.mxu0 0.0
  %1370 = vmatpush2.msra.mxu0 0.0
  %1371 = vmatprep.subr.mxu0 0.0
  %1372 = vmatpush2.msra.mxu0 0.0
  %1373 = vmatprep.subr.mxu0 0.0
  %1374 = vmatpush2.msra.mxu0 0.0
  %1375 = vmatprep.subr.mxu0 0.0
  %1376 = vmatpush2.msra.mxu0 0.0
  %1377 = vmatprep.subr.mxu0 0.0
  %1378 = vmatpush2.msra.mxu0 0.0
  %1379 = vmatprep.subr.mxu0 0.0
  %1380 = vmatpush2.msra.mxu0 0.0
  %1381 = vmatprep.subr.mxu0 0.0
  %1382 = vmatpush2.msra.mxu0 0.0
  %1383 = vmatprep.mubr.f32.mxu0 0.0
  %1384 = vmatmul.mubr.f32.gmra.mxu0 %v1317
  %v1385 = vpop.f32.mrf.mxu0
  %v1386 = vadd.f32 0.0, %v1385
  %v1387 = vpop.f32.mrf.mxu0
  %1388 = vdwg.mxu0
  %v1391 = vunpack.c.l.s4 1966171168
  %v1392 = vunpack.c.0.s8 %v1391
  %v1393 = vlaneseq
  %v1394 = vshrl.u32 %v1393, 7
  %v1395 = vsub.s32 %v1392, %v1394
  %v1396 = vrot.slane %v1386, %v1395
  %v1397 = vcombine.high %v1396, %v1396
  %v1399 = vunpack.c.l.s4 1966171168
  %v1400 = vunpack.c.0.s8 %v1399
  %v1401 = vlaneseq
  %v1402 = vshrl.u32 %v1401, 7
  %v1403 = vsub.s32 %v1400, %v1402
  %v1404 = vrot.slane %v1396, %v1403
  %v1406 = vunpack.c.l.s4 1966171168
  %v1407 = vunpack.c.0.s8 %v1406
  %v1408 = vlaneseq
  %v1409 = vshrl.u32 %v1408, 7
  %v1410 = vsub.s32 %v1407, %v1409
  %v1411 = vrot.slane %v1397, %v1410
  %v1412 = vlaneseq
  %v1413 = vshrl.u32 %v1412, 7
  %v1414 = vsub.s32 0, %v1413
  %v1415 = vrot.slane %v1404, %v1414
  %v1416 = vlaneseq
  %v1417 = vshrl.u32 %v1416, 7
  %v1418 = vsub.s32 0, %v1417
  %v1419 = vrot.slane %v1411, %v1418
  %v1422 = vadd.f32 %v1415, %v193
  %v1423 = vadd.f32 %v1419, %v195
  %v1424 = vtanh.pop %v1422
  %v1425 = vtanh.pop %v1423
  %v1426 = vmul.f32 %v1424, %v208
  %v1427 = vmul.f32 %v1425, %v208
  %1430 = vrot.lane.b32.xlu0 %v1426, 112
  %v1431 = vpop.permute.xlu0 %1430
  %1432 = vrot.lane.b32.xlu0 %v1427, 112
  %v1433 = vpop.permute.xlu0 %1432
  %v1436 = vsel %vm220, %v1431, 0.0
  %1437 = vadd.xlane.f32.xlu0 %v1436
  %v1438 = vpop.xlane.xlu0 %1437
  %v1439 = vsel %vm220, %v1433, 0.0
  %1440 = vadd.xlane.f32.xlu0 %v1439
  %v1441 = vpop.xlane.xlu0 %1440
  %v1444 = vlaneseq
  %v1445 = vshrl.u32 %v1444, 7
  %v1446 = vsub.s32 %v73, %v1445
  %v1447 = vrot.slane %v1438, %v1446
  %v1448 = vlaneseq
  %v1449 = vshrl.u32 %v1448, 7
  %v1450 = vsub.s32 %v73, %v1449
  %v1451 = vrot.slane %v1441, %v1450
  %v1452 = vsel %vm237, %v1451, %v1447
  %v1454 = vsel %vm240, %v1452, -inf
  %1455 = vmax.xlane.f32.xlu0 %v1454
  %v1456 = vpop.xlane.xlu0 %1455
  %v1458 = vlaneseq
  %v1459 = vshrl.u32 %v1458, 7
  %v1460 = vsub.s32 0, %v1459
  %v1461 = vrot.slane %v1456, %v1460
  %v1462 = vlaneseq
  %v1463 = vshrl.u32 %v1462, 7
  %v1464 = vsub.s32 1, %v1463
  %v1465 = vrot.slane %v1456, %v1464
  %v1468 = vsub.f32 %v1438, %v1461
  %v1469 = vsub.f32 %v1441, %v1465
  %v1470 = vmul.f32 %v1468, 1.442695
  %v1471 = vpow.pop %v1470
  %v1472 = vmul.f32 %v1469, 1.442695
  %v1473 = vpow.pop %v1472
  %1476 = vset.pattern.permute.xlu0 0
  %1477 = vperm.xlu0 %1476, %v1471
  %v1478 = vpop.permute.xlu0 %1477
  %1479 = vset.pattern.permute.xlu0 0
  %1480 = vperm.xlu0 %1479, %v1473
  %v1481 = vpop.permute.xlu0 %1480
  %v1482 = vlaneseq
  %v1483 = vshrl.u32 %v1482, 7
  %v1484 = vsub.s32 %v73, %v1483
  %v1485 = vrot.slane %v1478, %v1484
  %v1486 = vlaneseq
  %v1487 = vshrl.u32 %v1486, 7
  %v1488 = vsub.s32 %v73, %v1487
  %v1489 = vrot.slane %v1481, %v1488
  %v1490 = vsel %vm237, %v1489, %v1485
  %v1492 = vsel %vm240, %v1490, 0.0
  %1493 = vadd.xlane.f32.xlu0 %v1492
  %v1494 = vpop.xlane.xlu0 %1493
  %v1496 = vlaneseq
  %v1497 = vshrl.u32 %v1496, 7
  %v1498 = vsub.s32 0, %v1497
  %v1499 = vrot.slane %v1494, %v1498
  %v1500 = vlaneseq
  %v1501 = vshrl.u32 %v1500, 7
  %v1502 = vsub.s32 1, %v1501
  %v1503 = vrot.slane %v1494, %v1502
  %v1506 = vrcp.pop %v1499
  %v1507 = vmul.f32 %v1471, %v1506
  %v1508 = vrcp.pop %v1503
  %v1509 = vmul.f32 %v1473, %v1508
  %1511 = vset.pattern.permute.xlu0 0
  %1512 = vperm.xlu0 %1511, %v1507
  %v1513 = vpop.permute.xlu0 %1512
  %v1514 = vlaneseq
  %v1515 = vshrl.u32 %v1514, 7
  %v1516 = vsub.s32 %v73, %v1515
  %v1517 = vrot.slane %v1513, %v1516
  %v1518 = vsel %vm305, %v1517, 0
  %1520 = vmatprep.subr.mxu0 0.0
  %1521 = vmatpush1.msra.mxu0 0.0
  %1522 = vmatprep.subr.mxu0 0.0
  %1523 = vmatpush1.msra.mxu0 0.0
  %1524 = vmatprep.subr.mxu0 0.0
  %1525 = vmatpush1.msra.mxu0 0.0
  %1526 = vmatprep.subr.mxu0 0.0
  %1527 = vmatpush1.msra.mxu0 0.0
  %1528 = vmatprep.subr.mxu0 0.0
  %1529 = vmatpush1.msra.mxu0 0.0
  %1530 = vmatprep.subr.mxu0 0.0
  %1531 = vmatpush1.msra.mxu0 0.0
  %1532 = vmatprep.subr.mxu0 0.0
  %1533 = vmatpush1.msra.mxu0 0.0
  %1534 = vmatprep.subr.mxu0 0.0
  %1535 = vmatpush1.msra.mxu0 0.0
  %1536 = vmatprep.subr.mxu0 0.0
  %1537 = vmatpush1.msra.mxu0 0.0
  %1538 = vmatprep.subr.mxu0 0.0
  %1539 = vmatpush1.msra.mxu0 0.0
  %1540 = vmatprep.subr.mxu0 0.0
  %1541 = vmatpush1.msra.mxu0 0.0
  %1542 = vmatprep.subr.mxu0 0.0
  %1543 = vmatpush1.msra.mxu0 0.0
  %1544 = vmatprep.subr.mxu0 0.0
  %1545 = vmatpush1.msra.mxu0 0.0
  %1546 = vmatprep.subr.mxu0 0.0
  %1547 = vmatpush1.msra.mxu0 0.0
  %1548 = vmatprep.subr.mxu0 0.0
  %1549 = vmatpush1.msra.mxu0 0.0
  %1550 = vmatprep.subr.mxu0 0.0
  %1551 = vmatpush1.msra.mxu0 %v32
  %1552 = vmatprep.subr.mxu0 0.0
  %1553 = vmatpush2.msra.mxu0 0.0
  %1554 = vmatprep.subr.mxu0 0.0
  %1555 = vmatpush2.msra.mxu0 0.0
  %1556 = vmatprep.subr.mxu0 0.0
  %1557 = vmatpush2.msra.mxu0 0.0
  %1558 = vmatprep.subr.mxu0 0.0
  %1559 = vmatpush2.msra.mxu0 0.0
  %1560 = vmatprep.subr.mxu0 0.0
  %1561 = vmatpush2.msra.mxu0 0.0
  %1562 = vmatprep.subr.mxu0 0.0
  %1563 = vmatpush2.msra.mxu0 0.0
  %1564 = vmatprep.subr.mxu0 0.0
  %1565 = vmatpush2.msra.mxu0 0.0
  %1566 = vmatprep.subr.mxu0 0.0
  %1567 = vmatpush2.msra.mxu0 0.0
  %1568 = vmatprep.subr.mxu0 0.0
  %1569 = vmatpush2.msra.mxu0 0.0
  %1570 = vmatprep.subr.mxu0 0.0
  %1571 = vmatpush2.msra.mxu0 0.0
  %1572 = vmatprep.subr.mxu0 0.0
  %1573 = vmatpush2.msra.mxu0 0.0
  %1574 = vmatprep.subr.mxu0 0.0
  %1575 = vmatpush2.msra.mxu0 0.0
  %1576 = vmatprep.subr.mxu0 0.0
  %1577 = vmatpush2.msra.mxu0 0.0
  %1578 = vmatprep.subr.mxu0 0.0
  %1579 = vmatpush2.msra.mxu0 0.0
  %1580 = vmatprep.subr.mxu0 0.0
  %1581 = vmatpush2.msra.mxu0 0.0
  %1582 = vmatprep.subr.mxu0 0.0
  %1583 = vmatpush2.msra.mxu0 0.0
  %1584 = vmatprep.mubr.f32.mxu0 0.0
  %1585 = vmatmul.mubr.f32.gmra.mxu0 %v1518
  %v1586 = vpop.f32.mrf.mxu0
  %v1587 = vadd.f32 0.0, %v1586
  %v1588 = vpop.f32.mrf.mxu0
  %1589 = vdwg.mxu0
  %1591 = vset.pattern.permute.xlu0 0
  %1592 = vperm.xlu0 %1591, %v1509
  %v1593 = vpop.permute.xlu0 %1592
  %v1594 = vlaneseq
  %v1595 = vshrl.u32 %v1594, 7
  %v1596 = vsub.s32 %v73, %v1595
  %v1597 = vrot.slane %v1593, %v1596
  %v1598 = vsel %vm305, %v1597, 0
  %1600 = vmatprep.subr.mxu0 0.0
  %1601 = vmatpush1.msra.mxu0 0.0
  %1602 = vmatprep.subr.mxu0 0.0
  %1603 = vmatpush1.msra.mxu0 0.0
  %1604 = vmatprep.subr.mxu0 0.0
  %1605 = vmatpush1.msra.mxu0 0.0
  %1606 = vmatprep.subr.mxu0 0.0
  %1607 = vmatpush1.msra.mxu0 0.0
  %1608 = vmatprep.subr.mxu0 0.0
  %1609 = vmatpush1.msra.mxu0 0.0
  %1610 = vmatprep.subr.mxu0 0.0
  %1611 = vmatpush1.msra.mxu0 0.0
  %1612 = vmatprep.subr.mxu0 0.0
  %1613 = vmatpush1.msra.mxu0 0.0
  %1614 = vmatprep.subr.mxu0 0.0
  %1615 = vmatpush1.msra.mxu0 0.0
  %1616 = vmatprep.subr.mxu0 0.0
  %1617 = vmatpush1.msra.mxu0 0.0
  %1618 = vmatprep.subr.mxu0 0.0
  %1619 = vmatpush1.msra.mxu0 0.0
  %1620 = vmatprep.subr.mxu0 0.0
  %1621 = vmatpush1.msra.mxu0 0.0
  %1622 = vmatprep.subr.mxu0 0.0
  %1623 = vmatpush1.msra.mxu0 0.0
  %1624 = vmatprep.subr.mxu0 0.0
  %1625 = vmatpush1.msra.mxu0 0.0
  %1626 = vmatprep.subr.mxu0 0.0
  %1627 = vmatpush1.msra.mxu0 0.0
  %1628 = vmatprep.subr.mxu0 0.0
  %1629 = vmatpush1.msra.mxu0 0.0
  %1630 = vmatprep.subr.mxu0 0.0
  %1631 = vmatpush1.msra.mxu0 %v33
  %1632 = vmatprep.subr.mxu0 0.0
  %1633 = vmatpush2.msra.mxu0 0.0
  %1634 = vmatprep.subr.mxu0 0.0
  %1635 = vmatpush2.msra.mxu0 0.0
  %1636 = vmatprep.subr.mxu0 0.0
  %1637 = vmatpush2.msra.mxu0 0.0
  %1638 = vmatprep.subr.mxu0 0.0
  %1639 = vmatpush2.msra.mxu0 0.0
  %1640 = vmatprep.subr.mxu0 0.0
  %1641 = vmatpush2.msra.mxu0 0.0
  %1642 = vmatprep.subr.mxu0 0.0
  %1643 = vmatpush2.msra.mxu0 0.0
  %1644 = vmatprep.subr.mxu0 0.0
  %1645 = vmatpush2.msra.mxu0 0.0
  %1646 = vmatprep.subr.mxu0 0.0
  %1647 = vmatpush2.msra.mxu0 0.0
  %1648 = vmatprep.subr.mxu0 0.0
  %1649 = vmatpush2.msra.mxu0 0.0
  %1650 = vmatprep.subr.mxu0 0.0
  %1651 = vmatpush2.msra.mxu0 0.0
  %1652 = vmatprep.subr.mxu0 0.0
  %1653 = vmatpush2.msra.mxu0 0.0
  %1654 = vmatprep.subr.mxu0 0.0
  %1655 = vmatpush2.msra.mxu0 0.0
  %1656 = vmatprep.subr.mxu0 0.0
  %1657 = vmatpush2.msra.mxu0 0.0
  %1658 = vmatprep.subr.mxu0 0.0
  %1659 = vmatpush2.msra.mxu0 0.0
  %1660 = vmatprep.subr.mxu0 0.0
  %1661 = vmatpush2.msra.mxu0 0.0
  %1662 = vmatprep.subr.mxu0 0.0
  %1663 = vmatpush2.msra.mxu0 0.0
  %1664 = vmatprep.mubr.f32.mxu0 0.0
  %1665 = vmatmul.mubr.f32.gmra.mxu0 %v1598
  %v1666 = vpop.f32.mrf.mxu0
  %v1667 = vadd.f32 0.0, %v1666
  %v1668 = vpop.f32.mrf.mxu0
  %1669 = vdwg.mxu0
  %v1672 = vrot.slane %v1667, 7
  %v1673 = vsel %vm237, %v1672, %v1587
  %1674 = vrot.lane.b32.xlu0 %v1673, 16
  %v1675 = vpop.permute.xlu0 %1674
  %1677 = vrot.lane.b32.xlu0 %v1201, 16
  %v1678 = vpop.permute.xlu0 %1677
  %v1680 = vsel %vm81, %v1386, %v1675
  %v1681 = vsel %vm83, %v1680, %v1678
  %v1683 = vsel %vm481, %v1681, 0
  %1685 = vmatprep.subr.mxu0 0.0
  %1686 = vmatpush1.msra.mxu0 0.0
  %1687 = vmatprep.subr.mxu0 0.0
  %1688 = vmatpush1.msra.mxu0 0.0
  %1689 = vmatprep.subr.mxu0 0.0
  %1690 = vmatpush1.msra.mxu0 0.0
  %1691 = vmatprep.subr.mxu0 0.0
  %1692 = vmatpush1.msra.mxu0 0.0
  %1693 = vmatprep.subr.mxu0 0.0
  %1694 = vmatpush1.msra.mxu0 0.0
  %1695 = vmatprep.subr.mxu0 0.0
  %1696 = vmatpush1.msra.mxu0 0.0
  %1697 = vmatprep.subr.mxu0 %v62
  %1698 = vmatpush1.msra.mxu0 %v61
  %1699 = vmatprep.subr.mxu0 %v60
  %1700 = vmatpush1.msra.mxu0 %v59
  %1701 = vmatprep.subr.mxu0 %v58
  %1702 = vmatpush1.msra.mxu0 %v57
  %1703 = vmatprep.subr.mxu0 %v56
  %1704 = vmatpush1.msra.mxu0 %v55
  %1705 = vmatprep.subr.mxu0 %v54
  %1706 = vmatpush1.msra.mxu0 %v53
  %1707 = vmatprep.subr.mxu0 %v52
  %1708 = vmatpush1.msra.mxu0 %v51
  %1709 = vmatprep.subr.mxu0 %v50
  %1710 = vmatpush1.msra.mxu0 %v49
  %1711 = vmatprep.subr.mxu0 %v48
  %1712 = vmatpush1.msra.mxu0 %v47
  %1713 = vmatprep.subr.mxu0 %v46
  %1714 = vmatpush1.msra.mxu0 %v45
  %1715 = vmatprep.subr.mxu0 %v44
  %1716 = vmatpush1.msra.mxu0 %v43
  %1717 = vmatprep.subr.mxu0 0.0
  %1718 = vmatpush2.msra.mxu0 0.0
  %1719 = vmatprep.subr.mxu0 0.0
  %1720 = vmatpush2.msra.mxu0 0.0
  %1721 = vmatprep.subr.mxu0 0.0
  %1722 = vmatpush2.msra.mxu0 0.0
  %1723 = vmatprep.subr.mxu0 0.0
  %1724 = vmatpush2.msra.mxu0 0.0
  %1725 = vmatprep.subr.mxu0 0.0
  %1726 = vmatpush2.msra.mxu0 0.0
  %1727 = vmatprep.subr.mxu0 0.0
  %1728 = vmatpush2.msra.mxu0 0.0
  %1729 = vmatprep.subr.mxu0 0.0
  %1730 = vmatpush2.msra.mxu0 0.0
  %1731 = vmatprep.subr.mxu0 0.0
  %1732 = vmatpush2.msra.mxu0 0.0
  %1733 = vmatprep.subr.mxu0 0.0
  %1734 = vmatpush2.msra.mxu0 0.0
  %1735 = vmatprep.subr.mxu0 0.0
  %1736 = vmatpush2.msra.mxu0 0.0
  %1737 = vmatprep.subr.mxu0 0.0
  %1738 = vmatpush2.msra.mxu0 0.0
  %1739 = vmatprep.subr.mxu0 0.0
  %1740 = vmatpush2.msra.mxu0 0.0
  %1741 = vmatprep.subr.mxu0 0.0
  %1742 = vmatpush2.msra.mxu0 0.0
  %1743 = vmatprep.subr.mxu0 0.0
  %1744 = vmatpush2.msra.mxu0 0.0
  %1745 = vmatprep.subr.mxu0 0.0
  %1746 = vmatpush2.msra.mxu0 0.0
  %1747 = vmatprep.subr.mxu0 0.0
  %1748 = vmatpush2.msra.mxu0 0.0
  %1749 = vmatprep.mubr.f32.mxu0 0.0
  %1750 = vmatmul.mubr.f32.gmra.mxu0 %v1683
  %v1751 = vpop.f32.mrf.mxu0
  %v1752 = vadd.f32 %v474, %v1751
  %v1753 = vpop.f32.mrf.mxu0
  %v1754 = vadd.f32 %v478, %v1753
  %1755 = vdwg.mxu0
  %1757 = vrot.lane.b32.xlu0 %v1752, 32
  %v1758 = vpop.permute.xlu0 %1757
  %v1760 = vadd.f32 %v1752, %v1758
  %v1761 = vxor.u32 %v1760, 2147483648
  %v1762 = vmul.f32 %v1761, 1.442695
  %v1763 = vpow.pop %v1762
  %v1764 = vadd.f32 %v1763, 1.0
  %v1765 = vrcp.pop %v1764
  %v1766 = vmul.f32 1.0, %v1765
  %1768 = vrot.lane.b32.xlu0 %v1754, 32
  %v1769 = vpop.permute.xlu0 %1768
  %v1771 = vadd.f32 %v1752, %v1769
  %v1772 = vxor.u32 %v1771, 2147483648
  %v1773 = vmul.f32 %v1772, 1.442695
  %v1774 = vpow.pop %v1773
  %v1775 = vadd.f32 %v1774, 1.0
  %v1776 = vrcp.pop %v1775
  %v1777 = vmul.f32 1.0, %v1776
  %1778 = vrot.lane.b32.xlu0 %v1754, 96
  %v1779 = vpop.permute.xlu0 %1778
  %v1781 = vmul.f32 %v1766, %v1779
  %1783 = vrot.lane.b32.xlu0 %v1781, 64
  %v1784 = vpop.permute.xlu0 %1783
  %v1786 = vadd.f32 %v1752, %v1784
  %v1787 = vtanh.pop %v1786
  %v1788 = vsub.f32 1.0, %v1777
  %1790 = vrot.lane.b32.xlu0 %v1787, 96
  %v1791 = vpop.permute.xlu0 %1790
  %v1793 = vmul.f32 %v1788, %v1791
  %v1794 = vmul.f32 %v1777, %v1201
  %v1795 = vadd.f32 %v1793, %v1794
  %1797 = vrot.lane.b32.xlu0 %v1795, 96
  %v1798 = vpop.permute.xlu0 %1797
  %v1799 = vsel %vm220, %v1798, 0
  %1801 = vmatprep.subr.mxu0 0.0
  %1802 = vmatpush1.msra.mxu0 0.0
  %1803 = vmatprep.subr.mxu0 0.0
  %1804 = vmatpush1.msra.mxu0 0.0
  %1805 = vmatprep.subr.mxu0 0.0
  %1806 = vmatpush1.msra.mxu0 0.0
  %1807 = vmatprep.subr.mxu0 0.0
  %1808 = vmatpush1.msra.mxu0 0.0
  %1809 = vmatprep.subr.mxu0 0.0
  %1810 = vmatpush1.msra.mxu0 0.0
  %1811 = vmatprep.subr.mxu0 0.0
  %1812 = vmatpush1.msra.mxu0 0.0
  %1813 = vmatprep.subr.mxu0 0.0
  %1814 = vmatpush1.msra.mxu0 0.0
  %1815 = vmatprep.subr.mxu0 0.0
  %1816 = vmatpush1.msra.mxu0 0.0
  %1817 = vmatprep.subr.mxu0 0.0
  %1818 = vmatpush1.msra.mxu0 0.0
  %1819 = vmatprep.subr.mxu0 0.0
  %1820 = vmatpush1.msra.mxu0 0.0
  %1821 = vmatprep.subr.mxu0 0.0
  %1822 = vmatpush1.msra.mxu0 0.0
  %1823 = vmatprep.subr.mxu0 0.0
  %1824 = vmatpush1.msra.mxu0 0.0
  %1825 = vmatprep.subr.mxu0 0.0
  %1826 = vmatpush1.msra.mxu0 %v67
  %1827 = vmatprep.subr.mxu0 0.0
  %1828 = vmatpush1.msra.mxu0 %v66
  %1829 = vmatprep.subr.mxu0 0.0
  %1830 = vmatpush1.msra.mxu0 %v65
  %1831 = vmatprep.subr.mxu0 0.0
  %1832 = vmatpush1.msra.mxu0 %v64
  %1833 = vmatprep.subr.mxu0 0.0
  %1834 = vmatpush2.msra.mxu0 0.0
  %1835 = vmatprep.subr.mxu0 0.0
  %1836 = vmatpush2.msra.mxu0 0.0
  %1837 = vmatprep.subr.mxu0 0.0
  %1838 = vmatpush2.msra.mxu0 0.0
  %1839 = vmatprep.subr.mxu0 0.0
  %1840 = vmatpush2.msra.mxu0 0.0
  %1841 = vmatprep.subr.mxu0 0.0
  %1842 = vmatpush2.msra.mxu0 0.0
  %1843 = vmatprep.subr.mxu0 0.0
  %1844 = vmatpush2.msra.mxu0 0.0
  %1845 = vmatprep.subr.mxu0 0.0
  %1846 = vmatpush2.msra.mxu0 0.0
  %1847 = vmatprep.subr.mxu0 0.0
  %1848 = vmatpush2.msra.mxu0 0.0
  %1849 = vmatprep.subr.mxu0 0.0
  %1850 = vmatpush2.msra.mxu0 0.0
  %1851 = vmatprep.subr.mxu0 0.0
  %1852 = vmatpush2.msra.mxu0 0.0
  %1853 = vmatprep.subr.mxu0 0.0
  %1854 = vmatpush2.msra.mxu0 0.0
  %1855 = vmatprep.subr.mxu0 0.0
  %1856 = vmatpush2.msra.mxu0 0.0
  %1857 = vmatprep.subr.mxu0 0.0
  %1858 = vmatpush2.msra.mxu0 0.0
  %1859 = vmatprep.subr.mxu0 0.0
  %1860 = vmatpush2.msra.mxu0 0.0
  %1861 = vmatprep.subr.mxu0 0.0
  %1862 = vmatpush2.msra.mxu0 0.0
  %1863 = vmatprep.subr.mxu0 0.0
  %1864 = vmatpush2.msra.mxu0 0.0
  %1865 = vmatprep.mubr.f32.mxu0 0.0
  %1866 = vmatmul.mubr.f32.gmra.mxu0 %v1799
  %v1867 = vpop.f32.mrf.mxu0
  %v1868 = vadd.f32 %v603, %v1867
  %v1869 = vpop.f32.mrf.mxu0
  %1870 = vdwg.mxu0
  %1871 = vst.msk [vmem:[%s9 + $0x4] sm:$0x3] %vm680, %v1868
  %v1872 = vlaneseq
  %v1873 = vshrl.u32 %v1872, 7
  %v1874 = vsub.s32 %v682, %v1873
  %v1875 = vrot.slane %v1513, %v1874
  %v1876 = vlaneseq
  %v1877 = vshrl.u32 %v1876, 7
  %v1878 = vsub.s32 %v682, %v1877
  %v1879 = vrot.slane %v1593, %v1878
  %v1880 = vsel %vm237, %v1879, %v1875
  %1882 = vst.msk [vmem:[%s9 + $0x4] sm:$0x3] %vm693, %v1880
  %v1883 = vsel %vm680, %v1868, -inf
  %1884 = vmax.xlane.f32.xlu0 %v1883
  %v1885 = vpop.xlane.xlu0 %1884
  %vm1886 = vcmp.eq.f32.partialorder %v1868, %v1885
  %v1887 = vsel %vm1886, %v73, 16
  %v1888 = vsel %vm680, %v1887, 2147483647
  %v1889 = vand.u32 %v1888, 65535
  %v1890 = vshra.s32 %v1888, 16
  %v1891 = vcvt.s32.f32 %v1889
  %v1892 = vcvt.s32.f32 %v1890
  %1893 = vmin.xlane.f32.xlu0 %v1892
  %v1894 = vpop.xlane.xlu0 %1893
  %vm1895 = vcmp.eq.f32.partialorder %v1892, %v1894
  %v1896 = vsel %vm1895, %v1891, inf
  %1897 = vmin.xlane.f32.xlu0 %v1896
  %v1898 = vpop.xlane.xlu0 %1897
  %v1899 = vcvt.f32.s32 %v1898
  %v1900 = vcvt.f32.s32 %v1894
  %v1901 = vshll.u32 %v1900, 16
  %v1902 = vadd.s32 %v1901, %v1899
  %vm1903 = vcmp.eq.s32.totalorder %v73, %v1902
  %v1904 = vsel %vm1903, 1, 0
  %v1905 = vcvt.s32.f32 %v1904
  %1906 = vrot.lane.b32.xlu0 %v1795, 112
  %v1907 = vpop.permute.xlu0 %1906
  %v1909 = vsel %vm81, %v1905, %v1907
  %v1911 = vsel %vm83, %v1909, 0
  %1913 = vmatprep.subr.mxu0 0.0
  %1914 = vmatpush1.msra.mxu0 0.0
  %1915 = vmatprep.subr.mxu0 0.0
  %1916 = vmatpush1.msra.mxu0 0.0
  %1917 = vmatprep.subr.mxu0 0.0
  %1918 = vmatpush1.msra.mxu0 0.0
  %1919 = vmatprep.subr.mxu0 0.0
  %1920 = vmatpush1.msra.mxu0 0.0
  %1921 = vmatprep.subr.mxu0 0.0
  %1922 = vmatpush1.msra.mxu0 0.0
  %1923 = vmatprep.subr.mxu0 0.0
  %1924 = vmatpush1.msra.mxu0 0.0
  %1925 = vmatprep.subr.mxu0 0.0
  %1926 = vmatpush1.msra.mxu0 0.0
  %1927 = vmatprep.subr.mxu0 0.0
  %1928 = vmatpush1.msra.mxu0 0.0
  %1929 = vmatprep.subr.mxu0 0.0
  %1930 = vmatpush1.msra.mxu0 0.0
  %1931 = vmatprep.subr.mxu0 0.0
  %1932 = vmatpush1.msra.mxu0 0.0
  %1933 = vmatprep.subr.mxu0 0.0
  %1934 = vmatpush1.msra.mxu0 %v42
  %1935 = vmatprep.subr.mxu0 0.0
  %1936 = vmatpush1.msra.mxu0 %v41
  %1937 = vmatprep.subr.mxu0 0.0
  %1938 = vmatpush1.msra.mxu0 %v40
  %1939 = vmatprep.subr.mxu0 0.0
  %1940 = vmatpush1.msra.mxu0 %v39
  %1941 = vmatprep.subr.mxu0 0.0
  %1942 = vmatpush1.msra.mxu0 %v38
  %1943 = vmatprep.subr.mxu0 0.0
  %1944 = vmatpush1.msra.mxu0 %v37
  %1945 = vmatprep.subr.mxu0 0.0
  %1946 = vmatpush2.msra.mxu0 0.0
  %1947 = vmatprep.subr.mxu0 0.0
  %1948 = vmatpush2.msra.mxu0 0.0
  %1949 = vmatprep.subr.mxu0 0.0
  %1950 = vmatpush2.msra.mxu0 0.0
  %1951 = vmatprep.subr.mxu0 0.0
  %1952 = vmatpush2.msra.mxu0 0.0
  %1953 = vmatprep.subr.mxu0 0.0
  %1954 = vmatpush2.msra.mxu0 0.0
  %1955 = vmatprep.subr.mxu0 0.0
  %1956 = vmatpush2.msra.mxu0 0.0
  %1957 = vmatprep.subr.mxu0 0.0
  %1958 = vmatpush2.msra.mxu0 0.0
  %1959 = vmatprep.subr.mxu0 0.0
  %1960 = vmatpush2.msra.mxu0 0.0
  %1961 = vmatprep.subr.mxu0 0.0
  %1962 = vmatpush2.msra.mxu0 0.0
  %1963 = vmatprep.subr.mxu0 0.0
  %1964 = vmatpush2.msra.mxu0 0.0
  %1965 = vmatprep.subr.mxu0 0.0
  %1966 = vmatpush2.msra.mxu0 0.0
  %1967 = vmatprep.subr.mxu0 0.0
  %1968 = vmatpush2.msra.mxu0 0.0
  %1969 = vmatprep.subr.mxu0 0.0
  %1970 = vmatpush2.msra.mxu0 0.0
  %1971 = vmatprep.subr.mxu0 0.0
  %1972 = vmatpush2.msra.mxu0 0.0
  %1973 = vmatprep.subr.mxu0 0.0
  %1974 = vmatpush2.msra.mxu0 0.0
  %1975 = vmatprep.subr.mxu0 0.0
  %1976 = vmatpush2.msra.mxu0 0.0
  %1977 = vmatprep.mubr.f32.mxu0 0.0
  %1978 = vmatmul.mubr.f32.gmra.mxu0 %v1911
  %v1979 = vpop.f32.mrf.mxu0
  %v1980 = vadd.f32 0.0, %v1979
  %v1981 = vpop.f32.mrf.mxu0
  %1982 = vdwg.mxu0
  %v1985 = vunpack.c.l.s4 1966171168
  %v1986 = vunpack.c.0.s8 %v1985
  %v1987 = vlaneseq
  %v1988 = vshrl.u32 %v1987, 7
  %v1989 = vsub.s32 %v1986, %v1988
  %v1990 = vrot.slane %v1980, %v1989
  %v1991 = vcombine.high %v1990, %v1990
  %v1993 = vunpack.c.l.s4 1966171168
  %v1994 = vunpack.c.0.s8 %v1993
  %v1995 = vlaneseq
  %v1996 = vshrl.u32 %v1995, 7
  %v1997 = vsub.s32 %v1994, %v1996
  %v1998 = vrot.slane %v1990, %v1997
  %v2000 = vunpack.c.l.s4 1966171168
  %v2001 = vunpack.c.0.s8 %v2000
  %v2002 = vlaneseq
  %v2003 = vshrl.u32 %v2002, 7
  %v2004 = vsub.s32 %v2001, %v2003
  %v2005 = vrot.slane %v1991, %v2004
  %v2006 = vlaneseq
  %v2007 = vshrl.u32 %v2006, 7
  %v2008 = vsub.s32 0, %v2007
  %v2009 = vrot.slane %v1998, %v2008
  %v2010 = vlaneseq
  %v2011 = vshrl.u32 %v2010, 7
  %v2012 = vsub.s32 0, %v2011
  %v2013 = vrot.slane %v2005, %v2012
  %v2016 = vadd.f32 %v2009, %v193
  %v2017 = vadd.f32 %v2013, %v195
  %v2018 = vtanh.pop %v2016
  %v2019 = vtanh.pop %v2017
  %v2020 = vmul.f32 %v2018, %v208
  %v2021 = vmul.f32 %v2019, %v208
  %2024 = vrot.lane.b32.xlu0 %v2020, 112
  %v2025 = vpop.permute.xlu0 %2024
  %2026 = vrot.lane.b32.xlu0 %v2021, 112
  %v2027 = vpop.permute.xlu0 %2026
  %v2030 = vsel %vm220, %v2025, 0.0
  %2031 = vadd.xlane.f32.xlu0 %v2030
  %v2032 = vpop.xlane.xlu0 %2031
  %v2033 = vsel %vm220, %v2027, 0.0
  %2034 = vadd.xlane.f32.xlu0 %v2033
  %v2035 = vpop.xlane.xlu0 %2034
  %v2038 = vlaneseq
  %v2039 = vshrl.u32 %v2038, 7
  %v2040 = vsub.s32 %v73, %v2039
  %v2041 = vrot.slane %v2032, %v2040
  %v2042 = vlaneseq
  %v2043 = vshrl.u32 %v2042, 7
  %v2044 = vsub.s32 %v73, %v2043
  %v2045 = vrot.slane %v2035, %v2044
  %v2046 = vsel %vm237, %v2045, %v2041
  %v2048 = vsel %vm240, %v2046, -inf
  %2049 = vmax.xlane.f32.xlu0 %v2048
  %v2050 = vpop.xlane.xlu0 %2049
  %v2052 = vlaneseq
  %v2053 = vshrl.u32 %v2052, 7
  %v2054 = vsub.s32 0, %v2053
  %v2055 = vrot.slane %v2050, %v2054
  %v2056 = vlaneseq
  %v2057 = vshrl.u32 %v2056, 7
  %v2058 = vsub.s32 1, %v2057
  %v2059 = vrot.slane %v2050, %v2058
  %v2062 = vsub.f32 %v2032, %v2055
  %v2063 = vsub.f32 %v2035, %v2059
  %v2064 = vmul.f32 %v2062, 1.442695
  %v2065 = vpow.pop %v2064
  %v2066 = vmul.f32 %v2063, 1.442695
  %v2067 = vpow.pop %v2066
  %2070 = vset.pattern.permute.xlu0 0
  %2071 = vperm.xlu0 %2070, %v2065
  %v2072 = vpop.permute.xlu0 %2071
  %2073 = vset.pattern.permute.xlu0 0
  %2074 = vperm.xlu0 %2073, %v2067
  %v2075 = vpop.permute.xlu0 %2074
  %v2076 = vlaneseq
  %v2077 = vshrl.u32 %v2076, 7
  %v2078 = vsub.s32 %v73, %v2077
  %v2079 = vrot.slane %v2072, %v2078
  %v2080 = vlaneseq
  %v2081 = vshrl.u32 %v2080, 7
  %v2082 = vsub.s32 %v73, %v2081
  %v2083 = vrot.slane %v2075, %v2082
  %v2084 = vsel %vm237, %v2083, %v2079
  %v2086 = vsel %vm240, %v2084, 0.0
  %2087 = vadd.xlane.f32.xlu0 %v2086
  %v2088 = vpop.xlane.xlu0 %2087
  %v2090 = vlaneseq
  %v2091 = vshrl.u32 %v2090, 7
  %v2092 = vsub.s32 0, %v2091
  %v2093 = vrot.slane %v2088, %v2092
  %v2094 = vlaneseq
  %v2095 = vshrl.u32 %v2094, 7
  %v2096 = vsub.s32 1, %v2095
  %v2097 = vrot.slane %v2088, %v2096
  %v2100 = vrcp.pop %v2093
  %v2101 = vmul.f32 %v2065, %v2100
  %v2102 = vrcp.pop %v2097
  %v2103 = vmul.f32 %v2067, %v2102
  %2105 = vset.pattern.permute.xlu0 0
  %2106 = vperm.xlu0 %2105, %v2101
  %v2107 = vpop.permute.xlu0 %2106
  %v2108 = vlaneseq
  %v2109 = vshrl.u32 %v2108, 7
  %v2110 = vsub.s32 %v73, %v2109
  %v2111 = vrot.slane %v2107, %v2110
  %v2112 = vsel %vm305, %v2111, 0
  %2114 = vmatprep.subr.mxu0 0.0
  %2115 = vmatpush1.msra.mxu0 0.0
  %2116 = vmatprep.subr.mxu0 0.0
  %2117 = vmatpush1.msra.mxu0 0.0
  %2118 = vmatprep.subr.mxu0 0.0
  %2119 = vmatpush1.msra.mxu0 0.0
  %2120 = vmatprep.subr.mxu0 0.0
  %2121 = vmatpush1.msra.mxu0 0.0
  %2122 = vmatprep.subr.mxu0 0.0
  %2123 = vmatpush1.msra.mxu0 0.0
  %2124 = vmatprep.subr.mxu0 0.0
  %2125 = vmatpush1.msra.mxu0 0.0
  %2126 = vmatprep.subr.mxu0 0.0
  %2127 = vmatpush1.msra.mxu0 0.0
  %2128 = vmatprep.subr.mxu0 0.0
  %2129 = vmatpush1.msra.mxu0 0.0
  %2130 = vmatprep.subr.mxu0 0.0
  %2131 = vmatpush1.msra.mxu0 0.0
  %2132 = vmatprep.subr.mxu0 0.0
  %2133 = vmatpush1.msra.mxu0 0.0
  %2134 = vmatprep.subr.mxu0 0.0
  %2135 = vmatpush1.msra.mxu0 0.0
  %2136 = vmatprep.subr.mxu0 0.0
  %2137 = vmatpush1.msra.mxu0 0.0
  %2138 = vmatprep.subr.mxu0 0.0
  %2139 = vmatpush1.msra.mxu0 0.0
  %2140 = vmatprep.subr.mxu0 0.0
  %2141 = vmatpush1.msra.mxu0 0.0
  %2142 = vmatprep.subr.mxu0 0.0
  %2143 = vmatpush1.msra.mxu0 0.0
  %2144 = vmatprep.subr.mxu0 0.0
  %2145 = vmatpush1.msra.mxu0 %v32
  %2146 = vmatprep.subr.mxu0 0.0
  %2147 = vmatpush2.msra.mxu0 0.0
  %2148 = vmatprep.subr.mxu0 0.0
  %2149 = vmatpush2.msra.mxu0 0.0
  %2150 = vmatprep.subr.mxu0 0.0
  %2151 = vmatpush2.msra.mxu0 0.0
  %2152 = vmatprep.subr.mxu0 0.0
  %2153 = vmatpush2.msra.mxu0 0.0
  %2154 = vmatprep.subr.mxu0 0.0
  %2155 = vmatpush2.msra.mxu0 0.0
  %2156 = vmatprep.subr.mxu0 0.0
  %2157 = vmatpush2.msra.mxu0 0.0
  %2158 = vmatprep.subr.mxu0 0.0
  %2159 = vmatpush2.msra.mxu0 0.0
  %2160 = vmatprep.subr.mxu0 0.0
  %2161 = vmatpush2.msra.mxu0 0.0
  %2162 = vmatprep.subr.mxu0 0.0
  %2163 = vmatpush2.msra.mxu0 0.0
  %2164 = vmatprep.subr.mxu0 0.0
  %2165 = vmatpush2.msra.mxu0 0.0
  %2166 = vmatprep.subr.mxu0 0.0
  %2167 = vmatpush2.msra.mxu0 0.0
  %2168 = vmatprep.subr.mxu0 0.0
  %2169 = vmatpush2.msra.mxu0 0.0
  %2170 = vmatprep.subr.mxu0 0.0
  %2171 = vmatpush2.msra.mxu0 0.0
  %2172 = vmatprep.subr.mxu0 0.0
  %2173 = vmatpush2.msra.mxu0 0.0
  %2174 = vmatprep.subr.mxu0 0.0
  %2175 = vmatpush2.msra.mxu0 0.0
  %2176 = vmatprep.subr.mxu0 0.0
  %2177 = vmatpush2.msra.mxu0 0.0
  %2178 = vmatprep.mubr.f32.mxu0 0.0
  %2179 = vmatmul.mubr.f32.gmra.mxu0 %v2112
  %v2180 = vpop.f32.mrf.mxu0
  %v2181 = vadd.f32 0.0, %v2180
  %v2182 = vpop.f32.mrf.mxu0
  %2183 = vdwg.mxu0
  %2185 = vset.pattern.permute.xlu0 0
  %2186 = vperm.xlu0 %2185, %v2103
  %v2187 = vpop.permute.xlu0 %2186
  %v2188 = vlaneseq
  %v2189 = vshrl.u32 %v2188, 7
  %v2190 = vsub.s32 %v73, %v2189
  %v2191 = vrot.slane %v2187, %v2190
  %v2192 = vsel %vm305, %v2191, 0
  %2194 = vmatprep.subr.mxu0 0.0
  %2195 = vmatpush1.msra.mxu0 0.0
  %2196 = vmatprep.subr.mxu0 0.0
  %2197 = vmatpush1.msra.mxu0 0.0
  %2198 = vmatprep.subr.mxu0 0.0
  %2199 = vmatpush1.msra.mxu0 0.0
  %2200 = vmatprep.subr.mxu0 0.0
  %2201 = vmatpush1.msra.mxu0 0.0
  %2202 = vmatprep.subr.mxu0 0.0
  %2203 = vmatpush1.msra.mxu0 0.0
  %2204 = vmatprep.subr.mxu0 0.0
  %2205 = vmatpush1.msra.mxu0 0.0
  %2206 = vmatprep.subr.mxu0 0.0
  %2207 = vmatpush1.msra.mxu0 0.0
  %2208 = vmatprep.subr.mxu0 0.0
  %2209 = vmatpush1.msra.mxu0 0.0
  %2210 = vmatprep.subr.mxu0 0.0
  %2211 = vmatpush1.msra.mxu0 0.0
  %2212 = vmatprep.subr.mxu0 0.0
  %2213 = vmatpush1.msra.mxu0 0.0
  %2214 = vmatprep.subr.mxu0 0.0
  %2215 = vmatpush1.msra.mxu0 0.0
  %2216 = vmatprep.subr.mxu0 0.0
  %2217 = vmatpush1.msra.mxu0 0.0
  %2218 = vmatprep.subr.mxu0 0.0
  %2219 = vmatpush1.msra.mxu0 0.0
  %2220 = vmatprep.subr.mxu0 0.0
  %2221 = vmatpush1.msra.mxu0 0.0
  %2222 = vmatprep.subr.mxu0 0.0
  %2223 = vmatpush1.msra.mxu0 0.0
  %2224 = vmatprep.subr.mxu0 0.0
  %2225 = vmatpush1.msra.mxu0 %v33
  %2226 = vmatprep.subr.mxu0 0.0
  %2227 = vmatpush2.msra.mxu0 0.0
  %2228 = vmatprep.subr.mxu0 0.0
  %2229 = vmatpush2.msra.mxu0 0.0
  %2230 = vmatprep.subr.mxu0 0.0
  %2231 = vmatpush2.msra.mxu0 0.0
  %2232 = vmatprep.subr.mxu0 0.0
  %2233 = vmatpush2.msra.mxu0 0.0
  %2234 = vmatprep.subr.mxu0 0.0
  %2235 = vmatpush2.msra.mxu0 0.0
  %2236 = vmatprep.subr.mxu0 0.0
  %2237 = vmatpush2.msra.mxu0 0.0
  %2238 = vmatprep.subr.mxu0 0.0
  %2239 = vmatpush2.msra.mxu0 0.0
  %2240 = vmatprep.subr.mxu0 0.0
  %2241 = vmatpush2.msra.mxu0 0.0
  %2242 = vmatprep.subr.mxu0 0.0
  %2243 = vmatpush2.msra.mxu0 0.0
  %2244 = vmatprep.subr.mxu0 0.0
  %2245 = vmatpush2.msra.mxu0 0.0
  %2246 = vmatprep.subr.mxu0 0.0
  %2247 = vmatpush2.msra.mxu0 0.0
  %2248 = vmatprep.subr.mxu0 0.0
  %2249 = vmatpush2.msra.mxu0 0.0
  %2250 = vmatprep.subr.mxu0 0.0
  %2251 = vmatpush2.msra.mxu0 0.0
  %2252 = vmatprep.subr.mxu0 0.0
  %2253 = vmatpush2.msra.mxu0 0.0
  %2254 = vmatprep.subr.mxu0 0.0
  %2255 = vmatpush2.msra.mxu0 0.0
  %2256 = vmatprep.subr.mxu0 0.0
  %2257 = vmatpush2.msra.mxu0 0.0
  %2258 = vmatprep.mubr.f32.mxu0 0.0
  %2259 = vmatmul.mubr.f32.gmra.mxu0 %v2192
  %v2260 = vpop.f32.mrf.mxu0
  %v2261 = vadd.f32 0.0, %v2260
  %v2262 = vpop.f32.mrf.mxu0
  %2263 = vdwg.mxu0
  %v2266 = vrot.slane %v2261, 7
  %v2267 = vsel %vm237, %v2266, %v2181
  %2268 = vrot.lane.b32.xlu0 %v2267, 16
  %v2269 = vpop.permute.xlu0 %2268
  %2271 = vrot.lane.b32.xlu0 %v1795, 16
  %v2272 = vpop.permute.xlu0 %2271
  %v2274 = vsel %vm81, %v1980, %v2269
  %v2275 = vsel %vm83, %v2274, %v2272
  %v2277 = vsel %vm481, %v2275, 0
  %2279 = vmatprep.subr.mxu0 0.0
  %2280 = vmatpush1.msra.mxu0 0.0
  %2281 = vmatprep.subr.mxu0 0.0
  %2282 = vmatpush1.msra.mxu0 0.0
  %2283 = vmatprep.subr.mxu0 0.0
  %2284 = vmatpush1.msra.mxu0 0.0
  %2285 = vmatprep.subr.mxu0 0.0
  %2286 = vmatpush1.msra.mxu0 0.0
  %2287 = vmatprep.subr.mxu0 0.0
  %2288 = vmatpush1.msra.mxu0 0.0
  %2289 = vmatprep.subr.mxu0 0.0
  %2290 = vmatpush1.msra.mxu0 0.0
  %2291 = vmatprep.subr.mxu0 %v62
  %2292 = vmatpush1.msra.mxu0 %v61
  %2293 = vmatprep.subr.mxu0 %v60
  %2294 = vmatpush1.msra.mxu0 %v59
  %2295 = vmatprep.subr.mxu0 %v58
  %2296 = vmatpush1.msra.mxu0 %v57
  %2297 = vmatprep.subr.mxu0 %v56
  %2298 = vmatpush1.msra.mxu0 %v55
  %2299 = vmatprep.subr.mxu0 %v54
  %2300 = vmatpush1.msra.mxu0 %v53
  %2301 = vmatprep.subr.mxu0 %v52
  %2302 = vmatpush1.msra.mxu0 %v51
  %2303 = vmatprep.subr.mxu0 %v50
  %2304 = vmatpush1.msra.mxu0 %v49
  %2305 = vmatprep.subr.mxu0 %v48
  %2306 = vmatpush1.msra.mxu0 %v47
  %2307 = vmatprep.subr.mxu0 %v46
  %2308 = vmatpush1.msra.mxu0 %v45
  %2309 = vmatprep.subr.mxu0 %v44
  %2310 = vmatpush1.msra.mxu0 %v43
  %2311 = vmatprep.subr.mxu0 0.0
  %2312 = vmatpush2.msra.mxu0 0.0
  %2313 = vmatprep.subr.mxu0 0.0
  %2314 = vmatpush2.msra.mxu0 0.0
  %2315 = vmatprep.subr.mxu0 0.0
  %2316 = vmatpush2.msra.mxu0 0.0
  %2317 = vmatprep.subr.mxu0 0.0
  %2318 = vmatpush2.msra.mxu0 0.0
  %2319 = vmatprep.subr.mxu0 0.0
  %2320 = vmatpush2.msra.mxu0 0.0
  %2321 = vmatprep.subr.mxu0 0.0
  %2322 = vmatpush2.msra.mxu0 0.0
  %2323 = vmatprep.subr.mxu0 0.0
  %2324 = vmatpush2.msra.mxu0 0.0
  %2325 = vmatprep.subr.mxu0 0.0
  %2326 = vmatpush2.msra.mxu0 0.0
  %2327 = vmatprep.subr.mxu0 0.0
  %2328 = vmatpush2.msra.mxu0 0.0
  %2329 = vmatprep.subr.mxu0 0.0
  %2330 = vmatpush2.msra.mxu0 0.0
  %2331 = vmatprep.subr.mxu0 0.0
  %2332 = vmatpush2.msra.mxu0 0.0
  %2333 = vmatprep.subr.mxu0 0.0
  %2334 = vmatpush2.msra.mxu0 0.0
  %2335 = vmatprep.subr.mxu0 0.0
  %2336 = vmatpush2.msra.mxu0 0.0
  %2337 = vmatprep.subr.mxu0 0.0
  %2338 = vmatpush2.msra.mxu0 0.0
  %2339 = vmatprep.subr.mxu0 0.0
  %2340 = vmatpush2.msra.mxu0 0.0
  %2341 = vmatprep.subr.mxu0 0.0
  %2342 = vmatpush2.msra.mxu0 0.0
  %2343 = vmatprep.mubr.f32.mxu0 0.0
  %2344 = vmatmul.mubr.f32.gmra.mxu0 %v2277
  %v2345 = vpop.f32.mrf.mxu0
  %v2346 = vadd.f32 %v474, %v2345
  %v2347 = vpop.f32.mrf.mxu0
  %v2348 = vadd.f32 %v478, %v2347
  %2349 = vdwg.mxu0
  %2351 = vrot.lane.b32.xlu0 %v2346, 32
  %v2352 = vpop.permute.xlu0 %2351
  %v2354 = vadd.f32 %v2346, %v2352
  %v2355 = vxor.u32 %v2354, 2147483648
  %v2356 = vmul.f32 %v2355, 1.442695
  %v2357 = vpow.pop %v2356
  %v2358 = vadd.f32 %v2357, 1.0
  %v2359 = vrcp.pop %v2358
  %v2360 = vmul.f32 1.0, %v2359
  %2362 = vrot.lane.b32.xlu0 %v2348, 32
  %v2363 = vpop.permute.xlu0 %2362
  %v2365 = vadd.f32 %v2346, %v2363
  %v2366 = vxor.u32 %v2365, 2147483648
  %v2367 = vmul.f32 %v2366, 1.442695
  %v2368 = vpow.pop %v2367
  %v2369 = vadd.f32 %v2368, 1.0
  %v2370 = vrcp.pop %v2369
  %v2371 = vmul.f32 1.0, %v2370
  %2372 = vrot.lane.b32.xlu0 %v2348, 96
  %v2373 = vpop.permute.xlu0 %2372
  %v2375 = vmul.f32 %v2360, %v2373
  %2377 = vrot.lane.b32.xlu0 %v2375, 64
  %v2378 = vpop.permute.xlu0 %2377
  %v2380 = vadd.f32 %v2346, %v2378
  %v2381 = vtanh.pop %v2380
  %v2382 = vsub.f32 1.0, %v2371
  %2384 = vrot.lane.b32.xlu0 %v2381, 96
  %v2385 = vpop.permute.xlu0 %2384
  %v2387 = vmul.f32 %v2382, %v2385
  %v2388 = vmul.f32 %v2371, %v1795
  %v2389 = vadd.f32 %v2387, %v2388
  %2391 = vrot.lane.b32.xlu0 %v2389, 96
  %v2392 = vpop.permute.xlu0 %2391
  %v2393 = vsel %vm220, %v2392, 0
  %2395 = vmatprep.subr.mxu0 0.0
  %2396 = vmatpush1.msra.mxu0 0.0
  %2397 = vmatprep.subr.mxu0 0.0
  %2398 = vmatpush1.msra.mxu0 0.0
  %2399 = vmatprep.subr.mxu0 0.0
  %2400 = vmatpush1.msra.mxu0 0.0
  %2401 = vmatprep.subr.mxu0 0.0
  %2402 = vmatpush1.msra.mxu0 0.0
  %2403 = vmatprep.subr.mxu0 0.0
  %2404 = vmatpush1.msra.mxu0 0.0
  %2405 = vmatprep.subr.mxu0 0.0
  %2406 = vmatpush1.msra.mxu0 0.0
  %2407 = vmatprep.subr.mxu0 0.0
  %2408 = vmatpush1.msra.mxu0 0.0
  %2409 = vmatprep.subr.mxu0 0.0
  %2410 = vmatpush1.msra.mxu0 0.0
  %2411 = vmatprep.subr.mxu0 0.0
  %2412 = vmatpush1.msra.mxu0 0.0
  %2413 = vmatprep.subr.mxu0 0.0
  %2414 = vmatpush1.msra.mxu0 0.0
  %2415 = vmatprep.subr.mxu0 0.0
  %2416 = vmatpush1.msra.mxu0 0.0
  %2417 = vmatprep.subr.mxu0 0.0
  %2418 = vmatpush1.msra.mxu0 0.0
  %2419 = vmatprep.subr.mxu0 0.0
  %2420 = vmatpush1.msra.mxu0 %v67
  %2421 = vmatprep.subr.mxu0 0.0
  %2422 = vmatpush1.msra.mxu0 %v66
  %2423 = vmatprep.subr.mxu0 0.0
  %2424 = vmatpush1.msra.mxu0 %v65
  %2425 = vmatprep.subr.mxu0 0.0
  %2426 = vmatpush1.msra.mxu0 %v64
  %2427 = vmatprep.subr.mxu0 0.0
  %2428 = vmatpush2.msra.mxu0 0.0
  %2429 = vmatprep.subr.mxu0 0.0
  %2430 = vmatpush2.msra.mxu0 0.0
  %2431 = vmatprep.subr.mxu0 0.0
  %2432 = vmatpush2.msra.mxu0 0.0
  %2433 = vmatprep.subr.mxu0 0.0
  %2434 = vmatpush2.msra.mxu0 0.0
  %2435 = vmatprep.subr.mxu0 0.0
  %2436 = vmatpush2.msra.mxu0 0.0
  %2437 = vmatprep.subr.mxu0 0.0
  %2438 = vmatpush2.msra.mxu0 0.0
  %2439 = vmatprep.subr.mxu0 0.0
  %2440 = vmatpush2.msra.mxu0 0.0
  %2441 = vmatprep.subr.mxu0 0.0
  %2442 = vmatpush2.msra.mxu0 0.0
  %2443 = vmatprep.subr.mxu0 0.0
  %2444 = vmatpush2.msra.mxu0 0.0
  %2445 = vmatprep.subr.mxu0 0.0
  %2446 = vmatpush2.msra.mxu0 0.0
  %2447 = vmatprep.subr.mxu0 0.0
  %2448 = vmatpush2.msra.mxu0 0.0
  %2449 = vmatprep.subr.mxu0 0.0
  %2450 = vmatpush2.msra.mxu0 0.0
  %2451 = vmatprep.subr.mxu0 0.0
  %2452 = vmatpush2.msra.mxu0 0.0
  %2453 = vmatprep.subr.mxu0 0.0
  %2454 = vmatpush2.msra.mxu0 0.0
  %2455 = vmatprep.subr.mxu0 0.0
  %2456 = vmatpush2.msra.mxu0 0.0
  %2457 = vmatprep.subr.mxu0 0.0
  %2458 = vmatpush2.msra.mxu0 0.0
  %2459 = vmatprep.mubr.f32.mxu0 0.0
  %2460 = vmatmul.mubr.f32.gmra.mxu0 %v2393
  %v2461 = vpop.f32.mrf.mxu0
  %v2462 = vadd.f32 %v603, %v2461
  %v2463 = vpop.f32.mrf.mxu0
  %2464 = vdwg.mxu0
  %2465 = vst.msk [vmem:[%s9 + $0x6] sm:$0x3] %vm680, %v2462
  %v2466 = vlaneseq
  %v2467 = vshrl.u32 %v2466, 7
  %v2468 = vsub.s32 %v682, %v2467
  %v2469 = vrot.slane %v2107, %v2468
  %v2470 = vlaneseq
  %v2471 = vshrl.u32 %v2470, 7
  %v2472 = vsub.s32 %v682, %v2471
  %v2473 = vrot.slane %v2187, %v2472
  %v2474 = vsel %vm237, %v2473, %v2469
  %2476 = vst.msk [vmem:[%s9 + $0x6] sm:$0x3] %vm693, %v2474
  %v2477 = vsel %vm680, %v2462, -inf
  %2478 = vmax.xlane.f32.xlu0 %v2477
  %v2479 = vpop.xlane.xlu0 %2478
  %vm2480 = vcmp.eq.f32.partialorder %v2462, %v2479
  %v2481 = vsel %vm2480, %v73, 16
  %v2482 = vsel %vm680, %v2481, 2147483647
  %v2483 = vand.u32 %v2482, 65535
  %v2484 = vshra.s32 %v2482, 16
  %v2485 = vcvt.s32.f32 %v2483
  %v2486 = vcvt.s32.f32 %v2484
  %2487 = vmin.xlane.f32.xlu0 %v2486
  %v2488 = vpop.xlane.xlu0 %2487
  %vm2489 = vcmp.eq.f32.partialorder %v2486, %v2488
  %v2490 = vsel %vm2489, %v2485, inf
  %2491 = vmin.xlane.f32.xlu0 %v2490
  %v2492 = vpop.xlane.xlu0 %2491
  %v2493 = vcvt.f32.s32 %v2492
  %v2494 = vcvt.f32.s32 %v2488
  %v2495 = vshll.u32 %v2494, 16
  %v2496 = vadd.s32 %v2495, %v2493
  %vm2497 = vcmp.eq.s32.totalorder %v73, %v2496
  %v2498 = vsel %vm2497, 1, 0
  %v2499 = vcvt.s32.f32 %v2498
  %2500 = vrot.lane.b32.xlu0 %v2389, 112
  %v2501 = vpop.permute.xlu0 %2500
  %v2503 = vsel %vm81, %v2499, %v2501
  %v2505 = vsel %vm83, %v2503, 0
  %2507 = vmatprep.subr.mxu0 0.0
  %2508 = vmatpush1.msra.mxu0 0.0
  %2509 = vmatprep.subr.mxu0 0.0
  %2510 = vmatpush1.msra.mxu0 0.0
  %2511 = vmatprep.subr.mxu0 0.0
  %2512 = vmatpush1.msra.mxu0 0.0
  %2513 = vmatprep.subr.mxu0 0.0
  %2514 = vmatpush1.msra.mxu0 0.0
  %2515 = vmatprep.subr.mxu0 0.0
  %2516 = vmatpush1.msra.mxu0 0.0
  %2517 = vmatprep.subr.mxu0 0.0
  %2518 = vmatpush1.msra.mxu0 0.0
  %2519 = vmatprep.subr.mxu0 0.0
  %2520 = vmatpush1.msra.mxu0 0.0
  %2521 = vmatprep.subr.mxu0 0.0
  %2522 = vmatpush1.msra.mxu0 0.0
  %2523 = vmatprep.subr.mxu0 0.0
  %2524 = vmatpush1.msra.mxu0 0.0
  %2525 = vmatprep.subr.mxu0 0.0
  %2526 = vmatpush1.msra.mxu0 0.0
  %2527 = vmatprep.subr.mxu0 0.0
  %2528 = vmatpush1.msra.mxu0 %v42
  %2529 = vmatprep.subr.mxu0 0.0
  %2530 = vmatpush1.msra.mxu0 %v41
  %2531 = vmatprep.subr.mxu0 0.0
  %2532 = vmatpush1.msra.mxu0 %v40
  %2533 = vmatprep.subr.mxu0 0.0
  %2534 = vmatpush1.msra.mxu0 %v39
  %2535 = vmatprep.subr.mxu0 0.0
  %2536 = vmatpush1.msra.mxu0 %v38
  %2537 = vmatprep.subr.mxu0 0.0
  %2538 = vmatpush1.msra.mxu0 %v37
  %2539 = vmatprep.subr.mxu0 0.0
  %2540 = vmatpush2.msra.mxu0 0.0
  %2541 = vmatprep.subr.mxu0 0.0
  %2542 = vmatpush2.msra.mxu0 0.0
  %2543 = vmatprep.subr.mxu0 0.0
  %2544 = vmatpush2.msra.mxu0 0.0
  %2545 = vmatprep.subr.mxu0 0.0
  %2546 = vmatpush2.msra.mxu0 0.0
  %2547 = vmatprep.subr.mxu0 0.0
  %2548 = vmatpush2.msra.mxu0 0.0
  %2549 = vmatprep.subr.mxu0 0.0
  %2550 = vmatpush2.msra.mxu0 0.0
  %2551 = vmatprep.subr.mxu0 0.0
  %2552 = vmatpush2.msra.mxu0 0.0
  %2553 = vmatprep.subr.mxu0 0.0
  %2554 = vmatpush2.msra.mxu0 0.0
  %2555 = vmatprep.subr.mxu0 0.0
  %2556 = vmatpush2.msra.mxu0 0.0
  %2557 = vmatprep.subr.mxu0 0.0
  %2558 = vmatpush2.msra.mxu0 0.0
  %2559 = vmatprep.subr.mxu0 0.0
  %2560 = vmatpush2.msra.mxu0 0.0
  %2561 = vmatprep.subr.mxu0 0.0
  %2562 = vmatpush2.msra.mxu0 0.0
  %2563 = vmatprep.subr.mxu0 0.0
  %2564 = vmatpush2.msra.mxu0 0.0
  %2565 = vmatprep.subr.mxu0 0.0
  %2566 = vmatpush2.msra.mxu0 0.0
  %2567 = vmatprep.subr.mxu0 0.0
  %2568 = vmatpush2.msra.mxu0 0.0
  %2569 = vmatprep.subr.mxu0 0.0
  %2570 = vmatpush2.msra.mxu0 0.0
  %2571 = vmatprep.mubr.f32.mxu0 0.0
  %2572 = vmatmul.mubr.f32.gmra.mxu0 %v2505
  %v2573 = vpop.f32.mrf.mxu0
  %v2574 = vadd.f32 0.0, %v2573
  %v2575 = vpop.f32.mrf.mxu0
  %2576 = vdwg.mxu0
  %v2579 = vunpack.c.l.s4 1966171168
  %v2580 = vunpack.c.0.s8 %v2579
  %v2581 = vlaneseq
  %v2582 = vshrl.u32 %v2581, 7
  %v2583 = vsub.s32 %v2580, %v2582
  %v2584 = vrot.slane %v2574, %v2583
  %v2585 = vcombine.high %v2584, %v2584
  %v2587 = vunpack.c.l.s4 1966171168
  %v2588 = vunpack.c.0.s8 %v2587
  %v2589 = vlaneseq
  %v2590 = vshrl.u32 %v2589, 7
  %v2591 = vsub.s32 %v2588, %v2590
  %v2592 = vrot.slane %v2584, %v2591
  %v2594 = vunpack.c.l.s4 1966171168
  %v2595 = vunpack.c.0.s8 %v2594
  %v2596 = vlaneseq
  %v2597 = vshrl.u32 %v2596, 7
  %v2598 = vsub.s32 %v2595, %v2597
  %v2599 = vrot.slane %v2585, %v2598
  %v2600 = vlaneseq
  %v2601 = vshrl.u32 %v2600, 7
  %v2602 = vsub.s32 0, %v2601
  %v2603 = vrot.slane %v2592, %v2602
  %v2604 = vlaneseq
  %v2605 = vshrl.u32 %v2604, 7
  %v2606 = vsub.s32 0, %v2605
  %v2607 = vrot.slane %v2599, %v2606
  %v2610 = vadd.f32 %v2603, %v193
  %v2611 = vadd.f32 %v2607, %v195
  %v2612 = vtanh.pop %v2610
  %v2613 = vtanh.pop %v2611
  %v2614 = vmul.f32 %v2612, %v208
  %v2615 = vmul.f32 %v2613, %v208
  %2618 = vrot.lane.b32.xlu0 %v2614, 112
  %v2619 = vpop.permute.xlu0 %2618
  %2620 = vrot.lane.b32.xlu0 %v2615, 112
  %v2621 = vpop.permute.xlu0 %2620
  %v2624 = vsel %vm220, %v2619, 0.0
  %2625 = vadd.xlane.f32.xlu0 %v2624
  %v2626 = vpop.xlane.xlu0 %2625
  %v2627 = vsel %vm220, %v2621, 0.0
  %2628 = vadd.xlane.f32.xlu0 %v2627
  %v2629 = vpop.xlane.xlu0 %2628
  %v2632 = vlaneseq
  %v2633 = vshrl.u32 %v2632, 7
  %v2634 = vsub.s32 %v73, %v2633
  %v2635 = vrot.slane %v2626, %v2634
  %v2636 = vlaneseq
  %v2637 = vshrl.u32 %v2636, 7
  %v2638 = vsub.s32 %v73, %v2637
  %v2639 = vrot.slane %v2629, %v2638
  %v2640 = vsel %vm237, %v2639, %v2635
  %v2642 = vsel %vm240, %v2640, -inf
  %2643 = vmax.xlane.f32.xlu0 %v2642
  %v2644 = vpop.xlane.xlu0 %2643
  %v2646 = vlaneseq
  %v2647 = vshrl.u32 %v2646, 7
  %v2648 = vsub.s32 0, %v2647
  %v2649 = vrot.slane %v2644, %v2648
  %v2650 = vlaneseq
  %v2651 = vshrl.u32 %v2650, 7
  %v2652 = vsub.s32 1, %v2651
  %v2653 = vrot.slane %v2644, %v2652
  %v2656 = vsub.f32 %v2626, %v2649
  %v2657 = vsub.f32 %v2629, %v2653
  %v2658 = vmul.f32 %v2656, 1.442695
  %v2659 = vpow.pop %v2658
  %v2660 = vmul.f32 %v2657, 1.442695
  %v2661 = vpow.pop %v2660
  %2664 = vset.pattern.permute.xlu0 0
  %2665 = vperm.xlu0 %2664, %v2659
  %v2666 = vpop.permute.xlu0 %2665
  %2667 = vset.pattern.permute.xlu0 0
  %2668 = vperm.xlu0 %2667, %v2661
  %v2669 = vpop.permute.xlu0 %2668
  %v2670 = vlaneseq
  %v2671 = vshrl.u32 %v2670, 7
  %v2672 = vsub.s32 %v73, %v2671
  %v2673 = vrot.slane %v2666, %v2672
  %v2674 = vlaneseq
  %v2675 = vshrl.u32 %v2674, 7
  %v2676 = vsub.s32 %v73, %v2675
  %v2677 = vrot.slane %v2669, %v2676
  %v2678 = vsel %vm237, %v2677, %v2673
  %v2680 = vsel %vm240, %v2678, 0.0
  %2681 = vadd.xlane.f32.xlu0 %v2680
  %v2682 = vpop.xlane.xlu0 %2681
  %v2684 = vlaneseq
  %v2685 = vshrl.u32 %v2684, 7
  %v2686 = vsub.s32 0, %v2685
  %v2687 = vrot.slane %v2682, %v2686
  %v2688 = vlaneseq
  %v2689 = vshrl.u32 %v2688, 7
  %v2690 = vsub.s32 1, %v2689
  %v2691 = vrot.slane %v2682, %v2690
  %v2694 = vrcp.pop %v2687
  %v2695 = vmul.f32 %v2659, %v2694
  %v2696 = vrcp.pop %v2691
  %v2697 = vmul.f32 %v2661, %v2696
  %2699 = vset.pattern.permute.xlu0 0
  %2700 = vperm.xlu0 %2699, %v2695
  %v2701 = vpop.permute.xlu0 %2700
  %v2702 = vlaneseq
  %v2703 = vshrl.u32 %v2702, 7
  %v2704 = vsub.s32 %v73, %v2703
  %v2705 = vrot.slane %v2701, %v2704
  %v2706 = vsel %vm305, %v2705, 0
  %2708 = vmatprep.subr.mxu0 0.0
  %2709 = vmatpush1.msra.mxu0 0.0
  %2710 = vmatprep.subr.mxu0 0.0
  %2711 = vmatpush1.msra.mxu0 0.0
  %2712 = vmatprep.subr.mxu0 0.0
  %2713 = vmatpush1.msra.mxu0 0.0
  %2714 = vmatprep.subr.mxu0 0.0
  %2715 = vmatpush1.msra.mxu0 0.0
  %2716 = vmatprep.subr.mxu0 0.0
  %2717 = vmatpush1.msra.mxu0 0.0
  %2718 = vmatprep.subr.mxu0 0.0
  %2719 = vmatpush1.msra.mxu0 0.0
  %2720 = vmatprep.subr.mxu0 0.0
  %2721 = vmatpush1.msra.mxu0 0.0
  %2722 = vmatprep.subr.mxu0 0.0
  %2723 = vmatpush1.msra.mxu0 0.0
  %2724 = vmatprep.subr.mxu0 0.0
  %2725 = vmatpush1.msra.mxu0 0.0
  %2726 = vmatprep.subr.mxu0 0.0
  %2727 = vmatpush1.msra.mxu0 0.0
  %2728 = vmatprep.subr.mxu0 0.0
  %2729 = vmatpush1.msra.mxu0 0.0
  %2730 = vmatprep.subr.mxu0 0.0
  %2731 = vmatpush1.msra.mxu0 0.0
  %2732 = vmatprep.subr.mxu0 0.0
  %2733 = vmatpush1.msra.mxu0 0.0
  %2734 = vmatprep.subr.mxu0 0.0
  %2735 = vmatpush1.msra.mxu0 0.0
  %2736 = vmatprep.subr.mxu0 0.0
  %2737 = vmatpush1.msra.mxu0 0.0
  %2738 = vmatprep.subr.mxu0 0.0
  %2739 = vmatpush1.msra.mxu0 %v32
  %2740 = vmatprep.subr.mxu0 0.0
  %2741 = vmatpush2.msra.mxu0 0.0
  %2742 = vmatprep.subr.mxu0 0.0
  %2743 = vmatpush2.msra.mxu0 0.0
  %2744 = vmatprep.subr.mxu0 0.0
  %2745 = vmatpush2.msra.mxu0 0.0
  %2746 = vmatprep.subr.mxu0 0.0
  %2747 = vmatpush2.msra.mxu0 0.0
  %2748 = vmatprep.subr.mxu0 0.0
  %2749 = vmatpush2.msra.mxu0 0.0
  %2750 = vmatprep.subr.mxu0 0.0
  %2751 = vmatpush2.msra.mxu0 0.0
  %2752 = vmatprep.subr.mxu0 0.0
  %2753 = vmatpush2.msra.mxu0 0.0
  %2754 = vmatprep.subr.mxu0 0.0
  %2755 = vmatpush2.msra.mxu0 0.0
  %2756 = vmatprep.subr.mxu0 0.0
  %2757 = vmatpush2.msra.mxu0 0.0
  %2758 = vmatprep.subr.mxu0 0.0
  %2759 = vmatpush2.msra.mxu0 0.0
  %2760 = vmatprep.subr.mxu0 0.0
  %2761 = vmatpush2.msra.mxu0 0.0
  %2762 = vmatprep.subr.mxu0 0.0
  %2763 = vmatpush2.msra.mxu0 0.0
  %2764 = vmatprep.subr.mxu0 0.0
  %2765 = vmatpush2.msra.mxu0 0.0
  %2766 = vmatprep.subr.mxu0 0.0
  %2767 = vmatpush2.msra.mxu0 0.0
  %2768 = vmatprep.subr.mxu0 0.0
  %2769 = vmatpush2.msra.mxu0 0.0
  %2770 = vmatprep.subr.mxu0 0.0
  %2771 = vmatpush2.msra.mxu0 0.0
  %2772 = vmatprep.mubr.f32.mxu0 0.0
  %2773 = vmatmul.mubr.f32.gmra.mxu0 %v2706
  %v2774 = vpop.f32.mrf.mxu0
  %v2775 = vadd.f32 0.0, %v2774
  %v2776 = vpop.f32.mrf.mxu0
  %2777 = vdwg.mxu0
  %2779 = vset.pattern.permute.xlu0 0
  %2780 = vperm.xlu0 %2779, %v2697
  %v2781 = vpop.permute.xlu0 %2780
  %v2782 = vlaneseq
  %v2783 = vshrl.u32 %v2782, 7
  %v2784 = vsub.s32 %v73, %v2783
  %v2785 = vrot.slane %v2781, %v2784
  %v2786 = vsel %vm305, %v2785, 0
  %2788 = vmatprep.subr.mxu0 0.0
  %2789 = vmatpush1.msra.mxu0 0.0
  %2790 = vmatprep.subr.mxu0 0.0
  %2791 = vmatpush1.msra.mxu0 0.0
  %2792 = vmatprep.subr.mxu0 0.0
  %2793 = vmatpush1.msra.mxu0 0.0
  %2794 = vmatprep.subr.mxu0 0.0
  %2795 = vmatpush1.msra.mxu0 0.0
  %2796 = vmatprep.subr.mxu0 0.0
  %2797 = vmatpush1.msra.mxu0 0.0
  %2798 = vmatprep.subr.mxu0 0.0
  %2799 = vmatpush1.msra.mxu0 0.0
  %2800 = vmatprep.subr.mxu0 0.0
  %2801 = vmatpush1.msra.mxu0 0.0
  %2802 = vmatprep.subr.mxu0 0.0
  %2803 = vmatpush1.msra.mxu0 0.0
  %2804 = vmatprep.subr.mxu0 0.0
  %2805 = vmatpush1.msra.mxu0 0.0
  %2806 = vmatprep.subr.mxu0 0.0
  %2807 = vmatpush1.msra.mxu0 0.0
  %2808 = vmatprep.subr.mxu0 0.0
  %2809 = vmatpush1.msra.mxu0 0.0
  %2810 = vmatprep.subr.mxu0 0.0
  %2811 = vmatpush1.msra.mxu0 0.0
  %2812 = vmatprep.subr.mxu0 0.0
  %2813 = vmatpush1.msra.mxu0 0.0
  %2814 = vmatprep.subr.mxu0 0.0
  %2815 = vmatpush1.msra.mxu0 0.0
  %2816 = vmatprep.subr.mxu0 0.0
  %2817 = vmatpush1.msra.mxu0 0.0
  %2818 = vmatprep.subr.mxu0 0.0
  %2819 = vmatpush1.msra.mxu0 %v33
  %2820 = vmatprep.subr.mxu0 0.0
  %2821 = vmatpush2.msra.mxu0 0.0
  %2822 = vmatprep.subr.mxu0 0.0
  %2823 = vmatpush2.msra.mxu0 0.0
  %2824 = vmatprep.subr.mxu0 0.0
  %2825 = vmatpush2.msra.mxu0 0.0
  %2826 = vmatprep.subr.mxu0 0.0
  %2827 = vmatpush2.msra.mxu0 0.0
  %2828 = vmatprep.subr.mxu0 0.0
  %2829 = vmatpush2.msra.mxu0 0.0
  %2830 = vmatprep.subr.mxu0 0.0
  %2831 = vmatpush2.msra.mxu0 0.0
  %2832 = vmatprep.subr.mxu0 0.0
  %2833 = vmatpush2.msra.mxu0 0.0
  %2834 = vmatprep.subr.mxu0 0.0
  %2835 = vmatpush2.msra.mxu0 0.0
  %2836 = vmatprep.subr.mxu0 0.0
  %2837 = vmatpush2.msra.mxu0 0.0
  %2838 = vmatprep.subr.mxu0 0.0
  %2839 = vmatpush2.msra.mxu0 0.0
  %2840 = vmatprep.subr.mxu0 0.0
  %2841 = vmatpush2.msra.mxu0 0.0
  %2842 = vmatprep.subr.mxu0 0.0
  %2843 = vmatpush2.msra.mxu0 0.0
  %2844 = vmatprep.subr.mxu0 0.0
  %2845 = vmatpush2.msra.mxu0 0.0
  %2846 = vmatprep.subr.mxu0 0.0
  %2847 = vmatpush2.msra.mxu0 0.0
  %2848 = vmatprep.subr.mxu0 0.0
  %2849 = vmatpush2.msra.mxu0 0.0
  %2850 = vmatprep.subr.mxu0 0.0
  %2851 = vmatpush2.msra.mxu0 0.0
  %2852 = vmatprep.mubr.f32.mxu0 0.0
  %2853 = vmatmul.mubr.f32.gmra.mxu0 %v2786
  %v2854 = vpop.f32.mrf.mxu0
  %v2855 = vadd.f32 0.0, %v2854
  %v2856 = vpop.f32.mrf.mxu0
  %2857 = vdwg.mxu0
  %v2860 = vrot.slane %v2855, 7
  %v2861 = vsel %vm237, %v2860, %v2775
  %2862 = vrot.lane.b32.xlu0 %v2861, 16
  %v2863 = vpop.permute.xlu0 %2862
  %2865 = vrot.lane.b32.xlu0 %v2389, 16
  %v2866 = vpop.permute.xlu0 %2865
  %v2868 = vsel %vm81, %v2574, %v2863
  %v2869 = vsel %vm83, %v2868, %v2866
  %v2871 = vsel %vm481, %v2869, 0
  %2873 = vmatprep.subr.mxu0 0.0
  %2874 = vmatpush1.msra.mxu0 0.0
  %2875 = vmatprep.subr.mxu0 0.0
  %2876 = vmatpush1.msra.mxu0 0.0
  %2877 = vmatprep.subr.mxu0 0.0
  %2878 = vmatpush1.msra.mxu0 0.0
  %2879 = vmatprep.subr.mxu0 0.0
  %2880 = vmatpush1.msra.mxu0 0.0
  %2881 = vmatprep.subr.mxu0 0.0
  %2882 = vmatpush1.msra.mxu0 0.0
  %2883 = vmatprep.subr.mxu0 0.0
  %2884 = vmatpush1.msra.mxu0 0.0
  %2885 = vmatprep.subr.mxu0 %v62
  %2886 = vmatpush1.msra.mxu0 %v61
  %2887 = vmatprep.subr.mxu0 %v60
  %2888 = vmatpush1.msra.mxu0 %v59
  %2889 = vmatprep.subr.mxu0 %v58
  %2890 = vmatpush1.msra.mxu0 %v57
  %2891 = vmatprep.subr.mxu0 %v56
  %2892 = vmatpush1.msra.mxu0 %v55
  %2893 = vmatprep.subr.mxu0 %v54
  %2894 = vmatpush1.msra.mxu0 %v53
  %2895 = vmatprep.subr.mxu0 %v52
  %2896 = vmatpush1.msra.mxu0 %v51
  %2897 = vmatprep.subr.mxu0 %v50
  %2898 = vmatpush1.msra.mxu0 %v49
  %2899 = vmatprep.subr.mxu0 %v48
  %2900 = vmatpush1.msra.mxu0 %v47
  %2901 = vmatprep.subr.mxu0 %v46
  %2902 = vmatpush1.msra.mxu0 %v45
  %2903 = vmatprep.subr.mxu0 %v44
  %2904 = vmatpush1.msra.mxu0 %v43
  %2905 = vmatprep.subr.mxu0 0.0
  %2906 = vmatpush2.msra.mxu0 0.0
  %2907 = vmatprep.subr.mxu0 0.0
  %2908 = vmatpush2.msra.mxu0 0.0
  %2909 = vmatprep.subr.mxu0 0.0
  %2910 = vmatpush2.msra.mxu0 0.0
  %2911 = vmatprep.subr.mxu0 0.0
  %2912 = vmatpush2.msra.mxu0 0.0
  %2913 = vmatprep.subr.mxu0 0.0
  %2914 = vmatpush2.msra.mxu0 0.0
  %2915 = vmatprep.subr.mxu0 0.0
  %2916 = vmatpush2.msra.mxu0 0.0
  %2917 = vmatprep.subr.mxu0 0.0
  %2918 = vmatpush2.msra.mxu0 0.0
  %2919 = vmatprep.subr.mxu0 0.0
  %2920 = vmatpush2.msra.mxu0 0.0
  %2921 = vmatprep.subr.mxu0 0.0
  %2922 = vmatpush2.msra.mxu0 0.0
  %2923 = vmatprep.subr.mxu0 0.0
  %2924 = vmatpush2.msra.mxu0 0.0
  %2925 = vmatprep.subr.mxu0 0.0
  %2926 = vmatpush2.msra.mxu0 0.0
  %2927 = vmatprep.subr.mxu0 0.0
  %2928 = vmatpush2.msra.mxu0 0.0
  %2929 = vmatprep.subr.mxu0 0.0
  %2930 = vmatpush2.msra.mxu0 0.0
  %2931 = vmatprep.subr.mxu0 0.0
  %2932 = vmatpush2.msra.mxu0 0.0
  %2933 = vmatprep.subr.mxu0 0.0
  %2934 = vmatpush2.msra.mxu0 0.0
  %2935 = vmatprep.subr.mxu0 0.0
  %2936 = vmatpush2.msra.mxu0 0.0
  %2937 = vmatprep.mubr.f32.mxu0 0.0
  %2938 = vmatmul.mubr.f32.gmra.mxu0 %v2871
  %v2939 = vpop.f32.mrf.mxu0
  %v2940 = vadd.f32 %v474, %v2939
  %v2941 = vpop.f32.mrf.mxu0
  %v2942 = vadd.f32 %v478, %v2941
  %2943 = vdwg.mxu0
  %2945 = vrot.lane.b32.xlu0 %v2940, 32
  %v2946 = vpop.permute.xlu0 %2945
  %v2948 = vadd.f32 %v2940, %v2946
  %v2949 = vxor.u32 %v2948, 2147483648
  %v2950 = vmul.f32 %v2949, 1.442695
  %v2951 = vpow.pop %v2950
  %v2952 = vadd.f32 %v2951, 1.0
  %v2953 = vrcp.pop %v2952
  %v2954 = vmul.f32 1.0, %v2953
  %2956 = vrot.lane.b32.xlu0 %v2942, 32
  %v2957 = vpop.permute.xlu0 %2956
  %v2959 = vadd.f32 %v2940, %v2957
  %v2960 = vxor.u32 %v2959, 2147483648
  %v2961 = vmul.f32 %v2960, 1.442695
  %v2962 = vpow.pop %v2961
  %v2963 = vadd.f32 %v2962, 1.0
  %v2964 = vrcp.pop %v2963
  %v2965 = vmul.f32 1.0, %v2964
  %2966 = vrot.lane.b32.xlu0 %v2942, 96
  %v2967 = vpop.permute.xlu0 %2966
  %v2969 = vmul.f32 %v2954, %v2967
  %2971 = vrot.lane.b32.xlu0 %v2969, 64
  %v2972 = vpop.permute.xlu0 %2971
  %v2974 = vadd.f32 %v2940, %v2972
  %v2975 = vtanh.pop %v2974
  %v2976 = vsub.f32 1.0, %v2965
  %2978 = vrot.lane.b32.xlu0 %v2975, 96
  %v2979 = vpop.permute.xlu0 %2978
  %v2981 = vmul.f32 %v2976, %v2979
  %v2982 = vmul.f32 %v2965, %v2389
  %v2983 = vadd.f32 %v2981, %v2982
  %2985 = vrot.lane.b32.xlu0 %v2983, 96
  %v2986 = vpop.permute.xlu0 %2985
  %v2987 = vsel %vm220, %v2986, 0
  %2989 = vmatprep.subr.mxu0 0.0
  %2990 = vmatpush1.msra.mxu0 0.0
  %2991 = vmatprep.subr.mxu0 0.0
  %2992 = vmatpush1.msra.mxu0 0.0
  %2993 = vmatprep.subr.mxu0 0.0
  %2994 = vmatpush1.msra.mxu0 0.0
  %2995 = vmatprep.subr.mxu0 0.0
  %2996 = vmatpush1.msra.mxu0 0.0
  %2997 = vmatprep.subr.mxu0 0.0
  %2998 = vmatpush1.msra.mxu0 0.0
  %2999 = vmatprep.subr.mxu0 0.0
  %3000 = vmatpush1.msra.mxu0 0.0
  %3001 = vmatprep.subr.mxu0 0.0
  %3002 = vmatpush1.msra.mxu0 0.0
  %3003 = vmatprep.subr.mxu0 0.0
  %3004 = vmatpush1.msra.mxu0 0.0
  %3005 = vmatprep.subr.mxu0 0.0
  %3006 = vmatpush1.msra.mxu0 0.0
  %3007 = vmatprep.subr.mxu0 0.0
  %3008 = vmatpush1.msra.mxu0 0.0
  %3009 = vmatprep.subr.mxu0 0.0
  %3010 = vmatpush1.msra.mxu0 0.0
  %3011 = vmatprep.subr.mxu0 0.0
  %3012 = vmatpush1.msra.mxu0 0.0
  %3013 = vmatprep.subr.mxu0 0.0
  %3014 = vmatpush1.msra.mxu0 %v67
  %3015 = vmatprep.subr.mxu0 0.0
  %3016 = vmatpush1.msra.mxu0 %v66
  %3017 = vmatprep.subr.mxu0 0.0
  %3018 = vmatpush1.msra.mxu0 %v65
  %3019 = vmatprep.subr.mxu0 0.0
  %3020 = vmatpush1.msra.mxu0 %v64
  %3021 = vmatprep.subr.mxu0 0.0
  %3022 = vmatpush2.msra.mxu0 0.0
  %3023 = vmatprep.subr.mxu0 0.0
  %3024 = vmatpush2.msra.mxu0 0.0
  %3025 = vmatprep.subr.mxu0 0.0
  %3026 = vmatpush2.msra.mxu0 0.0
  %3027 = vmatprep.subr.mxu0 0.0
  %3028 = vmatpush2.msra.mxu0 0.0
  %3029 = vmatprep.subr.mxu0 0.0
  %3030 = vmatpush2.msra.mxu0 0.0
  %3031 = vmatprep.subr.mxu0 0.0
  %3032 = vmatpush2.msra.mxu0 0.0
  %3033 = vmatprep.subr.mxu0 0.0
  %3034 = vmatpush2.msra.mxu0 0.0
  %3035 = vmatprep.subr.mxu0 0.0
  %3036 = vmatpush2.msra.mxu0 0.0
  %3037 = vmatprep.subr.mxu0 0.0
  %3038 = vmatpush2.msra.mxu0 0.0
  %3039 = vmatprep.subr.mxu0 0.0
  %3040 = vmatpush2.msra.mxu0 0.0
  %3041 = vmatprep.subr.mxu0 0.0
  %3042 = vmatpush2.msra.mxu0 0.0
  %3043 = vmatprep.subr.mxu0 0.0
  %3044 = vmatpush2.msra.mxu0 0.0
  %3045 = vmatprep.subr.mxu0 0.0
  %3046 = vmatpush2.msra.mxu0 0.0
  %3047 = vmatprep.subr.mxu0 0.0
  %3048 = vmatpush2.msra.mxu0 0.0
  %3049 = vmatprep.subr.mxu0 0.0
  %3050 = vmatpush2.msra.mxu0 0.0
  %3051 = vmatprep.subr.mxu0 0.0
  %3052 = vmatpush2.msra.mxu0 0.0
  %3053 = vmatprep.mubr.f32.mxu0 0.0
  %3054 = vmatmul.mubr.f32.gmra.mxu0 %v2987
  %v3055 = vpop.f32.mrf.mxu0
  %v3056 = vadd.f32 %v603, %v3055
  %v3057 = vpop.f32.mrf.mxu0
  %3058 = vdwg.mxu0
  %3059 = vst.msk [vmem:[%s9 + $0x8] sm:$0x3] %vm680, %v3056
  %v3060 = vlaneseq
  %v3061 = vshrl.u32 %v3060, 7
  %v3062 = vsub.s32 %v682, %v3061
  %v3063 = vrot.slane %v2701, %v3062
  %v3064 = vlaneseq
  %v3065 = vshrl.u32 %v3064, 7
  %v3066 = vsub.s32 %v682, %v3065
  %v3067 = vrot.slane %v2781, %v3066
  %v3068 = vsel %vm237, %v3067, %v3063
  %3070 = vst.msk [vmem:[%s9 + $0x8] sm:$0x3] %vm693, %v3068
  %v3071 = vsel %vm680, %v3056, -inf
  %3072 = vmax.xlane.f32.xlu0 %v3071
  %v3073 = vpop.xlane.xlu0 %3072
  %vm3074 = vcmp.eq.f32.partialorder %v3056, %v3073
  %v3075 = vsel %vm3074, %v73, 16
  %v3076 = vsel %vm680, %v3075, 2147483647
  %v3077 = vand.u32 %v3076, 65535
  %v3078 = vshra.s32 %v3076, 16
  %v3079 = vcvt.s32.f32 %v3077
  %v3080 = vcvt.s32.f32 %v3078
  %3081 = vmin.xlane.f32.xlu0 %v3080
  %v3082 = vpop.xlane.xlu0 %3081
  %vm3083 = vcmp.eq.f32.partialorder %v3080, %v3082
  %v3084 = vsel %vm3083, %v3079, inf
  %3085 = vmin.xlane.f32.xlu0 %v3084
  %v3086 = vpop.xlane.xlu0 %3085
  %v3087 = vcvt.f32.s32 %v3086
  %v3088 = vcvt.f32.s32 %v3082
  %v3089 = vshll.u32 %v3088, 16
  %v3090 = vadd.s32 %v3089, %v3087
  %vm3091 = vcmp.eq.s32.totalorder %v73, %v3090
  %v3092 = vsel %vm3091, 1, 0
  %v3093 = vcvt.s32.f32 %v3092
  %3094 = vrot.lane.b32.xlu0 %v2983, 112
  %v3095 = vpop.permute.xlu0 %3094
  %v3097 = vsel %vm81, %v3093, %v3095
  %v3099 = vsel %vm83, %v3097, 0
  %3101 = vmatprep.subr.mxu0 0.0
  %3102 = vmatpush1.msra.mxu0 0.0
  %3103 = vmatprep.subr.mxu0 0.0
  %3104 = vmatpush1.msra.mxu0 0.0
  %3105 = vmatprep.subr.mxu0 0.0
  %3106 = vmatpush1.msra.mxu0 0.0
  %3107 = vmatprep.subr.mxu0 0.0
  %3108 = vmatpush1.msra.mxu0 0.0
  %3109 = vmatprep.subr.mxu0 0.0
  %3110 = vmatpush1.msra.mxu0 0.0
  %3111 = vmatprep.subr.mxu0 0.0
  %3112 = vmatpush1.msra.mxu0 0.0
  %3113 = vmatprep.subr.mxu0 0.0
  %3114 = vmatpush1.msra.mxu0 0.0
  %3115 = vmatprep.subr.mxu0 0.0
  %3116 = vmatpush1.msra.mxu0 0.0
  %3117 = vmatprep.subr.mxu0 0.0
  %3118 = vmatpush1.msra.mxu0 0.0
  %3119 = vmatprep.subr.mxu0 0.0
  %3120 = vmatpush1.msra.mxu0 0.0
  %3121 = vmatprep.subr.mxu0 0.0
  %3122 = vmatpush1.msra.mxu0 %v42
  %3123 = vmatprep.subr.mxu0 0.0
  %3124 = vmatpush1.msra.mxu0 %v41
  %3125 = vmatprep.subr.mxu0 0.0
  %3126 = vmatpush1.msra.mxu0 %v40
  %3127 = vmatprep.subr.mxu0 0.0
  %3128 = vmatpush1.msra.mxu0 %v39
  %3129 = vmatprep.subr.mxu0 0.0
  %3130 = vmatpush1.msra.mxu0 %v38
  %3131 = vmatprep.subr.mxu0 0.0
  %3132 = vmatpush1.msra.mxu0 %v37
  %3133 = vmatprep.subr.mxu0 0.0
  %3134 = vmatpush2.msra.mxu0 0.0
  %3135 = vmatprep.subr.mxu0 0.0
  %3136 = vmatpush2.msra.mxu0 0.0
  %3137 = vmatprep.subr.mxu0 0.0
  %3138 = vmatpush2.msra.mxu0 0.0
  %3139 = vmatprep.subr.mxu0 0.0
  %3140 = vmatpush2.msra.mxu0 0.0
  %3141 = vmatprep.subr.mxu0 0.0
  %3142 = vmatpush2.msra.mxu0 0.0
  %3143 = vmatprep.subr.mxu0 0.0
  %3144 = vmatpush2.msra.mxu0 0.0
  %3145 = vmatprep.subr.mxu0 0.0
  %3146 = vmatpush2.msra.mxu0 0.0
  %3147 = vmatprep.subr.mxu0 0.0
  %3148 = vmatpush2.msra.mxu0 0.0
  %3149 = vmatprep.subr.mxu0 0.0
  %3150 = vmatpush2.msra.mxu0 0.0
  %3151 = vmatprep.subr.mxu0 0.0
  %3152 = vmatpush2.msra.mxu0 0.0
  %3153 = vmatprep.subr.mxu0 0.0
  %3154 = vmatpush2.msra.mxu0 0.0
  %3155 = vmatprep.subr.mxu0 0.0
  %3156 = vmatpush2.msra.mxu0 0.0
  %3157 = vmatprep.subr.mxu0 0.0
  %3158 = vmatpush2.msra.mxu0 0.0
  %3159 = vmatprep.subr.mxu0 0.0
  %3160 = vmatpush2.msra.mxu0 0.0
  %3161 = vmatprep.subr.mxu0 0.0
  %3162 = vmatpush2.msra.mxu0 0.0
  %3163 = vmatprep.subr.mxu0 0.0
  %3164 = vmatpush2.msra.mxu0 0.0
  %3165 = vmatprep.mubr.f32.mxu0 0.0
  %3166 = vmatmul.mubr.f32.gmra.mxu0 %v3099
  %v3167 = vpop.f32.mrf.mxu0
  %v3168 = vadd.f32 0.0, %v3167
  %v3169 = vpop.f32.mrf.mxu0
  %3170 = vdwg.mxu0
  %v3173 = vunpack.c.l.s4 1966171168
  %v3174 = vunpack.c.0.s8 %v3173
  %v3175 = vlaneseq
  %v3176 = vshrl.u32 %v3175, 7
  %v3177 = vsub.s32 %v3174, %v3176
  %v3178 = vrot.slane %v3168, %v3177
  %v3179 = vcombine.high %v3178, %v3178
  %v3181 = vunpack.c.l.s4 1966171168
  %v3182 = vunpack.c.0.s8 %v3181
  %v3183 = vlaneseq
  %v3184 = vshrl.u32 %v3183, 7
  %v3185 = vsub.s32 %v3182, %v3184
  %v3186 = vrot.slane %v3178, %v3185
  %v3188 = vunpack.c.l.s4 1966171168
  %v3189 = vunpack.c.0.s8 %v3188
  %v3190 = vlaneseq
  %v3191 = vshrl.u32 %v3190, 7
  %v3192 = vsub.s32 %v3189, %v3191
  %v3193 = vrot.slane %v3179, %v3192
  %v3194 = vlaneseq
  %v3195 = vshrl.u32 %v3194, 7
  %v3196 = vsub.s32 0, %v3195
  %v3197 = vrot.slane %v3186, %v3196
  %v3198 = vlaneseq
  %v3199 = vshrl.u32 %v3198, 7
  %v3200 = vsub.s32 0, %v3199
  %v3201 = vrot.slane %v3193, %v3200
  %v3204 = vadd.f32 %v3197, %v193
  %v3205 = vadd.f32 %v3201, %v195
  %v3206 = vtanh.pop %v3204
  %v3207 = vtanh.pop %v3205
  %v3208 = vmul.f32 %v3206, %v208
  %v3209 = vmul.f32 %v3207, %v208
  %3212 = vrot.lane.b32.xlu0 %v3208, 112
  %v3213 = vpop.permute.xlu0 %3212
  %3214 = vrot.lane.b32.xlu0 %v3209, 112
  %v3215 = vpop.permute.xlu0 %3214
  %v3218 = vsel %vm220, %v3213, 0.0
  %3219 = vadd.xlane.f32.xlu0 %v3218
  %v3220 = vpop.xlane.xlu0 %3219
  %v3221 = vsel %vm220, %v3215, 0.0
  %3222 = vadd.xlane.f32.xlu0 %v3221
  %v3223 = vpop.xlane.xlu0 %3222
  %v3226 = vlaneseq
  %v3227 = vshrl.u32 %v3226, 7
  %v3228 = vsub.s32 %v73, %v3227
  %v3229 = vrot.slane %v3220, %v3228
  %v3230 = vlaneseq
  %v3231 = vshrl.u32 %v3230, 7
  %v3232 = vsub.s32 %v73, %v3231
  %v3233 = vrot.slane %v3223, %v3232
  %v3234 = vsel %vm237, %v3233, %v3229
  %v3236 = vsel %vm240, %v3234, -inf
  %3237 = vmax.xlane.f32.xlu0 %v3236
  %v3238 = vpop.xlane.xlu0 %3237
  %v3240 = vlaneseq
  %v3241 = vshrl.u32 %v3240, 7
  %v3242 = vsub.s32 0, %v3241
  %v3243 = vrot.slane %v3238, %v3242
  %v3244 = vlaneseq
  %v3245 = vshrl.u32 %v3244, 7
  %v3246 = vsub.s32 1, %v3245
  %v3247 = vrot.slane %v3238, %v3246
  %v3250 = vsub.f32 %v3220, %v3243
  %v3251 = vsub.f32 %v3223, %v3247
  %v3252 = vmul.f32 %v3250, 1.442695
  %v3253 = vpow.pop %v3252
  %v3254 = vmul.f32 %v3251, 1.442695
  %v3255 = vpow.pop %v3254
  %3258 = vset.pattern.permute.xlu0 0
  %3259 = vperm.xlu0 %3258, %v3253
  %v3260 = vpop.permute.xlu0 %3259
  %3261 = vset.pattern.permute.xlu0 0
  %3262 = vperm.xlu0 %3261, %v3255
  %v3263 = vpop.permute.xlu0 %3262
  %v3264 = vlaneseq
  %v3265 = vshrl.u32 %v3264, 7
  %v3266 = vsub.s32 %v73, %v3265
  %v3267 = vrot.slane %v3260, %v3266
  %v3268 = vlaneseq
  %v3269 = vshrl.u32 %v3268, 7
  %v3270 = vsub.s32 %v73, %v3269
  %v3271 = vrot.slane %v3263, %v3270
  %v3272 = vsel %vm237, %v3271, %v3267
  %v3274 = vsel %vm240, %v3272, 0.0
  %3275 = vadd.xlane.f32.xlu0 %v3274
  %v3276 = vpop.xlane.xlu0 %3275
  %v3278 = vlaneseq
  %v3279 = vshrl.u32 %v3278, 7
  %v3280 = vsub.s32 0, %v3279
  %v3281 = vrot.slane %v3276, %v3280
  %v3282 = vlaneseq
  %v3283 = vshrl.u32 %v3282, 7
  %v3284 = vsub.s32 1, %v3283
  %v3285 = vrot.slane %v3276, %v3284
  %v3288 = vrcp.pop %v3281
  %v3289 = vmul.f32 %v3253, %v3288
  %v3290 = vrcp.pop %v3285
  %v3291 = vmul.f32 %v3255, %v3290
  %3293 = vset.pattern.permute.xlu0 0
  %3294 = vperm.xlu0 %3293, %v3289
  %v3295 = vpop.permute.xlu0 %3294
  %v3296 = vlaneseq
  %v3297 = vshrl.u32 %v3296, 7
  %v3298 = vsub.s32 %v73, %v3297
  %v3299 = vrot.slane %v3295, %v3298
  %v3300 = vsel %vm305, %v3299, 0
  %3302 = vmatprep.subr.mxu0 0.0
  %3303 = vmatpush1.msra.mxu0 0.0
  %3304 = vmatprep.subr.mxu0 0.0
  %3305 = vmatpush1.msra.mxu0 0.0
  %3306 = vmatprep.subr.mxu0 0.0
  %3307 = vmatpush1.msra.mxu0 0.0
  %3308 = vmatprep.subr.mxu0 0.0
  %3309 = vmatpush1.msra.mxu0 0.0
  %3310 = vmatprep.subr.mxu0 0.0
  %3311 = vmatpush1.msra.mxu0 0.0
  %3312 = vmatprep.subr.mxu0 0.0
  %3313 = vmatpush1.msra.mxu0 0.0
  %3314 = vmatprep.subr.mxu0 0.0
  %3315 = vmatpush1.msra.mxu0 0.0
  %3316 = vmatprep.subr.mxu0 0.0
  %3317 = vmatpush1.msra.mxu0 0.0
  %3318 = vmatprep.subr.mxu0 0.0
  %3319 = vmatpush1.msra.mxu0 0.0
  %3320 = vmatprep.subr.mxu0 0.0
  %3321 = vmatpush1.msra.mxu0 0.0
  %3322 = vmatprep.subr.mxu0 0.0
  %3323 = vmatpush1.msra.mxu0 0.0
  %3324 = vmatprep.subr.mxu0 0.0
  %3325 = vmatpush1.msra.mxu0 0.0
  %3326 = vmatprep.subr.mxu0 0.0
  %3327 = vmatpush1.msra.mxu0 0.0
  %3328 = vmatprep.subr.mxu0 0.0
  %3329 = vmatpush1.msra.mxu0 0.0
  %3330 = vmatprep.subr.mxu0 0.0
  %3331 = vmatpush1.msra.mxu0 0.0
  %3332 = vmatprep.subr.mxu0 0.0
  %3333 = vmatpush1.msra.mxu0 %v32
  %3334 = vmatprep.subr.mxu0 0.0
  %3335 = vmatpush2.msra.mxu0 0.0
  %3336 = vmatprep.subr.mxu0 0.0
  %3337 = vmatpush2.msra.mxu0 0.0
  %3338 = vmatprep.subr.mxu0 0.0
  %3339 = vmatpush2.msra.mxu0 0.0
  %3340 = vmatprep.subr.mxu0 0.0
  %3341 = vmatpush2.msra.mxu0 0.0
  %3342 = vmatprep.subr.mxu0 0.0
  %3343 = vmatpush2.msra.mxu0 0.0
  %3344 = vmatprep.subr.mxu0 0.0
  %3345 = vmatpush2.msra.mxu0 0.0
  %3346 = vmatprep.subr.mxu0 0.0
  %3347 = vmatpush2.msra.mxu0 0.0
  %3348 = vmatprep.subr.mxu0 0.0
  %3349 = vmatpush2.msra.mxu0 0.0
  %3350 = vmatprep.subr.mxu0 0.0
  %3351 = vmatpush2.msra.mxu0 0.0
  %3352 = vmatprep.subr.mxu0 0.0
  %3353 = vmatpush2.msra.mxu0 0.0
  %3354 = vmatprep.subr.mxu0 0.0
  %3355 = vmatpush2.msra.mxu0 0.0
  %3356 = vmatprep.subr.mxu0 0.0
  %3357 = vmatpush2.msra.mxu0 0.0
  %3358 = vmatprep.subr.mxu0 0.0
  %3359 = vmatpush2.msra.mxu0 0.0
  %3360 = vmatprep.subr.mxu0 0.0
  %3361 = vmatpush2.msra.mxu0 0.0
  %3362 = vmatprep.subr.mxu0 0.0
  %3363 = vmatpush2.msra.mxu0 0.0
  %3364 = vmatprep.subr.mxu0 0.0
  %3365 = vmatpush2.msra.mxu0 0.0
  %3366 = vmatprep.mubr.f32.mxu0 0.0
  %3367 = vmatmul.mubr.f32.gmra.mxu0 %v3300
  %v3368 = vpop.f32.mrf.mxu0
  %v3369 = vadd.f32 0.0, %v3368
  %v3370 = vpop.f32.mrf.mxu0
  %3371 = vdwg.mxu0
  %3373 = vset.pattern.permute.xlu0 0
  %3374 = vperm.xlu0 %3373, %v3291
  %v3375 = vpop.permute.xlu0 %3374
  %v3376 = vlaneseq
  %v3377 = vshrl.u32 %v3376, 7
  %v3378 = vsub.s32 %v73, %v3377
  %v3379 = vrot.slane %v3375, %v3378
  %v3380 = vsel %vm305, %v3379, 0
  %3382 = vmatprep.subr.mxu0 0.0
  %3383 = vmatpush1.msra.mxu0 0.0
  %3384 = vmatprep.subr.mxu0 0.0
  %3385 = vmatpush1.msra.mxu0 0.0
  %3386 = vmatprep.subr.mxu0 0.0
  %3387 = vmatpush1.msra.mxu0 0.0
  %3388 = vmatprep.subr.mxu0 0.0
  %3389 = vmatpush1.msra.mxu0 0.0
  %3390 = vmatprep.subr.mxu0 0.0
  %3391 = vmatpush1.msra.mxu0 0.0
  %3392 = vmatprep.subr.mxu0 0.0
  %3393 = vmatpush1.msra.mxu0 0.0
  %3394 = vmatprep.subr.mxu0 0.0
  %3395 = vmatpush1.msra.mxu0 0.0
  %3396 = vmatprep.subr.mxu0 0.0
  %3397 = vmatpush1.msra.mxu0 0.0
  %3398 = vmatprep.subr.mxu0 0.0
  %3399 = vmatpush1.msra.mxu0 0.0
  %3400 = vmatprep.subr.mxu0 0.0
  %3401 = vmatpush1.msra.mxu0 0.0
  %3402 = vmatprep.subr.mxu0 0.0
  %3403 = vmatpush1.msra.mxu0 0.0
  %3404 = vmatprep.subr.mxu0 0.0
  %3405 = vmatpush1.msra.mxu0 0.0
  %3406 = vmatprep.subr.mxu0 0.0
  %3407 = vmatpush1.msra.mxu0 0.0
  %3408 = vmatprep.subr.mxu0 0.0
  %3409 = vmatpush1.msra.mxu0 0.0
  %3410 = vmatprep.subr.mxu0 0.0
  %3411 = vmatpush1.msra.mxu0 0.0
  %3412 = vmatprep.subr.mxu0 0.0
  %3413 = vmatpush1.msra.mxu0 %v33
  %3414 = vmatprep.subr.mxu0 0.0
  %3415 = vmatpush2.msra.mxu0 0.0
  %3416 = vmatprep.subr.mxu0 0.0
  %3417 = vmatpush2.msra.mxu0 0.0
  %3418 = vmatprep.subr.mxu0 0.0
  %3419 = vmatpush2.msra.mxu0 0.0
  %3420 = vmatprep.subr.mxu0 0.0
  %3421 = vmatpush2.msra.mxu0 0.0
  %3422 = vmatprep.subr.mxu0 0.0
  %3423 = vmatpush2.msra.mxu0 0.0
  %3424 = vmatprep.subr.mxu0 0.0
  %3425 = vmatpush2.msra.mxu0 0.0
  %3426 = vmatprep.subr.mxu0 0.0
  %3427 = vmatpush2.msra.mxu0 0.0
  %3428 = vmatprep.subr.mxu0 0.0
  %3429 = vmatpush2.msra.mxu0 0.0
  %3430 = vmatprep.subr.mxu0 0.0
  %3431 = vmatpush2.msra.mxu0 0.0
  %3432 = vmatprep.subr.mxu0 0.0
  %3433 = vmatpush2.msra.mxu0 0.0
  %3434 = vmatprep.subr.mxu0 0.0
  %3435 = vmatpush2.msra.mxu0 0.0
  %3436 = vmatprep.subr.mxu0 0.0
  %3437 = vmatpush2.msra.mxu0 0.0
  %3438 = vmatprep.subr.mxu0 0.0
  %3439 = vmatpush2.msra.mxu0 0.0
  %3440 = vmatprep.subr.mxu0 0.0
  %3441 = vmatpush2.msra.mxu0 0.0
  %3442 = vmatprep.subr.mxu0 0.0
  %3443 = vmatpush2.msra.mxu0 0.0
  %3444 = vmatprep.subr.mxu0 0.0
  %3445 = vmatpush2.msra.mxu0 0.0
  %3446 = vmatprep.mubr.f32.mxu0 0.0
  %3447 = vmatmul.mubr.f32.gmra.mxu0 %v3380
  %v3448 = vpop.f32.mrf.mxu0
  %v3449 = vadd.f32 0.0, %v3448
  %v3450 = vpop.f32.mrf.mxu0
  %3451 = vdwg.mxu0
  %v3454 = vrot.slane %v3449, 7
  %v3455 = vsel %vm237, %v3454, %v3369
  %3456 = vrot.lane.b32.xlu0 %v3455, 16
  %v3457 = vpop.permute.xlu0 %3456
  %3459 = vrot.lane.b32.xlu0 %v2983, 16
  %v3460 = vpop.permute.xlu0 %3459
  %v3462 = vsel %vm81, %v3168, %v3457
  %v3463 = vsel %vm83, %v3462, %v3460
  %v3465 = vsel %vm481, %v3463, 0
  %3467 = vmatprep.subr.mxu0 0.0
  %3468 = vmatpush1.msra.mxu0 0.0
  %3469 = vmatprep.subr.mxu0 0.0
  %3470 = vmatpush1.msra.mxu0 0.0
  %3471 = vmatprep.subr.mxu0 0.0
  %3472 = vmatpush1.msra.mxu0 0.0
  %3473 = vmatprep.subr.mxu0 0.0
  %3474 = vmatpush1.msra.mxu0 0.0
  %3475 = vmatprep.subr.mxu0 0.0
  %3476 = vmatpush1.msra.mxu0 0.0
  %3477 = vmatprep.subr.mxu0 0.0
  %3478 = vmatpush1.msra.mxu0 0.0
  %3479 = vmatprep.subr.mxu0 %v62
  %3480 = vmatpush1.msra.mxu0 %v61
  %3481 = vmatprep.subr.mxu0 %v60
  %3482 = vmatpush1.msra.mxu0 %v59
  %3483 = vmatprep.subr.mxu0 %v58
  %3484 = vmatpush1.msra.mxu0 %v57
  %3485 = vmatprep.subr.mxu0 %v56
  %3486 = vmatpush1.msra.mxu0 %v55
  %3487 = vmatprep.subr.mxu0 %v54
  %3488 = vmatpush1.msra.mxu0 %v53
  %3489 = vmatprep.subr.mxu0 %v52
  %3490 = vmatpush1.msra.mxu0 %v51
  %3491 = vmatprep.subr.mxu0 %v50
  %3492 = vmatpush1.msra.mxu0 %v49
  %3493 = vmatprep.subr.mxu0 %v48
  %3494 = vmatpush1.msra.mxu0 %v47
  %3495 = vmatprep.subr.mxu0 %v46
  %3496 = vmatpush1.msra.mxu0 %v45
  %3497 = vmatprep.subr.mxu0 %v44
  %3498 = vmatpush1.msra.mxu0 %v43
  %3499 = vmatprep.subr.mxu0 0.0
  %3500 = vmatpush2.msra.mxu0 0.0
  %3501 = vmatprep.subr.mxu0 0.0
  %3502 = vmatpush2.msra.mxu0 0.0
  %3503 = vmatprep.subr.mxu0 0.0
  %3504 = vmatpush2.msra.mxu0 0.0
  %3505 = vmatprep.subr.mxu0 0.0
  %3506 = vmatpush2.msra.mxu0 0.0
  %3507 = vmatprep.subr.mxu0 0.0
  %3508 = vmatpush2.msra.mxu0 0.0
  %3509 = vmatprep.subr.mxu0 0.0
  %3510 = vmatpush2.msra.mxu0 0.0
  %3511 = vmatprep.subr.mxu0 0.0
  %3512 = vmatpush2.msra.mxu0 0.0
  %3513 = vmatprep.subr.mxu0 0.0
  %3514 = vmatpush2.msra.mxu0 0.0
  %3515 = vmatprep.subr.mxu0 0.0
  %3516 = vmatpush2.msra.mxu0 0.0
  %3517 = vmatprep.subr.mxu0 0.0
  %3518 = vmatpush2.msra.mxu0 0.0
  %3519 = vmatprep.subr.mxu0 0.0
  %3520 = vmatpush2.msra.mxu0 0.0
  %3521 = vmatprep.subr.mxu0 0.0
  %3522 = vmatpush2.msra.mxu0 0.0
  %3523 = vmatprep.subr.mxu0 0.0
  %3524 = vmatpush2.msra.mxu0 0.0
  %3525 = vmatprep.subr.mxu0 0.0
  %3526 = vmatpush2.msra.mxu0 0.0
  %3527 = vmatprep.subr.mxu0 0.0
  %3528 = vmatpush2.msra.mxu0 0.0
  %3529 = vmatprep.subr.mxu0 0.0
  %3530 = vmatpush2.msra.mxu0 0.0
  %3531 = vmatprep.mubr.f32.mxu0 0.0
  %3532 = vmatmul.mubr.f32.gmra.mxu0 %v3465
  %v3533 = vpop.f32.mrf.mxu0
  %v3534 = vadd.f32 %v474, %v3533
  %v3535 = vpop.f32.mrf.mxu0
  %v3536 = vadd.f32 %v478, %v3535
  %3537 = vdwg.mxu0
  %3539 = vrot.lane.b32.xlu0 %v3534, 32
  %v3540 = vpop.permute.xlu0 %3539
  %v3542 = vadd.f32 %v3534, %v3540
  %v3543 = vxor.u32 %v3542, 2147483648
  %v3544 = vmul.f32 %v3543, 1.442695
  %v3545 = vpow.pop %v3544
  %v3546 = vadd.f32 %v3545, 1.0
  %v3547 = vrcp.pop %v3546
  %v3548 = vmul.f32 1.0, %v3547
  %3550 = vrot.lane.b32.xlu0 %v3536, 32
  %v3551 = vpop.permute.xlu0 %3550
  %v3553 = vadd.f32 %v3534, %v3551
  %v3554 = vxor.u32 %v3553, 2147483648
  %v3555 = vmul.f32 %v3554, 1.442695
  %v3556 = vpow.pop %v3555
  %v3557 = vadd.f32 %v3556, 1.0
  %v3558 = vrcp.pop %v3557
  %v3559 = vmul.f32 1.0, %v3558
  %3560 = vrot.lane.b32.xlu0 %v3536, 96
  %v3561 = vpop.permute.xlu0 %3560
  %v3563 = vmul.f32 %v3548, %v3561
  %3565 = vrot.lane.b32.xlu0 %v3563, 64
  %v3566 = vpop.permute.xlu0 %3565
  %v3568 = vadd.f32 %v3534, %v3566
  %v3569 = vtanh.pop %v3568
  %v3570 = vsub.f32 1.0, %v3559
  %3572 = vrot.lane.b32.xlu0 %v3569, 96
  %v3573 = vpop.permute.xlu0 %3572
  %v3575 = vmul.f32 %v3570, %v3573
  %v3576 = vmul.f32 %v3559, %v2983
  %v3577 = vadd.f32 %v3575, %v3576
  %3579 = vrot.lane.b32.xlu0 %v3577, 96
  %v3580 = vpop.permute.xlu0 %3579
  %v3581 = vsel %vm220, %v3580, 0
  %3583 = vmatprep.subr.mxu0 0.0
  %3584 = vmatpush1.msra.mxu0 0.0
  %3585 = vmatprep.subr.mxu0 0.0
  %3586 = vmatpush1.msra.mxu0 0.0
  %3587 = vmatprep.subr.mxu0 0.0
  %3588 = vmatpush1.msra.mxu0 0.0
  %3589 = vmatprep.subr.mxu0 0.0
  %3590 = vmatpush1.msra.mxu0 0.0
  %3591 = vmatprep.subr.mxu0 0.0
  %3592 = vmatpush1.msra.mxu0 0.0
  %3593 = vmatprep.subr.mxu0 0.0
  %3594 = vmatpush1.msra.mxu0 0.0
  %3595 = vmatprep.subr.mxu0 0.0
  %3596 = vmatpush1.msra.mxu0 0.0
  %3597 = vmatprep.subr.mxu0 0.0
  %3598 = vmatpush1.msra.mxu0 0.0
  %3599 = vmatprep.subr.mxu0 0.0
  %3600 = vmatpush1.msra.mxu0 0.0
  %3601 = vmatprep.subr.mxu0 0.0
  %3602 = vmatpush1.msra.mxu0 0.0
  %3603 = vmatprep.subr.mxu0 0.0
  %3604 = vmatpush1.msra.mxu0 0.0
  %3605 = vmatprep.subr.mxu0 0.0
  %3606 = vmatpush1.msra.mxu0 0.0
  %3607 = vmatprep.subr.mxu0 0.0
  %3608 = vmatpush1.msra.mxu0 %v67
  %3609 = vmatprep.subr.mxu0 0.0
  %3610 = vmatpush1.msra.mxu0 %v66
  %3611 = vmatprep.subr.mxu0 0.0
  %3612 = vmatpush1.msra.mxu0 %v65
  %3613 = vmatprep.subr.mxu0 0.0
  %3614 = vmatpush1.msra.mxu0 %v64
  %3615 = vmatprep.subr.mxu0 0.0
  %3616 = vmatpush2.msra.mxu0 0.0
  %3617 = vmatprep.subr.mxu0 0.0
  %3618 = vmatpush2.msra.mxu0 0.0
  %3619 = vmatprep.subr.mxu0 0.0
  %3620 = vmatpush2.msra.mxu0 0.0
  %3621 = vmatprep.subr.mxu0 0.0
  %3622 = vmatpush2.msra.mxu0 0.0
  %3623 = vmatprep.subr.mxu0 0.0
  %3624 = vmatpush2.msra.mxu0 0.0
  %3625 = vmatprep.subr.mxu0 0.0
  %3626 = vmatpush2.msra.mxu0 0.0
  %3627 = vmatprep.subr.mxu0 0.0
  %3628 = vmatpush2.msra.mxu0 0.0
  %3629 = vmatprep.subr.mxu0 0.0
  %3630 = vmatpush2.msra.mxu0 0.0
  %3631 = vmatprep.subr.mxu0 0.0
  %3632 = vmatpush2.msra.mxu0 0.0
  %3633 = vmatprep.subr.mxu0 0.0
  %3634 = vmatpush2.msra.mxu0 0.0
  %3635 = vmatprep.subr.mxu0 0.0
  %3636 = vmatpush2.msra.mxu0 0.0
  %3637 = vmatprep.subr.mxu0 0.0
  %3638 = vmatpush2.msra.mxu0 0.0
  %3639 = vmatprep.subr.mxu0 0.0
  %3640 = vmatpush2.msra.mxu0 0.0
  %3641 = vmatprep.subr.mxu0 0.0
  %3642 = vmatpush2.msra.mxu0 0.0
  %3643 = vmatprep.subr.mxu0 0.0
  %3644 = vmatpush2.msra.mxu0 0.0
  %3645 = vmatprep.subr.mxu0 0.0
  %3646 = vmatpush2.msra.mxu0 0.0
  %3647 = vmatprep.mubr.f32.mxu0 0.0
  %3648 = vmatmul.mubr.f32.gmra.mxu0 %v3581
  %v3649 = vpop.f32.mrf.mxu0
  %v3650 = vadd.f32 %v603, %v3649
  %v3651 = vpop.f32.mrf.mxu0
  %3652 = vdwg.mxu0
  %3653 = vst.msk [vmem:[%s9 + $0xa] sm:$0x3] %vm680, %v3650
  %v3654 = vlaneseq
  %v3655 = vshrl.u32 %v3654, 7
  %v3656 = vsub.s32 %v682, %v3655
  %v3657 = vrot.slane %v3295, %v3656
  %v3658 = vlaneseq
  %v3659 = vshrl.u32 %v3658, 7
  %v3660 = vsub.s32 %v682, %v3659
  %v3661 = vrot.slane %v3375, %v3660
  %v3662 = vsel %vm237, %v3661, %v3657
  %3664 = vst.msk [vmem:[%s9 + $0xa] sm:$0x3] %vm693, %v3662
  %vm3666 = vcmask 254976
  %3667 = vst.msk [vmem:[%s9 + $0xc] sm:$0x3] %vm3666, %v3580
  // Predicated region
  $region38: #{decoder_attention_pallas.1} parent=0 // pred_check
    _
  $region39: #{decoder_attention_pallas.1} parent=0 // pred_check_branch
    %3669 = sbr.rel (0) target = $region41
  $region40: #{decoder_attention_pallas.1} parent=0 // pred_region
    _
  $region41: #{decoder_attention_pallas.1} parent=0 // pred_fallthru
    _
  // Predicated region
  $region42: #{decoder_attention_pallas.1} parent=0 // pred_check
    _
  $region43: #{decoder_attention_pallas.1} parent=0 // pred_check_branch
    %3671 = sbr.rel (0) target = $region45
  $region44: #{decoder_attention_pallas.1} parent=0 // pred_region
    _
  $region45: #{decoder_attention_pallas.1} parent=0 // pred_fallthru
    _

</llo_original>
